<compile_context>
chip_gen: v7x
topology: tpu7x:2x2x1
jax: 0.10.0
libtpu: 0.0.40
codegen_flags: <defaults>
</compile_context>

<pallas_src>
import functools

import jax
import jax.numpy as jnp
from jax.experimental import pallas as pl
from jax.experimental.pallas import tpu as pltpu


_VMEM_LIMIT_BYTES = 32 * 1024 * 1024      # fits v5e/v6e/v7x scoped VMEM
_VMEM_BUDGET = 16 * 1024 * 1024           # conservative per-block budget


def _pick_tile(n, dma_row_bytes, temp_row_bytes, fixed_bytes, *, align=8, cap=1024):
    """Largest tile (rows of the streamed axis) whose VMEM footprint fits the budget."""
    avail = max(_VMEM_BUDGET - fixed_bytes, 0)
    per_row = 2 * dma_row_bytes + temp_row_bytes      # 2x: auto double-buffered DMA
    tile = int(avail // max(per_row, 1))
    tile = int(min(max(tile, 1), n, cap))
    if tile >= n:
        return n
    if align > 1 and tile >= align:
        tile = (tile // align) * align                # keep (8, 128) block rule happy
    return max(tile, 1)


# ----------------------------------------------------------------------------
# In-kernel helpers
# ----------------------------------------------------------------------------
def _layernorm(y, g, beta, eps):
    mu = jnp.mean(y, axis=-1, keepdims=True)
    var = jnp.mean(y * y, axis=-1, keepdims=True) - mu * mu       # one-pass variance
    return (y - mu) * jax.lax.rsqrt(var + eps) * g + beta


def _lif_store(y, o_ref, *, tau, v_th, res=None):
    """Multi-step LIF over leading T; membrane kept in registers; spikes -> o_ref[t]."""
    T = y.shape[0]
    inv_tau = 1.0 / tau                               # multiply, not divide
    v = jnp.zeros(y.shape[1:], jnp.float32)
    for t in range(T):                                # T is small & static: unrolled
        h = v + (y[t] - v) * inv_tau
        s = (h >= v_th).astype(jnp.float32)
        v = h * (1.0 - s)
        out = s if res is None else s + res[t]
        o_ref[t] = out.astype(o_ref.dtype)


# ----------------------------------------------------------------------------
# Kernel A: fully fused SSA branch (per batch tile)
#   x block (T, tb, L, H) -> (qkv proj+LN+LIF) -> per-head spiking attention
#   -> attn_lif -> proj+LN+LIF -> + x   -> out block (T, tb, L, H)
# ----------------------------------------------------------------------------
def ssa_kernel(x_ref, wqkv_ref, g_qkv_ref, b_qkv_ref,
               wp_ref, bp_ref, gp_ref, betap_ref, o_ref,
               qs_ref, ks_ref, vs_ref, as_ref,
               *, num_heads, scale, tau, v_th, v_th_attn, eps):
    T, tb, L, H = x_ref.shape
    hd = H // num_heads
    x = x_ref[...].astype(jnp.float32)                            # (T, tb, L, H)
    x2 = x.reshape(T * tb * L, H)

    # ---- q/k/v: Linear -> LayerNorm -> LIF (spikes parked in bf16 scratch) ----
    for spike_ref, c in ((qs_ref, 0), (ks_ref, 1), (vs_ref, 2)):
        y = jnp.dot(x2, wqkv_ref[c], preferred_element_type=jnp.float32)   # qkv_bias=False
        y = _layernorm(y, g_qkv_ref[c], b_qkv_ref[c], eps)
        _lif_store(y.reshape(T, tb, L, H), spike_ref, tau=tau, v_th=v_th)

    q = qs_ref[...].reshape(T * tb, L, H)
    k = ks_ref[...].reshape(T * tb, L, H)
    v = vs_ref[...].reshape(T * tb, L, H)

    # ---- spiking self-attention: per-head (q @ k^T) @ v, scale folded at the end ----
    # Spike matmuls produce small integer counts -> bf16 MXU is lossless (head_dim<=256),
    # and scale*(qk@v) == (qk*scale)@v exactly for the power-of-two qk_scale.
    head_outs = []
    for h in range(num_heads):
        lo = h * hd
        qh, kh, vh = q[:, :, lo:lo + hd], k[:, :, lo:lo + hd], v[:, :, lo:lo + hd]
        attn = jax.lax.dot_general(qh, kh, (((2,), (2,)), ((0,), (0,))),
                                   preferred_element_type=jnp.float32)      # (T*tb, L, L)
        av = jax.lax.dot_general(attn.astype(jnp.bfloat16), vh,
                                 (((2,), (1,)), ((0,), (0,))),
                                 preferred_element_type=jnp.float32)        # (T*tb, L, hd)
        head_outs.append(av)
    a = jnp.concatenate(head_outs, axis=-1) * scale                          # (T*tb, L, H)

    # ---- attn_lif (v_threshold = 0.5) ----
    _lif_store(a.reshape(T, tb, L, H), as_ref, tau=tau, v_th=v_th_attn)

    # ---- proj: Linear -> LayerNorm -> LIF, residual (x + attn(x)) fused ----
    a_s = as_ref[...].astype(jnp.float32).reshape(T * tb * L, H)
    y = jnp.dot(a_s, wp_ref[...], preferred_element_type=jnp.float32) + bp_ref[...]
    y = _layernorm(y, gp_ref[...], betap_ref[...], eps)
    _lif_store(y.reshape(T, tb, L, H), o_ref, tau=tau, v_th=v_th, res=x)


def ssa_block(x, p, *, num_heads, scale, tau=2.0, v_th=1.0, v_th_attn=0.5, eps=1e-5):
    """x: (T, B, L, H) -> x + SSA(x), f32."""
    T, B, L, H = x.shape
    assert H % num_heads == 0
    wqkv = jnp.stack([p['q_w'].T, p['k_w'].T, p['v_w'].T])                 # (3, H, H)
    g_qkv = jnp.stack([p['q_g'], p['k_g'], p['v_g']]).reshape(3, 1, H)
    b_qkv = jnp.stack([p['q_beta'], p['k_beta'], p['v_beta']]).reshape(3, 1, H)
    wp, bp = p['proj_w'].T, p['proj_b'].reshape(1, H)
    gp, betap = p['proj_g'].reshape(1, H), p['proj_beta'].reshape(1, H)

    # VMEM-driven batch tile: x-in + out are double-buffered DMA blocks; scratch
    # spikes (bf16), pre-LIF slabs (f32) and the attention matrices are temporaries.
    dma_row = T * L * H * (4 + 4)
    temp_row = T * L * (H * 24 + num_heads * L * 4)
    fixed = 2 * (4 * H * H + 8 * H) * 4
    tb = _pick_tile(B, dma_row, temp_row, fixed, align=1, cap=256)
    grid = (pl.cdiv(B, tb),)

    kern = functools.partial(ssa_kernel, num_heads=num_heads, scale=scale,
                             tau=tau, v_th=v_th, v_th_attn=v_th_attn, eps=eps)
    return pl.pallas_call(
        kern,
        grid=grid,
        in_specs=[
            pl.BlockSpec((T, tb, L, H), lambda i: (0, i, 0, 0)),
            pl.BlockSpec((3, H, H), lambda i: (0, 0, 0)),
            pl.BlockSpec((3, 1, H), lambda i: (0, 0, 0)),
            pl.BlockSpec((3, 1, H), lambda i: (0, 0, 0)),
            pl.BlockSpec((H, H), lambda i: (0, 0)),
            pl.BlockSpec((1, H), lambda i: (0, 0)),
            pl.BlockSpec((1, H), lambda i: (0, 0)),
            pl.BlockSpec((1, H), lambda i: (0, 0)),
        ],
        out_specs=pl.BlockSpec((T, tb, L, H), lambda i: (0, i, 0, 0)),
        out_shape=jax.ShapeDtypeStruct((T, B, L, H), jnp.float32),
        scratch_shapes=[pltpu.VMEM((T, tb, L, H), jnp.bfloat16) for _ in range(4)],
        compiler_params=pltpu.CompilerParams(
            dimension_semantics=("parallel",),
            vmem_limit_bytes=_VMEM_LIMIT_BYTES),
    )(x, wqkv, g_qkv, b_qkv, wp, bp, gp, betap)


# ----------------------------------------------------------------------------
# Kernel B: fully fused MLP branch (per N=B*L row tile)
#   x block (T, tn, H) -> fc1+LN+LIF -> fc2+LN+LIF -> + x -> out block (T, tn, H)
# ----------------------------------------------------------------------------
def mlp_kernel(x_ref, w1_ref, b1_ref, g1_ref, beta1_ref,
               w2_ref, b2_ref, g2_ref, beta2_ref, o_ref, s1_ref,
               *, tau, v_th, eps):
    T, tn, H = x_ref.shape
    Hm = w1_ref.shape[1]
    x = x_ref[...].astype(jnp.float32)                           # (T, tn, H)
    x2 = x.reshape(T * tn, H)

    y1 = jnp.dot(x2, w1_ref[...], preferred_element_type=jnp.float32) + b1_ref[...]
    y1 = _layernorm(y1, g1_ref[...], beta1_ref[...], eps)
    _lif_store(y1.reshape(T, tn, Hm), s1_ref, tau=tau, v_th=v_th)

    s1 = s1_ref[...].astype(jnp.float32).reshape(T * tn, Hm)
    y2 = jnp.dot(s1, w2_ref[...], preferred_element_type=jnp.float32) + b2_ref[...]
    y2 = _layernorm(y2, g2_ref[...], beta2_ref[...], eps)
    _lif_store(y2.reshape(T, tn, H), o_ref, tau=tau, v_th=v_th, res=x)   # x + mlp(x)


def mlp_block(x, w1, b1, g1, beta1, w2, b2, g2, beta2, *,
              tau=2.0, v_th=1.0, eps=1e-5):
    """x: (T, N, H) -> x + MLP(x), f32. w1: (Hm, H), w2: (H, Hm) (torch layout)."""
    T, N, H = x.shape
    Hm = w1.shape[0]
    dma_row = T * H * (4 + 4)
    temp_row = T * (Hm * 6 + H * 8)
    fixed = 2 * (2 * H * Hm + 4 * (H + Hm)) * 4
    tn = _pick_tile(N, dma_row, temp_row, fixed, align=8, cap=512)
    grid = (pl.cdiv(N, tn),)

    kern = functools.partial(mlp_kernel, tau=tau, v_th=v_th, eps=eps)
    return pl.pallas_call(
        kern,
        grid=grid,
        in_specs=[
            pl.BlockSpec((T, tn, H), lambda i: (0, i, 0)),
            pl.BlockSpec((H, Hm), lambda i: (0, 0)),
            pl.BlockSpec((1, Hm), lambda i: (0, 0)),
            pl.BlockSpec((1, Hm), lambda i: (0, 0)),
            pl.BlockSpec((1, Hm), lambda i: (0, 0)),
            pl.BlockSpec((Hm, H), lambda i: (0, 0)),
            pl.BlockSpec((1, H), lambda i: (0, 0)),
            pl.BlockSpec((1, H), lambda i: (0, 0)),
            pl.BlockSpec((1, H), lambda i: (0, 0)),
        ],
        out_specs=pl.BlockSpec((T, tn, H), lambda i: (0, i, 0)),
        out_shape=jax.ShapeDtypeStruct((T, N, H), jnp.float32),
        scratch_shapes=[pltpu.VMEM((T, tn, Hm), jnp.bfloat16)],
        compiler_params=pltpu.CompilerParams(
            dimension_semantics=("parallel",),
            vmem_limit_bytes=_VMEM_LIMIT_BYTES),
    )(x, w1.T, b1.reshape(1, Hm), g1.reshape(1, Hm), beta1.reshape(1, Hm),
      w2.T, b2.reshape(1, H), g2.reshape(1, H), beta2.reshape(1, H))


# ----------------------------------------------------------------------------
# Block parameters (deterministic init, torch nn.Linear-style uniform bounds)
# ----------------------------------------------------------------------------
def init_block_params(key, dim, mlp_hidden=256):
    def linear(k, dout, din, bias=True):
        kw, kb = jax.random.split(k)
        bound = 1.0 / (din ** 0.5)
        w = jax.random.uniform(kw, (dout, din), jnp.float32, -bound, bound)
        b = (jax.random.uniform(kb, (dout,), jnp.float32, -bound, bound)
             if bias else None)
        return w, b

    keys = jax.random.split(key, 6)
    p = {}
    p['q_w'], _ = linear(keys[0], dim, dim, bias=False)   # qkv_bias=False
    p['k_w'], _ = linear(keys[1], dim, dim, bias=False)
    p['v_w'], _ = linear(keys[2], dim, dim, bias=False)
    p['proj_w'], p['proj_b'] = linear(keys[3], dim, dim)
    p['fc1_w'], p['fc1_b'] = linear(keys[4], mlp_hidden, dim)
    p['fc2_w'], p['fc2_b'] = linear(keys[5], dim, mlp_hidden)
    for name, d in [('q', dim), ('k', dim), ('v', dim), ('proj', dim),
                    ('fc1', mlp_hidden), ('fc2', dim)]:
        p[f'{name}_g'] = jnp.ones((d,), jnp.float32)      # LayerNorm weight
        p[f'{name}_beta'] = jnp.zeros((d,), jnp.float32)  # LayerNorm bias
    return p


def block_forward(x, p, *, num_heads=2, qk_scale=0.125):
    T, B, L, H = x.shape
    x1 = ssa_block(x, p, num_heads=num_heads, scale=qk_scale)     # x + attn(x)
    out = mlp_block(x1.reshape(T, B * L, H),
                    p['fc1_w'], p['fc1_b'], p['fc1_g'], p['fc1_beta'],
                    p['fc2_w'], p['fc2_b'], p['fc2_g'], p['fc2_beta'])  # x1 + mlp(x1)
    return out.reshape(T, B, L, H)


if __name__ == "__main__":
    T, B, L, dim = 4, 2, 8, 32
    num_heads = 2

    key = jax.random.PRNGKey(0)
    kx, kp = jax.random.split(key)
    x = jax.random.normal(kx, (T, B, L, dim), jnp.float32)
    params = init_block_params(kp, dim, mlp_hidden=256)

    fwd = jax.jit(functools.partial(block_forward, num_heads=num_heads,
                                    qk_scale=0.125))
    y = fwd(x, params)
    jax.block_until_ready(y)
    assert y.shape == (T, B, L, dim) and y.dtype == jnp.float32
    assert bool(jnp.all(jnp.isfinite(y)))
    print("KERNEL_OK")
</pallas_src>

<mosaic_0001>
module attributes {stable_mosaic.version = 11 : i64} {
  func.func @mlp_kernel(%arg0: i32, %arg1: memref<4x16x32xf32, #tpu.memory_space<vmem>>, %arg2: memref<32x256xf32, #tpu.memory_space<vmem>>, %arg3: memref<1x256xf32, #tpu.memory_space<vmem>>, %arg4: memref<1x256xf32, #tpu.memory_space<vmem>>, %arg5: memref<1x256xf32, #tpu.memory_space<vmem>>, %arg6: memref<256x32xf32, #tpu.memory_space<vmem>>, %arg7: memref<1x32xf32, #tpu.memory_space<vmem>>, %arg8: memref<1x32xf32, #tpu.memory_space<vmem>>, %arg9: memref<1x32xf32, #tpu.memory_space<vmem>>, %arg10: memref<4x16x32xf32, #tpu.memory_space<vmem>>, %arg11: memref<4x16x256xbf16, #tpu.memory_space<vmem>>) attributes {dimension_semantics = [#tpu.dimension_semantics<parallel>], iteration_bounds = array<i64: 1>, scalar_prefetch = 0 : i64, scratch_operands = 1 : i64, tpu.core_type = #tpu.core_type<tc>, window_params = [{transform_indices = @transform_0, window_bounds = array<i64: 4, 16, 32>}, {pipeline_mode = #tpu.pipeline_mode<synchronous>, transform_indices = @transform_1, window_bounds = array<i64: 32, 256>}, {pipeline_mode = #tpu.pipeline_mode<synchronous>, transform_indices = @transform_2, window_bounds = array<i64: 1, 256>}, {pipeline_mode = #tpu.pipeline_mode<synchronous>, transform_indices = @transform_3, window_bounds = array<i64: 1, 256>}, {pipeline_mode = #tpu.pipeline_mode<synchronous>, transform_indices = @transform_4, window_bounds = array<i64: 1, 256>}, {pipeline_mode = #tpu.pipeline_mode<synchronous>, transform_indices = @transform_5, window_bounds = array<i64: 256, 32>}, {pipeline_mode = #tpu.pipeline_mode<synchronous>, transform_indices = @transform_6, window_bounds = array<i64: 1, 32>}, {pipeline_mode = #tpu.pipeline_mode<synchronous>, transform_indices = @transform_7, window_bounds = array<i64: 1, 32>}, {pipeline_mode = #tpu.pipeline_mode<synchronous>, transform_indices = @transform_8, window_bounds = array<i64: 1, 32>}, {transform_indices = @transform_9, window_bounds = array<i64: 4, 16, 32>}]} {
    %c0 = arith.constant 0 : index
    %c0_0 = arith.constant 0 : index
    %c0_1 = arith.constant 0 : index
    %0 = vector.load %arg1[%c0, %c0_0, %c0_1] : memref<4x16x32xf32, #tpu.memory_space<vmem>>, vector<4x16x32xf32>
    %1 = vector.shape_cast %0 : vector<4x16x32xf32> to vector<64x32xf32>
    %c0_2 = arith.constant 0 : index
    %c0_3 = arith.constant 0 : index
    %2 = vector.load %arg2[%c0_2, %c0_3] : memref<32x256xf32, #tpu.memory_space<vmem>>, vector<32x256xf32>
    %cst = arith.constant dense<0.000000e+00> : vector<64x256xf32>
    %3 = tpu.matmul %1, %2, %cst {dimension_numbers = #tpu.dot_dimension_numbers<[1], [0], [0], [1], [0, 0, 1, 1], [], []>} : vector<64x32xf32>, vector<32x256xf32>, vector<64x256xf32> -> vector<64x256xf32>
    %c0_4 = arith.constant 0 : index
    %c0_5 = arith.constant 0 : index
    %4 = vector.load %arg3[%c0_4, %c0_5] : memref<1x256xf32, #tpu.memory_space<vmem>>, vector<1x256xf32>
    %5 = vector.broadcast %4 : vector<1x256xf32> to vector<64x256xf32>
    %6 = arith.addf %3, %5 : vector<64x256xf32>
    %c0_6 = arith.constant 0 : index
    %c0_7 = arith.constant 0 : index
    %7 = vector.load %arg4[%c0_6, %c0_7] : memref<1x256xf32, #tpu.memory_space<vmem>>, vector<1x256xf32>
    %c0_8 = arith.constant 0 : index
    %c0_9 = arith.constant 0 : index
    %8 = vector.load %arg5[%c0_8, %c0_9] : memref<1x256xf32, #tpu.memory_space<vmem>>, vector<1x256xf32>
    %cst_10 = arith.constant dense<0.000000e+00> : vector<64xf32>
    %9 = vector.multi_reduction <add>, %6, %cst_10 [1] : vector<64x256xf32> to vector<64xf32>
    %10 = vector.shape_cast %9 : vector<64xf32> to vector<64x1xf32>
    %cst_11 = arith.constant 2.560000e+02 : f32
    %11 = vector.broadcast %cst_11 : f32 to vector<64x1xf32>
    %12 = arith.divf %10, %11 : vector<64x1xf32>
    %13 = arith.mulf %6, %6 : vector<64x256xf32>
    %cst_12 = arith.constant dense<0.000000e+00> : vector<64xf32>
    %14 = vector.multi_reduction <add>, %13, %cst_12 [1] : vector<64x256xf32> to vector<64xf32>
    %15 = vector.shape_cast %14 : vector<64xf32> to vector<64x1xf32>
    %cst_13 = arith.constant 2.560000e+02 : f32
    %16 = vector.broadcast %cst_13 : f32 to vector<64x1xf32>
    %17 = arith.divf %15, %16 : vector<64x1xf32>
    %18 = arith.mulf %12, %12 : vector<64x1xf32>
    %19 = arith.subf %17, %18 : vector<64x1xf32>
    %20 = vector.broadcast %12 : vector<64x1xf32> to vector<64x256xf32>
    %21 = arith.subf %6, %20 : vector<64x256xf32>
    %cst_14 = arith.constant 9.99999974E-6 : f32
    %22 = vector.broadcast %cst_14 : f32 to vector<64x1xf32>
    %23 = arith.addf %19, %22 : vector<64x1xf32>
    %24 = math.rsqrt %23 : vector<64x1xf32>
    %25 = vector.broadcast %24 : vector<64x1xf32> to vector<64x256xf32>
    %26 = arith.mulf %21, %25 : vector<64x256xf32>
    %27 = vector.broadcast %7 : vector<1x256xf32> to vector<64x256xf32>
    %28 = arith.mulf %26, %27 : vector<64x256xf32>
    %29 = vector.broadcast %8 : vector<1x256xf32> to vector<64x256xf32>
    %30 = arith.addf %28, %29 : vector<64x256xf32>
    %31 = vector.shape_cast %30 : vector<64x256xf32> to vector<4x16x256xf32>
    %cst_15 = arith.constant 0.000000e+00 : f32
    %32 = vector.broadcast %cst_15 : f32 to vector<16x256xf32>
    %33 = vector.extract_strided_slice %31 {offsets = [0, 0, 0], sizes = [1, 16, 256], strides = [1, 1, 1]} : vector<4x16x256xf32> to vector<1x16x256xf32>
    %34 = vector.shape_cast %33 : vector<1x16x256xf32> to vector<16x256xf32>
    %35 = arith.subf %34, %32 : vector<16x256xf32>
    %cst_16 = arith.constant 5.000000e-01 : f32
    %36 = vector.broadcast %cst_16 : f32 to vector<16x256xf32>
    %37 = arith.mulf %35, %36 : vector<16x256xf32>
    %38 = arith.addf %32, %37 : vector<16x256xf32>
    %cst_17 = arith.constant 1.000000e+00 : f32
    %39 = vector.broadcast %cst_17 : f32 to vector<16x256xf32>
    %40 = arith.cmpf oge, %38, %39 : vector<16x256xf32>
    %41 = arith.extui %40 : vector<16x256xi1> to vector<16x256xi32>
    %42 = arith.sitofp %41 : vector<16x256xi32> to vector<16x256xf32>
    %cst_18 = arith.constant 1.000000e+00 : f32
    %43 = vector.broadcast %cst_18 : f32 to vector<16x256xf32>
    %44 = arith.subf %43, %42 : vector<16x256xf32>
    %45 = arith.mulf %38, %44 : vector<16x256xf32>
    %46 = arith.truncf %42 : vector<16x256xf32> to vector<16x256xbf16>
    %c0_19 = arith.constant 0 : index
    %c0_20 = arith.constant 0 : index
    %c0_21 = arith.constant 0 : index
    %47 = vector.load %arg11[%c0_19, %c0_20, %c0_21] : memref<4x16x256xbf16, #tpu.memory_space<vmem>>, vector<1x16x256xbf16>
    %48 = vector.shape_cast %47 : vector<1x16x256xbf16> to vector<16x256xbf16>
    %49 = vector.shape_cast %46 : vector<16x256xbf16> to vector<1x16x256xbf16>
    tpu.vector_store %arg11[%c0_19, %c0_20, %c0_21], %49 {strides = array<i32>} : memref<4x16x256xbf16, #tpu.memory_space<vmem>>, vector<1x16x256xbf16>,
    %50 = vector.extract_strided_slice %31 {offsets = [1, 0, 0], sizes = [1, 16, 256], strides = [1, 1, 1]} : vector<4x16x256xf32> to vector<1x16x256xf32>
    %51 = vector.shape_cast %50 : vector<1x16x256xf32> to vector<16x256xf32>
    %52 = arith.subf %51, %45 : vector<16x256xf32>
    %cst_22 = arith.constant 5.000000e-01 : f32
    %53 = vector.broadcast %cst_22 : f32 to vector<16x256xf32>
    %54 = arith.mulf %52, %53 : vector<16x256xf32>
    %55 = arith.addf %45, %54 : vector<16x256xf32>
    %cst_23 = arith.constant 1.000000e+00 : f32
    %56 = vector.broadcast %cst_23 : f32 to vector<16x256xf32>
    %57 = arith.cmpf oge, %55, %56 : vector<16x256xf32>
    %58 = arith.extui %57 : vector<16x256xi1> to vector<16x256xi32>
    %59 = arith.sitofp %58 : vector<16x256xi32> to vector<16x256xf32>
    %cst_24 = arith.constant 1.000000e+00 : f32
    %60 = vector.broadcast %cst_24 : f32 to vector<16x256xf32>
    %61 = arith.subf %60, %59 : vector<16x256xf32>
    %62 = arith.mulf %55, %61 : vector<16x256xf32>
    %63 = arith.truncf %59 : vector<16x256xf32> to vector<16x256xbf16>
    %c1 = arith.constant 1 : index
    %c0_25 = arith.constant 0 : index
    %c0_26 = arith.constant 0 : index
    %64 = vector.load %arg11[%c1, %c0_25, %c0_26] : memref<4x16x256xbf16, #tpu.memory_space<vmem>>, vector<1x16x256xbf16>
    %65 = vector.shape_cast %64 : vector<1x16x256xbf16> to vector<16x256xbf16>
    %66 = vector.shape_cast %63 : vector<16x256xbf16> to vector<1x16x256xbf16>
    tpu.vector_store %arg11[%c1, %c0_25, %c0_26], %66 {strides = array<i32>} : memref<4x16x256xbf16, #tpu.memory_space<vmem>>, vector<1x16x256xbf16>,
    %67 = vector.extract_strided_slice %31 {offsets = [2, 0, 0], sizes = [1, 16, 256], strides = [1, 1, 1]} : vector<4x16x256xf32> to vector<1x16x256xf32>
    %68 = vector.shape_cast %67 : vector<1x16x256xf32> to vector<16x256xf32>
    %69 = arith.subf %68, %62 : vector<16x256xf32>
    %cst_27 = arith.constant 5.000000e-01 : f32
    %70 = vector.broadcast %cst_27 : f32 to vector<16x256xf32>
    %71 = arith.mulf %69, %70 : vector<16x256xf32>
    %72 = arith.addf %62, %71 : vector<16x256xf32>
    %cst_28 = arith.constant 1.000000e+00 : f32
    %73 = vector.broadcast %cst_28 : f32 to vector<16x256xf32>
    %74 = arith.cmpf oge, %72, %73 : vector<16x256xf32>
    %75 = arith.extui %74 : vector<16x256xi1> to vector<16x256xi32>
    %76 = arith.sitofp %75 : vector<16x256xi32> to vector<16x256xf32>
    %cst_29 = arith.constant 1.000000e+00 : f32
    %77 = vector.broadcast %cst_29 : f32 to vector<16x256xf32>
    %78 = arith.subf %77, %76 : vector<16x256xf32>
    %79 = arith.mulf %72, %78 : vector<16x256xf32>
    %80 = arith.truncf %76 : vector<16x256xf32> to vector<16x256xbf16>
    %c2 = arith.constant 2 : index
    %c0_30 = arith.constant 0 : index
    %c0_31 = arith.constant 0 : index
    %81 = vector.load %arg11[%c2, %c0_30, %c0_31] : memref<4x16x256xbf16, #tpu.memory_space<vmem>>, vector<1x16x256xbf16>
    %82 = vector.shape_cast %81 : vector<1x16x256xbf16> to vector<16x256xbf16>
    %83 = vector.shape_cast %80 : vector<16x256xbf16> to vector<1x16x256xbf16>
    tpu.vector_store %arg11[%c2, %c0_30, %c0_31], %83 {strides = array<i32>} : memref<4x16x256xbf16, #tpu.memory_space<vmem>>, vector<1x16x256xbf16>,
    %84 = vector.extract_strided_slice %31 {offsets = [3, 0, 0], sizes = [1, 16, 256], strides = [1, 1, 1]} : vector<4x16x256xf32> to vector<1x16x256xf32>
    %85 = vector.shape_cast %84 : vector<1x16x256xf32> to vector<16x256xf32>
    %86 = arith.subf %85, %79 : vector<16x256xf32>
    %cst_32 = arith.constant 5.000000e-01 : f32
    %87 = vector.broadcast %cst_32 : f32 to vector<16x256xf32>
    %88 = arith.mulf %86, %87 : vector<16x256xf32>
    %89 = arith.addf %79, %88 : vector<16x256xf32>
    %cst_33 = arith.constant 1.000000e+00 : f32
    %90 = vector.broadcast %cst_33 : f32 to vector<16x256xf32>
    %91 = arith.cmpf oge, %89, %90 : vector<16x256xf32>
    %92 = arith.extui %91 : vector<16x256xi1> to vector<16x256xi32>
    %93 = arith.sitofp %92 : vector<16x256xi32> to vector<16x256xf32>
    %94 = arith.truncf %93 : vector<16x256xf32> to vector<16x256xbf16>
    %c3 = arith.constant 3 : index
    %c0_34 = arith.constant 0 : index
    %c0_35 = arith.constant 0 : index
    %95 = vector.load %arg11[%c3, %c0_34, %c0_35] : memref<4x16x256xbf16, #tpu.memory_space<vmem>>, vector<1x16x256xbf16>
    %96 = vector.shape_cast %95 : vector<1x16x256xbf16> to vector<16x256xbf16>
    %97 = vector.shape_cast %94 : vector<16x256xbf16> to vector<1x16x256xbf16>
    tpu.vector_store %arg11[%c3, %c0_34, %c0_35], %97 {strides = array<i32>} : memref<4x16x256xbf16, #tpu.memory_space<vmem>>, vector<1x16x256xbf16>,
    %c0_36 = arith.constant 0 : index
    %c0_37 = arith.constant 0 : index
    %c0_38 = arith.constant 0 : index
    %98 = vector.load %arg11[%c0_36, %c0_37, %c0_38] : memref<4x16x256xbf16, #tpu.memory_space<vmem>>, vector<4x16x256xbf16>
    %99 = arith.extf %98 : vector<4x16x256xbf16> to vector<4x16x256xf32>
    %100 = vector.shape_cast %99 : vector<4x16x256xf32> to vector<64x256xf32>
    %c0_39 = arith.constant 0 : index
    %c0_40 = arith.constant 0 : index
    %101 = vector.load %arg6[%c0_39, %c0_40] : memref<256x32xf32, #tpu.memory_space<vmem>>, vector<256x32xf32>
    %cst_41 = arith.constant dense<0.000000e+00> : vector<64x32xf32>
    %102 = tpu.matmul %100, %101, %cst_41 {dimension_numbers = #tpu.dot_dimension_numbers<[1], [0], [0], [1], [0, 0, 1, 1], [], []>} : vector<64x256xf32>, vector<256x32xf32>, vector<64x32xf32> -> vector<64x32xf32>
    %c0_42 = arith.constant 0 : index
    %c0_43 = arith.constant 0 : index
    %103 = vector.load %arg7[%c0_42, %c0_43] : memref<1x32xf32, #tpu.memory_space<vmem>>, vector<1x32xf32>
    %104 = vector.broadcast %103 : vector<1x32xf32> to vector<64x32xf32>
    %105 = arith.addf %102, %104 : vector<64x32xf32>
    %c0_44 = arith.constant 0 : index
    %c0_45 = arith.constant 0 : index
    %106 = vector.load %arg8[%c0_44, %c0_45] : memref<1x32xf32, #tpu.memory_space<vmem>>, vector<1x32xf32>
    %c0_46 = arith.constant 0 : index
    %c0_47 = arith.constant 0 : index
    %107 = vector.load %arg9[%c0_46, %c0_47] : memref<1x32xf32, #tpu.memory_space<vmem>>, vector<1x32xf32>
    %cst_48 = arith.constant dense<0.000000e+00> : vector<64xf32>
    %108 = vector.multi_reduction <add>, %105, %cst_48 [1] : vector<64x32xf32> to vector<64xf32>
    %109 = vector.shape_cast %108 : vector<64xf32> to vector<64x1xf32>
    %cst_49 = arith.constant 3.200000e+01 : f32
    %110 = vector.broadcast %cst_49 : f32 to vector<64x1xf32>
    %111 = arith.divf %109, %110 : vector<64x1xf32>
    %112 = arith.mulf %105, %105 : vector<64x32xf32>
    %cst_50 = arith.constant dense<0.000000e+00> : vector<64xf32>
    %113 = vector.multi_reduction <add>, %112, %cst_50 [1] : vector<64x32xf32> to vector<64xf32>
    %114 = vector.shape_cast %113 : vector<64xf32> to vector<64x1xf32>
    %cst_51 = arith.constant 3.200000e+01 : f32
    %115 = vector.broadcast %cst_51 : f32 to vector<64x1xf32>
    %116 = arith.divf %114, %115 : vector<64x1xf32>
    %117 = arith.mulf %111, %111 : vector<64x1xf32>
    %118 = arith.subf %116, %117 : vector<64x1xf32>
    %119 = vector.broadcast %111 : vector<64x1xf32> to vector<64x32xf32>
    %120 = arith.subf %105, %119 : vector<64x32xf32>
    %cst_52 = arith.constant 9.99999974E-6 : f32
    %121 = vector.broadcast %cst_52 : f32 to vector<64x1xf32>
    %122 = arith.addf %118, %121 : vector<64x1xf32>
    %123 = math.rsqrt %122 : vector<64x1xf32>
    %124 = vector.broadcast %123 : vector<64x1xf32> to vector<64x32xf32>
    %125 = arith.mulf %120, %124 : vector<64x32xf32>
    %126 = vector.broadcast %106 : vector<1x32xf32> to vector<64x32xf32>
    %127 = arith.mulf %125, %126 : vector<64x32xf32>
    %128 = vector.broadcast %107 : vector<1x32xf32> to vector<64x32xf32>
    %129 = arith.addf %127, %128 : vector<64x32xf32>
    %130 = vector.shape_cast %129 : vector<64x32xf32> to vector<4x16x32xf32>
    %cst_53 = arith.constant 0.000000e+00 : f32
    %131 = vector.broadcast %cst_53 : f32 to vector<16x32xf32>
    %132 = vector.extract_strided_slice %130 {offsets = [0, 0, 0], sizes = [1, 16, 32], strides = [1, 1, 1]} : vector<4x16x32xf32> to vector<1x16x32xf32>
    %133 = vector.shape_cast %132 : vector<1x16x32xf32> to vector<16x32xf32>
    %134 = arith.subf %133, %131 : vector<16x32xf32>
    %cst_54 = arith.constant 5.000000e-01 : f32
    %135 = vector.broadcast %cst_54 : f32 to vector<16x32xf32>
    %136 = arith.mulf %134, %135 : vector<16x32xf32>
    %137 = arith.addf %131, %136 : vector<16x32xf32>
    %cst_55 = arith.constant 1.000000e+00 : f32
    %138 = vector.broadcast %cst_55 : f32 to vector<16x32xf32>
    %139 = arith.cmpf oge, %137, %138 : vector<16x32xf32>
    %140 = arith.extui %139 : vector<16x32xi1> to vector<16x32xi32>
    %141 = arith.sitofp %140 : vector<16x32xi32> to vector<16x32xf32>
    %cst_56 = arith.constant 1.000000e+00 : f32
    %142 = vector.broadcast %cst_56 : f32 to vector<16x32xf32>
    %143 = arith.subf %142, %141 : vector<16x32xf32>
    %144 = arith.mulf %137, %143 : vector<16x32xf32>
    %145 = vector.extract_strided_slice %0 {offsets = [0, 0, 0], sizes = [1, 16, 32], strides = [1, 1, 1]} : vector<4x16x32xf32> to vector<1x16x32xf32>
    %146 = vector.shape_cast %145 : vector<1x16x32xf32> to vector<16x32xf32>
    %147 = arith.addf %141, %146 : vector<16x32xf32>
    %c0_57 = arith.constant 0 : index
    %c0_58 = arith.constant 0 : index
    %c0_59 = arith.constant 0 : index
    %148 = vector.load %arg10[%c0_57, %c0_58, %c0_59] : memref<4x16x32xf32, #tpu.memory_space<vmem>>, vector<1x16x32xf32>
    %149 = vector.shape_cast %148 : vector<1x16x32xf32> to vector<16x32xf32>
    %150 = vector.shape_cast %147 : vector<16x32xf32> to vector<1x16x32xf32>
    tpu.vector_store %arg10[%c0_57, %c0_58, %c0_59], %150 {strides = array<i32>} : memref<4x16x32xf32, #tpu.memory_space<vmem>>, vector<1x16x32xf32>,
    %151 = vector.extract_strided_slice %130 {offsets = [1, 0, 0], sizes = [1, 16, 32], strides = [1, 1, 1]} : vector<4x16x32xf32> to vector<1x16x32xf32>
    %152 = vector.shape_cast %151 : vector<1x16x32xf32> to vector<16x32xf32>
    %153 = arith.subf %152, %144 : vector<16x32xf32>
    %cst_60 = arith.constant 5.000000e-01 : f32
    %154 = vector.broadcast %cst_60 : f32 to vector<16x32xf32>
    %155 = arith.mulf %153, %154 : vector<16x32xf32>
    %156 = arith.addf %144, %155 : vector<16x32xf32>
    %cst_61 = arith.constant 1.000000e+00 : f32
    %157 = vector.broadcast %cst_61 : f32 to vector<16x32xf32>
    %158 = arith.cmpf oge, %156, %157 : vector<16x32xf32>
    %159 = arith.extui %158 : vector<16x32xi1> to vector<16x32xi32>
    %160 = arith.sitofp %159 : vector<16x32xi32> to vector<16x32xf32>
    %cst_62 = arith.constant 1.000000e+00 : f32
    %161 = vector.broadcast %cst_62 : f32 to vector<16x32xf32>
    %162 = arith.subf %161, %160 : vector<16x32xf32>
    %163 = arith.mulf %156, %162 : vector<16x32xf32>
    %164 = vector.extract_strided_slice %0 {offsets = [1, 0, 0], sizes = [1, 16, 32], strides = [1, 1, 1]} : vector<4x16x32xf32> to vector<1x16x32xf32>
    %165 = vector.shape_cast %164 : vector<1x16x32xf32> to vector<16x32xf32>
    %166 = arith.addf %160, %165 : vector<16x32xf32>
    %c1_63 = arith.constant 1 : index
    %c0_64 = arith.constant 0 : index
    %c0_65 = arith.constant 0 : index
    %167 = vector.load %arg10[%c1_63, %c0_64, %c0_65] : memref<4x16x32xf32, #tpu.memory_space<vmem>>, vector<1x16x32xf32>
    %168 = vector.shape_cast %167 : vector<1x16x32xf32> to vector<16x32xf32>
    %169 = vector.shape_cast %166 : vector<16x32xf32> to vector<1x16x32xf32>
    tpu.vector_store %arg10[%c1_63, %c0_64, %c0_65], %169 {strides = array<i32>} : memref<4x16x32xf32, #tpu.memory_space<vmem>>, vector<1x16x32xf32>,
    %170 = vector.extract_strided_slice %130 {offsets = [2, 0, 0], sizes = [1, 16, 32], strides = [1, 1, 1]} : vector<4x16x32xf32> to vector<1x16x32xf32>
    %171 = vector.shape_cast %170 : vector<1x16x32xf32> to vector<16x32xf32>
    %172 = arith.subf %171, %163 : vector<16x32xf32>
    %cst_66 = arith.constant 5.000000e-01 : f32
    %173 = vector.broadcast %cst_66 : f32 to vector<16x32xf32>
    %174 = arith.mulf %172, %173 : vector<16x32xf32>
    %175 = arith.addf %163, %174 : vector<16x32xf32>
    %cst_67 = arith.constant 1.000000e+00 : f32
    %176 = vector.broadcast %cst_67 : f32 to vector<16x32xf32>
    %177 = arith.cmpf oge, %175, %176 : vector<16x32xf32>
    %178 = arith.extui %177 : vector<16x32xi1> to vector<16x32xi32>
    %179 = arith.sitofp %178 : vector<16x32xi32> to vector<16x32xf32>
    %cst_68 = arith.constant 1.000000e+00 : f32
    %180 = vector.broadcast %cst_68 : f32 to vector<16x32xf32>
    %181 = arith.subf %180, %179 : vector<16x32xf32>
    %182 = arith.mulf %175, %181 : vector<16x32xf32>
    %183 = vector.extract_strided_slice %0 {offsets = [2, 0, 0], sizes = [1, 16, 32], strides = [1, 1, 1]} : vector<4x16x32xf32> to vector<1x16x32xf32>
    %184 = vector.shape_cast %183 : vector<1x16x32xf32> to vector<16x32xf32>
    %185 = arith.addf %179, %184 : vector<16x32xf32>
    %c2_69 = arith.constant 2 : index
    %c0_70 = arith.constant 0 : index
    %c0_71 = arith.constant 0 : index
    %186 = vector.load %arg10[%c2_69, %c0_70, %c0_71] : memref<4x16x32xf32, #tpu.memory_space<vmem>>, vector<1x16x32xf32>
    %187 = vector.shape_cast %186 : vector<1x16x32xf32> to vector<16x32xf32>
    %188 = vector.shape_cast %185 : vector<16x32xf32> to vector<1x16x32xf32>
    tpu.vector_store %arg10[%c2_69, %c0_70, %c0_71], %188 {strides = array<i32>} : memref<4x16x32xf32, #tpu.memory_space<vmem>>, vector<1x16x32xf32>,
    %189 = vector.extract_strided_slice %130 {offsets = [3, 0, 0], sizes = [1, 16, 32], strides = [1, 1, 1]} : vector<4x16x32xf32> to vector<1x16x32xf32>
    %190 = vector.shape_cast %189 : vector<1x16x32xf32> to vector<16x32xf32>
    %191 = arith.subf %190, %182 : vector<16x32xf32>
    %cst_72 = arith.constant 5.000000e-01 : f32
    %192 = vector.broadcast %cst_72 : f32 to vector<16x32xf32>
    %193 = arith.mulf %191, %192 : vector<16x32xf32>
    %194 = arith.addf %182, %193 : vector<16x32xf32>
    %cst_73 = arith.constant 1.000000e+00 : f32
    %195 = vector.broadcast %cst_73 : f32 to vector<16x32xf32>
    %196 = arith.cmpf oge, %194, %195 : vector<16x32xf32>
    %197 = arith.extui %196 : vector<16x32xi1> to vector<16x32xi32>
    %198 = arith.sitofp %197 : vector<16x32xi32> to vector<16x32xf32>
    %199 = vector.extract_strided_slice %0 {offsets = [3, 0, 0], sizes = [1, 16, 32], strides = [1, 1, 1]} : vector<4x16x32xf32> to vector<1x16x32xf32>
    %200 = vector.shape_cast %199 : vector<1x16x32xf32> to vector<16x32xf32>
    %201 = arith.addf %198, %200 : vector<16x32xf32>
    %c3_74 = arith.constant 3 : index
    %c0_75 = arith.constant 0 : index
    %c0_76 = arith.constant 0 : index
    %202 = vector.load %arg10[%c3_74, %c0_75, %c0_76] : memref<4x16x32xf32, #tpu.memory_space<vmem>>, vector<1x16x32xf32>
    %203 = vector.shape_cast %202 : vector<1x16x32xf32> to vector<16x32xf32>
    %204 = vector.shape_cast %201 : vector<16x32xf32> to vector<1x16x32xf32>
    tpu.vector_store %arg10[%c3_74, %c0_75, %c0_76], %204 {strides = array<i32>} : memref<4x16x32xf32, #tpu.memory_space<vmem>>, vector<1x16x32xf32>,
    return
  }
  func.func @transform_0(%arg0: i32) -> (i32, i32, i32) {
    %c0_i32 = arith.constant 0 : i32
    %c0_i32_0 = arith.constant 0 : i32
    %c0_i32_1 = arith.constant 0 : i32
    return %c0_i32, %arg0, %c0_i32_0 : i32, i32, i32
  }
  func.func @transform_1(%arg0: i32) -> (i32, i32) {
    %c0_i32 = arith.constant 0 : i32
    %c0_i32_0 = arith.constant 0 : i32
    %c0_i32_1 = arith.constant 0 : i32
    return %c0_i32, %c0_i32_0 : i32, i32
  }
  func.func @transform_2(%arg0: i32) -> (i32, i32) {
    %c0_i32 = arith.constant 0 : i32
    %c0_i32_0 = arith.constant 0 : i32
    %c0_i32_1 = arith.constant 0 : i32
    return %c0_i32, %c0_i32_0 : i32, i32
  }
  func.func @transform_3(%arg0: i32) -> (i32, i32) {
    %c0_i32 = arith.constant 0 : i32
    %c0_i32_0 = arith.constant 0 : i32
    %c0_i32_1 = arith.constant 0 : i32
    return %c0_i32, %c0_i32_0 : i32, i32
  }
  func.func @transform_4(%arg0: i32) -> (i32, i32) {
    %c0_i32 = arith.constant 0 : i32
    %c0_i32_0 = arith.constant 0 : i32
    %c0_i32_1 = arith.constant 0 : i32
    return %c0_i32, %c0_i32_0 : i32, i32
  }
  func.func @transform_5(%arg0: i32) -> (i32, i32) {
    %c0_i32 = arith.constant 0 : i32
    %c0_i32_0 = arith.constant 0 : i32
    %c0_i32_1 = arith.constant 0 : i32
    return %c0_i32, %c0_i32_0 : i32, i32
  }
  func.func @transform_6(%arg0: i32) -> (i32, i32) {
    %c0_i32 = arith.constant 0 : i32
    %c0_i32_0 = arith.constant 0 : i32
    %c0_i32_1 = arith.constant 0 : i32
    return %c0_i32, %c0_i32_0 : i32, i32
  }
  func.func @transform_7(%arg0: i32) -> (i32, i32) {
    %c0_i32 = arith.constant 0 : i32
    %c0_i32_0 = arith.constant 0 : i32
    %c0_i32_1 = arith.constant 0 : i32
    return %c0_i32, %c0_i32_0 : i32, i32
  }
  func.func @transform_8(%arg0: i32) -> (i32, i32) {
    %c0_i32 = arith.constant 0 : i32
    %c0_i32_0 = arith.constant 0 : i32
    %c0_i32_1 = arith.constant 0 : i32
    return %c0_i32, %c0_i32_0 : i32, i32
  }
  func.func @transform_9(%arg0: i32) -> (i32, i32, i32) {
    %c0_i32 = arith.constant 0 : i32
    %c0_i32_0 = arith.constant 0 : i32
    %c0_i32_1 = arith.constant 0 : i32
    return %c0_i32, %arg0, %c0_i32_0 : i32, i32, i32
  }
}

module attributes {stable_mosaic.version = 11 : i64} {
  func.func @ssa_kernel(%arg0: i32, %arg1: memref<4x2x8x32xf32, #tpu.memory_space<vmem>>, %arg2: memref<3x32x32xf32, #tpu.memory_space<vmem>>, %arg3: memref<3x1x32xf32, #tpu.memory_space<vmem>>, %arg4: memref<3x1x32xf32, #tpu.memory_space<vmem>>, %arg5: memref<32x32xf32, #tpu.memory_space<vmem>>, %arg6: memref<1x32xf32, #tpu.memory_space<vmem>>, %arg7: memref<1x32xf32, #tpu.memory_space<vmem>>, %arg8: memref<1x32xf32, #tpu.memory_space<vmem>>, %arg9: memref<4x2x8x32xf32, #tpu.memory_space<vmem>>, %arg10: memref<4x2x8x32xbf16, #tpu.memory_space<vmem>>, %arg11: memref<4x2x8x32xbf16, #tpu.memory_space<vmem>>, %arg12: memref<4x2x8x32xbf16, #tpu.memory_space<vmem>>, %arg13: memref<4x2x8x32xbf16, #tpu.memory_space<vmem>>) attributes {dimension_semantics = [#tpu.dimension_semantics<parallel>], iteration_bounds = array<i64: 1>, scalar_prefetch = 0 : i64, scratch_operands = 4 : i64, tpu.core_type = #tpu.core_type<tc>, window_params = [{transform_indices = @transform_0, window_bounds = array<i64: 4, 2, 8, 32>}, {pipeline_mode = #tpu.pipeline_mode<synchronous>, transform_indices = @transform_1, window_bounds = array<i64: 3, 32, 32>}, {pipeline_mode = #tpu.pipeline_mode<synchronous>, transform_indices = @transform_2, window_bounds = array<i64: 3, 1, 32>}, {pipeline_mode = #tpu.pipeline_mode<synchronous>, transform_indices = @transform_3, window_bounds = array<i64: 3, 1, 32>}, {pipeline_mode = #tpu.pipeline_mode<synchronous>, transform_indices = @transform_4, window_bounds = array<i64: 32, 32>}, {pipeline_mode = #tpu.pipeline_mode<synchronous>, transform_indices = @transform_5, window_bounds = array<i64: 1, 32>}, {pipeline_mode = #tpu.pipeline_mode<synchronous>, transform_indices = @transform_6, window_bounds = array<i64: 1, 32>}, {pipeline_mode = #tpu.pipeline_mode<synchronous>, transform_indices = @transform_7, window_bounds = array<i64: 1, 32>}, {transform_indices = @transform_8, window_bounds = array<i64: 4, 2, 8, 32>}]} {
    %c0 = arith.constant 0 : index
    %c0_0 = arith.constant 0 : index
    %c0_1 = arith.constant 0 : index
    %c0_2 = arith.constant 0 : index
    %0 = vector.load %arg1[%c0, %c0_0, %c0_1, %c0_2] : memref<4x2x8x32xf32, #tpu.memory_space<vmem>>, vector<4x2x8x32xf32>
    %1 = vector.shape_cast %0 : vector<4x2x8x32xf32> to vector<64x32xf32>
    %c0_3 = arith.constant 0 : index
    %c0_4 = arith.constant 0 : index
    %c0_5 = arith.constant 0 : index
    %2 = vector.load %arg2[%c0_3, %c0_4, %c0_5] : memref<3x32x32xf32, #tpu.memory_space<vmem>>, vector<1x32x32xf32>
    %3 = vector.shape_cast %2 : vector<1x32x32xf32> to vector<32x32xf32>
    %cst = arith.constant dense<0.000000e+00> : vector<64x32xf32>
    %4 = tpu.matmul %1, %3, %cst {dimension_numbers = #tpu.dot_dimension_numbers<[1], [0], [0], [1], [0, 0, 1, 1], [], []>} : vector<64x32xf32>, vector<32x32xf32>, vector<64x32xf32> -> vector<64x32xf32>
    %c0_6 = arith.constant 0 : index
    %c0_7 = arith.constant 0 : index
    %c0_8 = arith.constant 0 : index
    %5 = vector.load %arg3[%c0_6, %c0_7, %c0_8] : memref<3x1x32xf32, #tpu.memory_space<vmem>>, vector<1x1x32xf32>
    %6 = vector.shape_cast %5 : vector<1x1x32xf32> to vector<1x32xf32>
    %c0_9 = arith.constant 0 : index
    %c0_10 = arith.constant 0 : index
    %c0_11 = arith.constant 0 : index
    %7 = vector.load %arg4[%c0_9, %c0_10, %c0_11] : memref<3x1x32xf32, #tpu.memory_space<vmem>>, vector<1x1x32xf32>
    %8 = vector.shape_cast %7 : vector<1x1x32xf32> to vector<1x32xf32>
    %cst_12 = arith.constant dense<0.000000e+00> : vector<64xf32>
    %9 = vector.multi_reduction <add>, %4, %cst_12 [1] : vector<64x32xf32> to vector<64xf32>
    %10 = vector.shape_cast %9 : vector<64xf32> to vector<64x1xf32>
    %cst_13 = arith.constant 3.200000e+01 : f32
    %11 = vector.broadcast %cst_13 : f32 to vector<64x1xf32>
    %12 = arith.divf %10, %11 : vector<64x1xf32>
    %13 = arith.mulf %4, %4 : vector<64x32xf32>
    %cst_14 = arith.constant dense<0.000000e+00> : vector<64xf32>
    %14 = vector.multi_reduction <add>, %13, %cst_14 [1] : vector<64x32xf32> to vector<64xf32>
    %15 = vector.shape_cast %14 : vector<64xf32> to vector<64x1xf32>
    %cst_15 = arith.constant 3.200000e+01 : f32
    %16 = vector.broadcast %cst_15 : f32 to vector<64x1xf32>
    %17 = arith.divf %15, %16 : vector<64x1xf32>
    %18 = arith.mulf %12, %12 : vector<64x1xf32>
    %19 = arith.subf %17, %18 : vector<64x1xf32>
    %20 = vector.broadcast %12 : vector<64x1xf32> to vector<64x32xf32>
    %21 = arith.subf %4, %20 : vector<64x32xf32>
    %cst_16 = arith.constant 9.99999974E-6 : f32
    %22 = vector.broadcast %cst_16 : f32 to vector<64x1xf32>
    %23 = arith.addf %19, %22 : vector<64x1xf32>
    %24 = math.rsqrt %23 : vector<64x1xf32>
    %25 = vector.broadcast %24 : vector<64x1xf32> to vector<64x32xf32>
    %26 = arith.mulf %21, %25 : vector<64x32xf32>
    %27 = vector.broadcast %6 : vector<1x32xf32> to vector<64x32xf32>
    %28 = arith.mulf %26, %27 : vector<64x32xf32>
    %29 = vector.broadcast %8 : vector<1x32xf32> to vector<64x32xf32>
    %30 = arith.addf %28, %29 : vector<64x32xf32>
    %31 = vector.shape_cast %30 : vector<64x32xf32> to vector<4x2x8x32xf32>
    %cst_17 = arith.constant 0.000000e+00 : f32
    %32 = vector.broadcast %cst_17 : f32 to vector<2x8x32xf32>
    %33 = vector.extract_strided_slice %31 {offsets = [0, 0, 0, 0], sizes = [1, 2, 8, 32], strides = [1, 1, 1, 1]} : vector<4x2x8x32xf32> to vector<1x2x8x32xf32>
    %34 = vector.shape_cast %33 : vector<1x2x8x32xf32> to vector<2x8x32xf32>
    %35 = arith.subf %34, %32 : vector<2x8x32xf32>
    %cst_18 = arith.constant 5.000000e-01 : f32
    %36 = vector.broadcast %cst_18 : f32 to vector<2x8x32xf32>
    %37 = arith.mulf %35, %36 : vector<2x8x32xf32>
    %38 = arith.addf %32, %37 : vector<2x8x32xf32>
    %cst_19 = arith.constant 1.000000e+00 : f32
    %39 = vector.broadcast %cst_19 : f32 to vector<2x8x32xf32>
    %40 = arith.cmpf oge, %38, %39 : vector<2x8x32xf32>
    %41 = arith.extui %40 : vector<2x8x32xi1> to vector<2x8x32xi32>
    %42 = arith.sitofp %41 : vector<2x8x32xi32> to vector<2x8x32xf32>
    %cst_20 = arith.constant 1.000000e+00 : f32
    %43 = vector.broadcast %cst_20 : f32 to vector<2x8x32xf32>
    %44 = arith.subf %43, %42 : vector<2x8x32xf32>
    %45 = arith.mulf %38, %44 : vector<2x8x32xf32>
    %46 = arith.truncf %42 : vector<2x8x32xf32> to vector<2x8x32xbf16>
    %c0_21 = arith.constant 0 : index
    %c0_22 = arith.constant 0 : index
    %c0_23 = arith.constant 0 : index
    %c0_24 = arith.constant 0 : index
    %47 = vector.load %arg10[%c0_21, %c0_22, %c0_23, %c0_24] : memref<4x2x8x32xbf16, #tpu.memory_space<vmem>>, vector<1x2x8x32xbf16>
    %48 = vector.shape_cast %47 : vector<1x2x8x32xbf16> to vector<2x8x32xbf16>
    %49 = vector.shape_cast %46 : vector<2x8x32xbf16> to vector<1x2x8x32xbf16>
    tpu.vector_store %arg10[%c0_21, %c0_22, %c0_23, %c0_24], %49 {strides = array<i32>} : memref<4x2x8x32xbf16, #tpu.memory_space<vmem>>, vector<1x2x8x32xbf16>,
    %50 = vector.extract_strided_slice %31 {offsets = [1, 0, 0, 0], sizes = [1, 2, 8, 32], strides = [1, 1, 1, 1]} : vector<4x2x8x32xf32> to vector<1x2x8x32xf32>
    %51 = vector.shape_cast %50 : vector<1x2x8x32xf32> to vector<2x8x32xf32>
    %52 = arith.subf %51, %45 : vector<2x8x32xf32>
    %cst_25 = arith.constant 5.000000e-01 : f32
    %53 = vector.broadcast %cst_25 : f32 to vector<2x8x32xf32>
    %54 = arith.mulf %52, %53 : vector<2x8x32xf32>
    %55 = arith.addf %45, %54 : vector<2x8x32xf32>
    %cst_26 = arith.constant 1.000000e+00 : f32
    %56 = vector.broadcast %cst_26 : f32 to vector<2x8x32xf32>
    %57 = arith.cmpf oge, %55, %56 : vector<2x8x32xf32>
    %58 = arith.extui %57 : vector<2x8x32xi1> to vector<2x8x32xi32>
    %59 = arith.sitofp %58 : vector<2x8x32xi32> to vector<2x8x32xf32>
    %cst_27 = arith.constant 1.000000e+00 : f32
    %60 = vector.broadcast %cst_27 : f32 to vector<2x8x32xf32>
    %61 = arith.subf %60, %59 : vector<2x8x32xf32>
    %62 = arith.mulf %55, %61 : vector<2x8x32xf32>
    %63 = arith.truncf %59 : vector<2x8x32xf32> to vector<2x8x32xbf16>
    %c1 = arith.constant 1 : index
    %c0_28 = arith.constant 0 : index
    %c0_29 = arith.constant 0 : index
    %c0_30 = arith.constant 0 : index
    %64 = vector.load %arg10[%c1, %c0_28, %c0_29, %c0_30] : memref<4x2x8x32xbf16, #tpu.memory_space<vmem>>, vector<1x2x8x32xbf16>
    %65 = vector.shape_cast %64 : vector<1x2x8x32xbf16> to vector<2x8x32xbf16>
    %66 = vector.shape_cast %63 : vector<2x8x32xbf16> to vector<1x2x8x32xbf16>
    tpu.vector_store %arg10[%c1, %c0_28, %c0_29, %c0_30], %66 {strides = array<i32>} : memref<4x2x8x32xbf16, #tpu.memory_space<vmem>>, vector<1x2x8x32xbf16>,
    %67 = vector.extract_strided_slice %31 {offsets = [2, 0, 0, 0], sizes = [1, 2, 8, 32], strides = [1, 1, 1, 1]} : vector<4x2x8x32xf32> to vector<1x2x8x32xf32>
    %68 = vector.shape_cast %67 : vector<1x2x8x32xf32> to vector<2x8x32xf32>
    %69 = arith.subf %68, %62 : vector<2x8x32xf32>
    %cst_31 = arith.constant 5.000000e-01 : f32
    %70 = vector.broadcast %cst_31 : f32 to vector<2x8x32xf32>
    %71 = arith.mulf %69, %70 : vector<2x8x32xf32>
    %72 = arith.addf %62, %71 : vector<2x8x32xf32>
    %cst_32 = arith.constant 1.000000e+00 : f32
    %73 = vector.broadcast %cst_32 : f32 to vector<2x8x32xf32>
    %74 = arith.cmpf oge, %72, %73 : vector<2x8x32xf32>
    %75 = arith.extui %74 : vector<2x8x32xi1> to vector<2x8x32xi32>
    %76 = arith.sitofp %75 : vector<2x8x32xi32> to vector<2x8x32xf32>
    %cst_33 = arith.constant 1.000000e+00 : f32
    %77 = vector.broadcast %cst_33 : f32 to vector<2x8x32xf32>
    %78 = arith.subf %77, %76 : vector<2x8x32xf32>
    %79 = arith.mulf %72, %78 : vector<2x8x32xf32>
    %80 = arith.truncf %76 : vector<2x8x32xf32> to vector<2x8x32xbf16>
    %c2 = arith.constant 2 : index
    %c0_34 = arith.constant 0 : index
    %c0_35 = arith.constant 0 : index
    %c0_36 = arith.constant 0 : index
    %81 = vector.load %arg10[%c2, %c0_34, %c0_35, %c0_36] : memref<4x2x8x32xbf16, #tpu.memory_space<vmem>>, vector<1x2x8x32xbf16>
    %82 = vector.shape_cast %81 : vector<1x2x8x32xbf16> to vector<2x8x32xbf16>
    %83 = vector.shape_cast %80 : vector<2x8x32xbf16> to vector<1x2x8x32xbf16>
    tpu.vector_store %arg10[%c2, %c0_34, %c0_35, %c0_36], %83 {strides = array<i32>} : memref<4x2x8x32xbf16, #tpu.memory_space<vmem>>, vector<1x2x8x32xbf16>,
    %84 = vector.extract_strided_slice %31 {offsets = [3, 0, 0, 0], sizes = [1, 2, 8, 32], strides = [1, 1, 1, 1]} : vector<4x2x8x32xf32> to vector<1x2x8x32xf32>
    %85 = vector.shape_cast %84 : vector<1x2x8x32xf32> to vector<2x8x32xf32>
    %86 = arith.subf %85, %79 : vector<2x8x32xf32>
    %cst_37 = arith.constant 5.000000e-01 : f32
    %87 = vector.broadcast %cst_37 : f32 to vector<2x8x32xf32>
    %88 = arith.mulf %86, %87 : vector<2x8x32xf32>
    %89 = arith.addf %79, %88 : vector<2x8x32xf32>
    %cst_38 = arith.constant 1.000000e+00 : f32
    %90 = vector.broadcast %cst_38 : f32 to vector<2x8x32xf32>
    %91 = arith.cmpf oge, %89, %90 : vector<2x8x32xf32>
    %92 = arith.extui %91 : vector<2x8x32xi1> to vector<2x8x32xi32>
    %93 = arith.sitofp %92 : vector<2x8x32xi32> to vector<2x8x32xf32>
    %94 = arith.truncf %93 : vector<2x8x32xf32> to vector<2x8x32xbf16>
    %c3 = arith.constant 3 : index
    %c0_39 = arith.constant 0 : index
    %c0_40 = arith.constant 0 : index
    %c0_41 = arith.constant 0 : index
    %95 = vector.load %arg10[%c3, %c0_39, %c0_40, %c0_41] : memref<4x2x8x32xbf16, #tpu.memory_space<vmem>>, vector<1x2x8x32xbf16>
    %96 = vector.shape_cast %95 : vector<1x2x8x32xbf16> to vector<2x8x32xbf16>
    %97 = vector.shape_cast %94 : vector<2x8x32xbf16> to vector<1x2x8x32xbf16>
    tpu.vector_store %arg10[%c3, %c0_39, %c0_40, %c0_41], %97 {strides = array<i32>} : memref<4x2x8x32xbf16, #tpu.memory_space<vmem>>, vector<1x2x8x32xbf16>,
    %c1_42 = arith.constant 1 : index
    %c0_43 = arith.constant 0 : index
    %c0_44 = arith.constant 0 : index
    %98 = vector.load %arg2[%c1_42, %c0_43, %c0_44] : memref<3x32x32xf32, #tpu.memory_space<vmem>>, vector<1x32x32xf32>
    %99 = vector.shape_cast %98 : vector<1x32x32xf32> to vector<32x32xf32>
    %cst_45 = arith.constant dense<0.000000e+00> : vector<64x32xf32>
    %100 = tpu.matmul %1, %99, %cst_45 {dimension_numbers = #tpu.dot_dimension_numbers<[1], [0], [0], [1], [0, 0, 1, 1], [], []>} : vector<64x32xf32>, vector<32x32xf32>, vector<64x32xf32> -> vector<64x32xf32>
    %c1_46 = arith.constant 1 : index
    %c0_47 = arith.constant 0 : index
    %c0_48 = arith.constant 0 : index
    %101 = vector.load %arg3[%c1_46, %c0_47, %c0_48] : memref<3x1x32xf32, #tpu.memory_space<vmem>>, vector<1x1x32xf32>
    %102 = vector.shape_cast %101 : vector<1x1x32xf32> to vector<1x32xf32>
    %c1_49 = arith.constant 1 : index
    %c0_50 = arith.constant 0 : index
    %c0_51 = arith.constant 0 : index
    %103 = vector.load %arg4[%c1_49, %c0_50, %c0_51] : memref<3x1x32xf32, #tpu.memory_space<vmem>>, vector<1x1x32xf32>
    %104 = vector.shape_cast %103 : vector<1x1x32xf32> to vector<1x32xf32>
    %cst_52 = arith.constant dense<0.000000e+00> : vector<64xf32>
    %105 = vector.multi_reduction <add>, %100, %cst_52 [1] : vector<64x32xf32> to vector<64xf32>
    %106 = vector.shape_cast %105 : vector<64xf32> to vector<64x1xf32>
    %cst_53 = arith.constant 3.200000e+01 : f32
    %107 = vector.broadcast %cst_53 : f32 to vector<64x1xf32>
    %108 = arith.divf %106, %107 : vector<64x1xf32>
    %109 = arith.mulf %100, %100 : vector<64x32xf32>
    %cst_54 = arith.constant dense<0.000000e+00> : vector<64xf32>
    %110 = vector.multi_reduction <add>, %109, %cst_54 [1] : vector<64x32xf32> to vector<64xf32>
    %111 = vector.shape_cast %110 : vector<64xf32> to vector<64x1xf32>
    %cst_55 = arith.constant 3.200000e+01 : f32
    %112 = vector.broadcast %cst_55 : f32 to vector<64x1xf32>
    %113 = arith.divf %111, %112 : vector<64x1xf32>
    %114 = arith.mulf %108, %108 : vector<64x1xf32>
    %115 = arith.subf %113, %114 : vector<64x1xf32>
    %116 = vector.broadcast %108 : vector<64x1xf32> to vector<64x32xf32>
    %117 = arith.subf %100, %116 : vector<64x32xf32>
    %cst_56 = arith.constant 9.99999974E-6 : f32
    %118 = vector.broadcast %cst_56 : f32 to vector<64x1xf32>
    %119 = arith.addf %115, %118 : vector<64x1xf32>
    %120 = math.rsqrt %119 : vector<64x1xf32>
    %121 = vector.broadcast %120 : vector<64x1xf32> to vector<64x32xf32>
    %122 = arith.mulf %117, %121 : vector<64x32xf32>
    %123 = vector.broadcast %102 : vector<1x32xf32> to vector<64x32xf32>
    %124 = arith.mulf %122, %123 : vector<64x32xf32>
    %125 = vector.broadcast %104 : vector<1x32xf32> to vector<64x32xf32>
    %126 = arith.addf %124, %125 : vector<64x32xf32>
    %127 = vector.shape_cast %126 : vector<64x32xf32> to vector<4x2x8x32xf32>
    %cst_57 = arith.constant 0.000000e+00 : f32
    %128 = vector.broadcast %cst_57 : f32 to vector<2x8x32xf32>
    %129 = vector.extract_strided_slice %127 {offsets = [0, 0, 0, 0], sizes = [1, 2, 8, 32], strides = [1, 1, 1, 1]} : vector<4x2x8x32xf32> to vector<1x2x8x32xf32>
    %130 = vector.shape_cast %129 : vector<1x2x8x32xf32> to vector<2x8x32xf32>
    %131 = arith.subf %130, %128 : vector<2x8x32xf32>
    %cst_58 = arith.constant 5.000000e-01 : f32
    %132 = vector.broadcast %cst_58 : f32 to vector<2x8x32xf32>
    %133 = arith.mulf %131, %132 : vector<2x8x32xf32>
    %134 = arith.addf %128, %133 : vector<2x8x32xf32>
    %cst_59 = arith.constant 1.000000e+00 : f32
    %135 = vector.broadcast %cst_59 : f32 to vector<2x8x32xf32>
    %136 = arith.cmpf oge, %134, %135 : vector<2x8x32xf32>
    %137 = arith.extui %136 : vector<2x8x32xi1> to vector<2x8x32xi32>
    %138 = arith.sitofp %137 : vector<2x8x32xi32> to vector<2x8x32xf32>
    %cst_60 = arith.constant 1.000000e+00 : f32
    %139 = vector.broadcast %cst_60 : f32 to vector<2x8x32xf32>
    %140 = arith.subf %139, %138 : vector<2x8x32xf32>
    %141 = arith.mulf %134, %140 : vector<2x8x32xf32>
    %142 = arith.truncf %138 : vector<2x8x32xf32> to vector<2x8x32xbf16>
    %c0_61 = arith.constant 0 : index
    %c0_62 = arith.constant 0 : index
    %c0_63 = arith.constant 0 : index
    %c0_64 = arith.constant 0 : index
    %143 = vector.load %arg11[%c0_61, %c0_62, %c0_63, %c0_64] : memref<4x2x8x32xbf16, #tpu.memory_space<vmem>>, vector<1x2x8x32xbf16>
    %144 = vector.shape_cast %143 : vector<1x2x8x32xbf16> to vector<2x8x32xbf16>
    %145 = vector.shape_cast %142 : vector<2x8x32xbf16> to vector<1x2x8x32xbf16>
    tpu.vector_store %arg11[%c0_61, %c0_62, %c0_63, %c0_64], %145 {strides = array<i32>} : memref<4x2x8x32xbf16, #tpu.memory_space<vmem>>, vector<1x2x8x32xbf16>,
    %146 = vector.extract_strided_slice %127 {offsets = [1, 0, 0, 0], sizes = [1, 2, 8, 32], strides = [1, 1, 1, 1]} : vector<4x2x8x32xf32> to vector<1x2x8x32xf32>
    %147 = vector.shape_cast %146 : vector<1x2x8x32xf32> to vector<2x8x32xf32>
    %148 = arith.subf %147, %141 : vector<2x8x32xf32>
    %cst_65 = arith.constant 5.000000e-01 : f32
    %149 = vector.broadcast %cst_65 : f32 to vector<2x8x32xf32>
    %150 = arith.mulf %148, %149 : vector<2x8x32xf32>
    %151 = arith.addf %141, %150 : vector<2x8x32xf32>
    %cst_66 = arith.constant 1.000000e+00 : f32
    %152 = vector.broadcast %cst_66 : f32 to vector<2x8x32xf32>
    %153 = arith.cmpf oge, %151, %152 : vector<2x8x32xf32>
    %154 = arith.extui %153 : vector<2x8x32xi1> to vector<2x8x32xi32>
    %155 = arith.sitofp %154 : vector<2x8x32xi32> to vector<2x8x32xf32>
    %cst_67 = arith.constant 1.000000e+00 : f32
    %156 = vector.broadcast %cst_67 : f32 to vector<2x8x32xf32>
    %157 = arith.subf %156, %155 : vector<2x8x32xf32>
    %158 = arith.mulf %151, %157 : vector<2x8x32xf32>
    %159 = arith.truncf %155 : vector<2x8x32xf32> to vector<2x8x32xbf16>
    %c1_68 = arith.constant 1 : index
    %c0_69 = arith.constant 0 : index
    %c0_70 = arith.constant 0 : index
    %c0_71 = arith.constant 0 : index
    %160 = vector.load %arg11[%c1_68, %c0_69, %c0_70, %c0_71] : memref<4x2x8x32xbf16, #tpu.memory_space<vmem>>, vector<1x2x8x32xbf16>
    %161 = vector.shape_cast %160 : vector<1x2x8x32xbf16> to vector<2x8x32xbf16>
    %162 = vector.shape_cast %159 : vector<2x8x32xbf16> to vector<1x2x8x32xbf16>
    tpu.vector_store %arg11[%c1_68, %c0_69, %c0_70, %c0_71], %162 {strides = array<i32>} : memref<4x2x8x32xbf16, #tpu.memory_space<vmem>>, vector<1x2x8x32xbf16>,
    %163 = vector.extract_strided_slice %127 {offsets = [2, 0, 0, 0], sizes = [1, 2, 8, 32], strides = [1, 1, 1, 1]} : vector<4x2x8x32xf32> to vector<1x2x8x32xf32>
    %164 = vector.shape_cast %163 : vector<1x2x8x32xf32> to vector<2x8x32xf32>
    %165 = arith.subf %164, %158 : vector<2x8x32xf32>
    %cst_72 = arith.constant 5.000000e-01 : f32
    %166 = vector.broadcast %cst_72 : f32 to vector<2x8x32xf32>
    %167 = arith.mulf %165, %166 : vector<2x8x32xf32>
    %168 = arith.addf %158, %167 : vector<2x8x32xf32>
    %cst_73 = arith.constant 1.000000e+00 : f32
    %169 = vector.broadcast %cst_73 : f32 to vector<2x8x32xf32>
    %170 = arith.cmpf oge, %168, %169 : vector<2x8x32xf32>
    %171 = arith.extui %170 : vector<2x8x32xi1> to vector<2x8x32xi32>
    %172 = arith.sitofp %171 : vector<2x8x32xi32> to vector<2x8x32xf32>
    %cst_74 = arith.constant 1.000000e+00 : f32
    %173 = vector.broadcast %cst_74 : f32 to vector<2x8x32xf32>
    %174 = arith.subf %173, %172 : vector<2x8x32xf32>
    %175 = arith.mulf %168, %174 : vector<2x8x32xf32>
    %176 = arith.truncf %172 : vector<2x8x32xf32> to vector<2x8x32xbf16>
    %c2_75 = arith.constant 2 : index
    %c0_76 = arith.constant 0 : index
    %c0_77 = arith.constant 0 : index
    %c0_78 = arith.constant 0 : index
    %177 = vector.load %arg11[%c2_75, %c0_76, %c0_77, %c0_78] : memref<4x2x8x32xbf16, #tpu.memory_space<vmem>>, vector<1x2x8x32xbf16>
    %178 = vector.shape_cast %177 : vector<1x2x8x32xbf16> to vector<2x8x32xbf16>
    %179 = vector.shape_cast %176 : vector<2x8x32xbf16> to vector<1x2x8x32xbf16>
    tpu.vector_store %arg11[%c2_75, %c0_76, %c0_77, %c0_78], %179 {strides = array<i32>} : memref<4x2x8x32xbf16, #tpu.memory_space<vmem>>, vector<1x2x8x32xbf16>,
    %180 = vector.extract_strided_slice %127 {offsets = [3, 0, 0, 0], sizes = [1, 2, 8, 32], strides = [1, 1, 1, 1]} : vector<4x2x8x32xf32> to vector<1x2x8x32xf32>
    %181 = vector.shape_cast %180 : vector<1x2x8x32xf32> to vector<2x8x32xf32>
    %182 = arith.subf %181, %175 : vector<2x8x32xf32>
    %cst_79 = arith.constant 5.000000e-01 : f32
    %183 = vector.broadcast %cst_79 : f32 to vector<2x8x32xf32>
    %184 = arith.mulf %182, %183 : vector<2x8x32xf32>
    %185 = arith.addf %175, %184 : vector<2x8x32xf32>
    %cst_80 = arith.constant 1.000000e+00 : f32
    %186 = vector.broadcast %cst_80 : f32 to vector<2x8x32xf32>
    %187 = arith.cmpf oge, %185, %186 : vector<2x8x32xf32>
    %188 = arith.extui %187 : vector<2x8x32xi1> to vector<2x8x32xi32>
    %189 = arith.sitofp %188 : vector<2x8x32xi32> to vector<2x8x32xf32>
    %190 = arith.truncf %189 : vector<2x8x32xf32> to vector<2x8x32xbf16>
    %c3_81 = arith.constant 3 : index
    %c0_82 = arith.constant 0 : index
    %c0_83 = arith.constant 0 : index
    %c0_84 = arith.constant 0 : index
    %191 = vector.load %arg11[%c3_81, %c0_82, %c0_83, %c0_84] : memref<4x2x8x32xbf16, #tpu.memory_space<vmem>>, vector<1x2x8x32xbf16>
    %192 = vector.shape_cast %191 : vector<1x2x8x32xbf16> to vector<2x8x32xbf16>
    %193 = vector.shape_cast %190 : vector<2x8x32xbf16> to vector<1x2x8x32xbf16>
    tpu.vector_store %arg11[%c3_81, %c0_82, %c0_83, %c0_84], %193 {strides = array<i32>} : memref<4x2x8x32xbf16, #tpu.memory_space<vmem>>, vector<1x2x8x32xbf16>,
    %c2_85 = arith.constant 2 : index
    %c0_86 = arith.constant 0 : index
    %c0_87 = arith.constant 0 : index
    %194 = vector.load %arg2[%c2_85, %c0_86, %c0_87] : memref<3x32x32xf32, #tpu.memory_space<vmem>>, vector<1x32x32xf32>
    %195 = vector.shape_cast %194 : vector<1x32x32xf32> to vector<32x32xf32>
    %cst_88 = arith.constant dense<0.000000e+00> : vector<64x32xf32>
    %196 = tpu.matmul %1, %195, %cst_88 {dimension_numbers = #tpu.dot_dimension_numbers<[1], [0], [0], [1], [0, 0, 1, 1], [], []>} : vector<64x32xf32>, vector<32x32xf32>, vector<64x32xf32> -> vector<64x32xf32>
    %c2_89 = arith.constant 2 : index
    %c0_90 = arith.constant 0 : index
    %c0_91 = arith.constant 0 : index
    %197 = vector.load %arg3[%c2_89, %c0_90, %c0_91] : memref<3x1x32xf32, #tpu.memory_space<vmem>>, vector<1x1x32xf32>
    %198 = vector.shape_cast %197 : vector<1x1x32xf32> to vector<1x32xf32>
    %c2_92 = arith.constant 2 : index
    %c0_93 = arith.constant 0 : index
    %c0_94 = arith.constant 0 : index
    %199 = vector.load %arg4[%c2_92, %c0_93, %c0_94] : memref<3x1x32xf32, #tpu.memory_space<vmem>>, vector<1x1x32xf32>
    %200 = vector.shape_cast %199 : vector<1x1x32xf32> to vector<1x32xf32>
    %cst_95 = arith.constant dense<0.000000e+00> : vector<64xf32>
    %201 = vector.multi_reduction <add>, %196, %cst_95 [1] : vector<64x32xf32> to vector<64xf32>
    %202 = vector.shape_cast %201 : vector<64xf32> to vector<64x1xf32>
    %cst_96 = arith.constant 3.200000e+01 : f32
    %203 = vector.broadcast %cst_96 : f32 to vector<64x1xf32>
    %204 = arith.divf %202, %203 : vector<64x1xf32>
    %205 = arith.mulf %196, %196 : vector<64x32xf32>
    %cst_97 = arith.constant dense<0.000000e+00> : vector<64xf32>
    %206 = vector.multi_reduction <add>, %205, %cst_97 [1] : vector<64x32xf32> to vector<64xf32>
    %207 = vector.shape_cast %206 : vector<64xf32> to vector<64x1xf32>
    %cst_98 = arith.constant 3.200000e+01 : f32
    %208 = vector.broadcast %cst_98 : f32 to vector<64x1xf32>
    %209 = arith.divf %207, %208 : vector<64x1xf32>
    %210 = arith.mulf %204, %204 : vector<64x1xf32>
    %211 = arith.subf %209, %210 : vector<64x1xf32>
    %212 = vector.broadcast %204 : vector<64x1xf32> to vector<64x32xf32>
    %213 = arith.subf %196, %212 : vector<64x32xf32>
    %cst_99 = arith.constant 9.99999974E-6 : f32
    %214 = vector.broadcast %cst_99 : f32 to vector<64x1xf32>
    %215 = arith.addf %211, %214 : vector<64x1xf32>
    %216 = math.rsqrt %215 : vector<64x1xf32>
    %217 = vector.broadcast %216 : vector<64x1xf32> to vector<64x32xf32>
    %218 = arith.mulf %213, %217 : vector<64x32xf32>
    %219 = vector.broadcast %198 : vector<1x32xf32> to vector<64x32xf32>
    %220 = arith.mulf %218, %219 : vector<64x32xf32>
    %221 = vector.broadcast %200 : vector<1x32xf32> to vector<64x32xf32>
    %222 = arith.addf %220, %221 : vector<64x32xf32>
    %223 = vector.shape_cast %222 : vector<64x32xf32> to vector<4x2x8x32xf32>
    %cst_100 = arith.constant 0.000000e+00 : f32
    %224 = vector.broadcast %cst_100 : f32 to vector<2x8x32xf32>
    %225 = vector.extract_strided_slice %223 {offsets = [0, 0, 0, 0], sizes = [1, 2, 8, 32], strides = [1, 1, 1, 1]} : vector<4x2x8x32xf32> to vector<1x2x8x32xf32>
    %226 = vector.shape_cast %225 : vector<1x2x8x32xf32> to vector<2x8x32xf32>
    %227 = arith.subf %226, %224 : vector<2x8x32xf32>
    %cst_101 = arith.constant 5.000000e-01 : f32
    %228 = vector.broadcast %cst_101 : f32 to vector<2x8x32xf32>
    %229 = arith.mulf %227, %228 : vector<2x8x32xf32>
    %230 = arith.addf %224, %229 : vector<2x8x32xf32>
    %cst_102 = arith.constant 1.000000e+00 : f32
    %231 = vector.broadcast %cst_102 : f32 to vector<2x8x32xf32>
    %232 = arith.cmpf oge, %230, %231 : vector<2x8x32xf32>
    %233 = arith.extui %232 : vector<2x8x32xi1> to vector<2x8x32xi32>
    %234 = arith.sitofp %233 : vector<2x8x32xi32> to vector<2x8x32xf32>
    %cst_103 = arith.constant 1.000000e+00 : f32
    %235 = vector.broadcast %cst_103 : f32 to vector<2x8x32xf32>
    %236 = arith.subf %235, %234 : vector<2x8x32xf32>
    %237 = arith.mulf %230, %236 : vector<2x8x32xf32>
    %238 = arith.truncf %234 : vector<2x8x32xf32> to vector<2x8x32xbf16>
    %c0_104 = arith.constant 0 : index
    %c0_105 = arith.constant 0 : index
    %c0_106 = arith.constant 0 : index
    %c0_107 = arith.constant 0 : index
    %239 = vector.load %arg12[%c0_104, %c0_105, %c0_106, %c0_107] : memref<4x2x8x32xbf16, #tpu.memory_space<vmem>>, vector<1x2x8x32xbf16>
    %240 = vector.shape_cast %239 : vector<1x2x8x32xbf16> to vector<2x8x32xbf16>
    %241 = vector.shape_cast %238 : vector<2x8x32xbf16> to vector<1x2x8x32xbf16>
    tpu.vector_store %arg12[%c0_104, %c0_105, %c0_106, %c0_107], %241 {strides = array<i32>} : memref<4x2x8x32xbf16, #tpu.memory_space<vmem>>, vector<1x2x8x32xbf16>,
    %242 = vector.extract_strided_slice %223 {offsets = [1, 0, 0, 0], sizes = [1, 2, 8, 32], strides = [1, 1, 1, 1]} : vector<4x2x8x32xf32> to vector<1x2x8x32xf32>
    %243 = vector.shape_cast %242 : vector<1x2x8x32xf32> to vector<2x8x32xf32>
    %244 = arith.subf %243, %237 : vector<2x8x32xf32>
    %cst_108 = arith.constant 5.000000e-01 : f32
    %245 = vector.broadcast %cst_108 : f32 to vector<2x8x32xf32>
    %246 = arith.mulf %244, %245 : vector<2x8x32xf32>
    %247 = arith.addf %237, %246 : vector<2x8x32xf32>
    %cst_109 = arith.constant 1.000000e+00 : f32
    %248 = vector.broadcast %cst_109 : f32 to vector<2x8x32xf32>
    %249 = arith.cmpf oge, %247, %248 : vector<2x8x32xf32>
    %250 = arith.extui %249 : vector<2x8x32xi1> to vector<2x8x32xi32>
    %251 = arith.sitofp %250 : vector<2x8x32xi32> to vector<2x8x32xf32>
    %cst_110 = arith.constant 1.000000e+00 : f32
    %252 = vector.broadcast %cst_110 : f32 to vector<2x8x32xf32>
    %253 = arith.subf %252, %251 : vector<2x8x32xf32>
    %254 = arith.mulf %247, %253 : vector<2x8x32xf32>
    %255 = arith.truncf %251 : vector<2x8x32xf32> to vector<2x8x32xbf16>
    %c1_111 = arith.constant 1 : index
    %c0_112 = arith.constant 0 : index
    %c0_113 = arith.constant 0 : index
    %c0_114 = arith.constant 0 : index
    %256 = vector.load %arg12[%c1_111, %c0_112, %c0_113, %c0_114] : memref<4x2x8x32xbf16, #tpu.memory_space<vmem>>, vector<1x2x8x32xbf16>
    %257 = vector.shape_cast %256 : vector<1x2x8x32xbf16> to vector<2x8x32xbf16>
    %258 = vector.shape_cast %255 : vector<2x8x32xbf16> to vector<1x2x8x32xbf16>
    tpu.vector_store %arg12[%c1_111, %c0_112, %c0_113, %c0_114], %258 {strides = array<i32>} : memref<4x2x8x32xbf16, #tpu.memory_space<vmem>>, vector<1x2x8x32xbf16>,
    %259 = vector.extract_strided_slice %223 {offsets = [2, 0, 0, 0], sizes = [1, 2, 8, 32], strides = [1, 1, 1, 1]} : vector<4x2x8x32xf32> to vector<1x2x8x32xf32>
    %260 = vector.shape_cast %259 : vector<1x2x8x32xf32> to vector<2x8x32xf32>
    %261 = arith.subf %260, %254 : vector<2x8x32xf32>
    %cst_115 = arith.constant 5.000000e-01 : f32
    %262 = vector.broadcast %cst_115 : f32 to vector<2x8x32xf32>
    %263 = arith.mulf %261, %262 : vector<2x8x32xf32>
    %264 = arith.addf %254, %263 : vector<2x8x32xf32>
    %cst_116 = arith.constant 1.000000e+00 : f32
    %265 = vector.broadcast %cst_116 : f32 to vector<2x8x32xf32>
    %266 = arith.cmpf oge, %264, %265 : vector<2x8x32xf32>
    %267 = arith.extui %266 : vector<2x8x32xi1> to vector<2x8x32xi32>
    %268 = arith.sitofp %267 : vector<2x8x32xi32> to vector<2x8x32xf32>
    %cst_117 = arith.constant 1.000000e+00 : f32
    %269 = vector.broadcast %cst_117 : f32 to vector<2x8x32xf32>
    %270 = arith.subf %269, %268 : vector<2x8x32xf32>
    %271 = arith.mulf %264, %270 : vector<2x8x32xf32>
    %272 = arith.truncf %268 : vector<2x8x32xf32> to vector<2x8x32xbf16>
    %c2_118 = arith.constant 2 : index
    %c0_119 = arith.constant 0 : index
    %c0_120 = arith.constant 0 : index
    %c0_121 = arith.constant 0 : index
    %273 = vector.load %arg12[%c2_118, %c0_119, %c0_120, %c0_121] : memref<4x2x8x32xbf16, #tpu.memory_space<vmem>>, vector<1x2x8x32xbf16>
    %274 = vector.shape_cast %273 : vector<1x2x8x32xbf16> to vector<2x8x32xbf16>
    %275 = vector.shape_cast %272 : vector<2x8x32xbf16> to vector<1x2x8x32xbf16>
    tpu.vector_store %arg12[%c2_118, %c0_119, %c0_120, %c0_121], %275 {strides = array<i32>} : memref<4x2x8x32xbf16, #tpu.memory_space<vmem>>, vector<1x2x8x32xbf16>,
    %276 = vector.extract_strided_slice %223 {offsets = [3, 0, 0, 0], sizes = [1, 2, 8, 32], strides = [1, 1, 1, 1]} : vector<4x2x8x32xf32> to vector<1x2x8x32xf32>
    %277 = vector.shape_cast %276 : vector<1x2x8x32xf32> to vector<2x8x32xf32>
    %278 = arith.subf %277, %271 : vector<2x8x32xf32>
    %cst_122 = arith.constant 5.000000e-01 : f32
    %279 = vector.broadcast %cst_122 : f32 to vector<2x8x32xf32>
    %280 = arith.mulf %278, %279 : vector<2x8x32xf32>
    %281 = arith.addf %271, %280 : vector<2x8x32xf32>
    %cst_123 = arith.constant 1.000000e+00 : f32
    %282 = vector.broadcast %cst_123 : f32 to vector<2x8x32xf32>
    %283 = arith.cmpf oge, %281, %282 : vector<2x8x32xf32>
    %284 = arith.extui %283 : vector<2x8x32xi1> to vector<2x8x32xi32>
    %285 = arith.sitofp %284 : vector<2x8x32xi32> to vector<2x8x32xf32>
    %286 = arith.truncf %285 : vector<2x8x32xf32> to vector<2x8x32xbf16>
    %c3_124 = arith.constant 3 : index
    %c0_125 = arith.constant 0 : index
    %c0_126 = arith.constant 0 : index
    %c0_127 = arith.constant 0 : index
    %287 = vector.load %arg12[%c3_124, %c0_125, %c0_126, %c0_127] : memref<4x2x8x32xbf16, #tpu.memory_space<vmem>>, vector<1x2x8x32xbf16>
    %288 = vector.shape_cast %287 : vector<1x2x8x32xbf16> to vector<2x8x32xbf16>
    %289 = vector.shape_cast %286 : vector<2x8x32xbf16> to vector<1x2x8x32xbf16>
    tpu.vector_store %arg12[%c3_124, %c0_125, %c0_126, %c0_127], %289 {strides = array<i32>} : memref<4x2x8x32xbf16, #tpu.memory_space<vmem>>, vector<1x2x8x32xbf16>,
    %c0_128 = arith.constant 0 : index
    %c0_129 = arith.constant 0 : index
    %c0_130 = arith.constant 0 : index
    %c0_131 = arith.constant 0 : index
    %290 = vector.load %arg10[%c0_128, %c0_129, %c0_130, %c0_131] : memref<4x2x8x32xbf16, #tpu.memory_space<vmem>>, vector<4x2x8x32xbf16>
    %291 = vector.shape_cast %290 : vector<4x2x8x32xbf16> to vector<8x8x32xbf16>
    %c0_132 = arith.constant 0 : index
    %c0_133 = arith.constant 0 : index
    %c0_134 = arith.constant 0 : index
    %c0_135 = arith.constant 0 : index
    %292 = vector.load %arg11[%c0_132, %c0_133, %c0_134, %c0_135] : memref<4x2x8x32xbf16, #tpu.memory_space<vmem>>, vector<4x2x8x32xbf16>
    %293 = vector.shape_cast %292 : vector<4x2x8x32xbf16> to vector<8x8x32xbf16>
    %c0_136 = arith.constant 0 : index
    %c0_137 = arith.constant 0 : index
    %c0_138 = arith.constant 0 : index
    %c0_139 = arith.constant 0 : index
    %294 = vector.load %arg12[%c0_136, %c0_137, %c0_138, %c0_139] : memref<4x2x8x32xbf16, #tpu.memory_space<vmem>>, vector<4x2x8x32xbf16>
    %295 = vector.shape_cast %294 : vector<4x2x8x32xbf16> to vector<8x8x32xbf16>
    %296 = vector.extract_strided_slice %291 {offsets = [0, 0, 0], sizes = [8, 8, 16], strides = [1, 1, 1]} : vector<8x8x32xbf16> to vector<8x8x16xbf16>
    %297 = vector.extract_strided_slice %293 {offsets = [0, 0, 0], sizes = [8, 8, 16], strides = [1, 1, 1]} : vector<8x8x32xbf16> to vector<8x8x16xbf16>
    %298 = vector.extract_strided_slice %295 {offsets = [0, 0, 0], sizes = [8, 8, 16], strides = [1, 1, 1]} : vector<8x8x32xbf16> to vector<8x8x16xbf16>
    %cst_140 = arith.constant dense<0.000000e+00> : vector<8x8x8xf32>
    %299 = tpu.matmul %296, %297, %cst_140 {dimension_numbers = #tpu.dot_dimension_numbers<[2], [2], [1], [1], [0, 0, 0, 1, 1, 1], [0], [0]>} : vector<8x8x16xbf16>, vector<8x8x16xbf16>, vector<8x8x8xf32> -> vector<8x8x8xf32>
    %300 = arith.truncf %299 : vector<8x8x8xf32> to vector<8x8x8xbf16>
    %cst_141 = arith.constant dense<0.000000e+00> : vector<8x8x16xf32>
    %301 = tpu.matmul %300, %298, %cst_141 {dimension_numbers = #tpu.dot_dimension_numbers<[2], [1], [1], [2], [0, 0, 0, 1, 1, 2], [0], [0]>} : vector<8x8x8xbf16>, vector<8x8x16xbf16>, vector<8x8x16xf32> -> vector<8x8x16xf32>
    %302 = vector.extract_strided_slice %291 {offsets = [0, 0, 16], sizes = [8, 8, 16], strides = [1, 1, 1]} : vector<8x8x32xbf16> to vector<8x8x16xbf16>
    %303 = vector.extract_strided_slice %293 {offsets = [0, 0, 16], sizes = [8, 8, 16], strides = [1, 1, 1]} : vector<8x8x32xbf16> to vector<8x8x16xbf16>
    %304 = vector.extract_strided_slice %295 {offsets = [0, 0, 16], sizes = [8, 8, 16], strides = [1, 1, 1]} : vector<8x8x32xbf16> to vector<8x8x16xbf16>
    %cst_142 = arith.constant dense<0.000000e+00> : vector<8x8x8xf32>
    %305 = tpu.matmul %302, %303, %cst_142 {dimension_numbers = #tpu.dot_dimension_numbers<[2], [2], [1], [1], [0, 0, 0, 1, 1, 1], [0], [0]>} : vector<8x8x16xbf16>, vector<8x8x16xbf16>, vector<8x8x8xf32> -> vector<8x8x8xf32>
    %306 = arith.truncf %305 : vector<8x8x8xf32> to vector<8x8x8xbf16>
    %cst_143 = arith.constant dense<0.000000e+00> : vector<8x8x16xf32>
    %307 = tpu.matmul %306, %304, %cst_143 {dimension_numbers = #tpu.dot_dimension_numbers<[2], [1], [1], [2], [0, 0, 0, 1, 1, 2], [0], [0]>} : vector<8x8x8xbf16>, vector<8x8x16xbf16>, vector<8x8x16xf32> -> vector<8x8x16xf32>
    %308 = tpu.concatenate %301, %307 in 2 : vector<8x8x16xf32>, vector<8x8x16xf32> -> vector<8x8x32xf32>
    %cst_144 = arith.constant 1.250000e-01 : f32
    %309 = vector.broadcast %cst_144 : f32 to vector<8x8x32xf32>
    %310 = arith.mulf %308, %309 : vector<8x8x32xf32>
    %311 = vector.shape_cast %310 : vector<8x8x32xf32> to vector<4x2x8x32xf32>
    %cst_145 = arith.constant 0.000000e+00 : f32
    %312 = vector.broadcast %cst_145 : f32 to vector<2x8x32xf32>
    %313 = vector.extract_strided_slice %311 {offsets = [0, 0, 0, 0], sizes = [1, 2, 8, 32], strides = [1, 1, 1, 1]} : vector<4x2x8x32xf32> to vector<1x2x8x32xf32>
    %314 = vector.shape_cast %313 : vector<1x2x8x32xf32> to vector<2x8x32xf32>
    %315 = arith.subf %314, %312 : vector<2x8x32xf32>
    %cst_146 = arith.constant 5.000000e-01 : f32
    %316 = vector.broadcast %cst_146 : f32 to vector<2x8x32xf32>
    %317 = arith.mulf %315, %316 : vector<2x8x32xf32>
    %318 = arith.addf %312, %317 : vector<2x8x32xf32>
    %cst_147 = arith.constant 5.000000e-01 : f32
    %319 = vector.broadcast %cst_147 : f32 to vector<2x8x32xf32>
    %320 = arith.cmpf oge, %318, %319 : vector<2x8x32xf32>
    %321 = arith.extui %320 : vector<2x8x32xi1> to vector<2x8x32xi32>
    %322 = arith.sitofp %321 : vector<2x8x32xi32> to vector<2x8x32xf32>
    %cst_148 = arith.constant 1.000000e+00 : f32
    %323 = vector.broadcast %cst_148 : f32 to vector<2x8x32xf32>
    %324 = arith.subf %323, %322 : vector<2x8x32xf32>
    %325 = arith.mulf %318, %324 : vector<2x8x32xf32>
    %326 = arith.truncf %322 : vector<2x8x32xf32> to vector<2x8x32xbf16>
    %c0_149 = arith.constant 0 : index
    %c0_150 = arith.constant 0 : index
    %c0_151 = arith.constant 0 : index
    %c0_152 = arith.constant 0 : index
    %327 = vector.load %arg13[%c0_149, %c0_150, %c0_151, %c0_152] : memref<4x2x8x32xbf16, #tpu.memory_space<vmem>>, vector<1x2x8x32xbf16>
    %328 = vector.shape_cast %327 : vector<1x2x8x32xbf16> to vector<2x8x32xbf16>
    %329 = vector.shape_cast %326 : vector<2x8x32xbf16> to vector<1x2x8x32xbf16>
    tpu.vector_store %arg13[%c0_149, %c0_150, %c0_151, %c0_152], %329 {strides = array<i32>} : memref<4x2x8x32xbf16, #tpu.memory_space<vmem>>, vector<1x2x8x32xbf16>,
    %330 = vector.extract_strided_slice %311 {offsets = [1, 0, 0, 0], sizes = [1, 2, 8, 32], strides = [1, 1, 1, 1]} : vector<4x2x8x32xf32> to vector<1x2x8x32xf32>
    %331 = vector.shape_cast %330 : vector<1x2x8x32xf32> to vector<2x8x32xf32>
    %332 = arith.subf %331, %325 : vector<2x8x32xf32>
    %cst_153 = arith.constant 5.000000e-01 : f32
    %333 = vector.broadcast %cst_153 : f32 to vector<2x8x32xf32>
    %334 = arith.mulf %332, %333 : vector<2x8x32xf32>
    %335 = arith.addf %325, %334 : vector<2x8x32xf32>
    %cst_154 = arith.constant 5.000000e-01 : f32
    %336 = vector.broadcast %cst_154 : f32 to vector<2x8x32xf32>
    %337 = arith.cmpf oge, %335, %336 : vector<2x8x32xf32>
    %338 = arith.extui %337 : vector<2x8x32xi1> to vector<2x8x32xi32>
    %339 = arith.sitofp %338 : vector<2x8x32xi32> to vector<2x8x32xf32>
    %cst_155 = arith.constant 1.000000e+00 : f32
    %340 = vector.broadcast %cst_155 : f32 to vector<2x8x32xf32>
    %341 = arith.subf %340, %339 : vector<2x8x32xf32>
    %342 = arith.mulf %335, %341 : vector<2x8x32xf32>
    %343 = arith.truncf %339 : vector<2x8x32xf32> to vector<2x8x32xbf16>
    %c1_156 = arith.constant 1 : index
    %c0_157 = arith.constant 0 : index
    %c0_158 = arith.constant 0 : index
    %c0_159 = arith.constant 0 : index
    %344 = vector.load %arg13[%c1_156, %c0_157, %c0_158, %c0_159] : memref<4x2x8x32xbf16, #tpu.memory_space<vmem>>, vector<1x2x8x32xbf16>
    %345 = vector.shape_cast %344 : vector<1x2x8x32xbf16> to vector<2x8x32xbf16>
    %346 = vector.shape_cast %343 : vector<2x8x32xbf16> to vector<1x2x8x32xbf16>
    tpu.vector_store %arg13[%c1_156, %c0_157, %c0_158, %c0_159], %346 {strides = array<i32>} : memref<4x2x8x32xbf16, #tpu.memory_space<vmem>>, vector<1x2x8x32xbf16>,
    %347 = vector.extract_strided_slice %311 {offsets = [2, 0, 0, 0], sizes = [1, 2, 8, 32], strides = [1, 1, 1, 1]} : vector<4x2x8x32xf32> to vector<1x2x8x32xf32>
    %348 = vector.shape_cast %347 : vector<1x2x8x32xf32> to vector<2x8x32xf32>
    %349 = arith.subf %348, %342 : vector<2x8x32xf32>
    %cst_160 = arith.constant 5.000000e-01 : f32
    %350 = vector.broadcast %cst_160 : f32 to vector<2x8x32xf32>
    %351 = arith.mulf %349, %350 : vector<2x8x32xf32>
    %352 = arith.addf %342, %351 : vector<2x8x32xf32>
    %cst_161 = arith.constant 5.000000e-01 : f32
    %353 = vector.broadcast %cst_161 : f32 to vector<2x8x32xf32>
    %354 = arith.cmpf oge, %352, %353 : vector<2x8x32xf32>
    %355 = arith.extui %354 : vector<2x8x32xi1> to vector<2x8x32xi32>
    %356 = arith.sitofp %355 : vector<2x8x32xi32> to vector<2x8x32xf32>
    %cst_162 = arith.constant 1.000000e+00 : f32
    %357 = vector.broadcast %cst_162 : f32 to vector<2x8x32xf32>
    %358 = arith.subf %357, %356 : vector<2x8x32xf32>
    %359 = arith.mulf %352, %358 : vector<2x8x32xf32>
    %360 = arith.truncf %356 : vector<2x8x32xf32> to vector<2x8x32xbf16>
    %c2_163 = arith.constant 2 : index
    %c0_164 = arith.constant 0 : index
    %c0_165 = arith.constant 0 : index
    %c0_166 = arith.constant 0 : index
    %361 = vector.load %arg13[%c2_163, %c0_164, %c0_165, %c0_166] : memref<4x2x8x32xbf16, #tpu.memory_space<vmem>>, vector<1x2x8x32xbf16>
    %362 = vector.shape_cast %361 : vector<1x2x8x32xbf16> to vector<2x8x32xbf16>
    %363 = vector.shape_cast %360 : vector<2x8x32xbf16> to vector<1x2x8x32xbf16>
    tpu.vector_store %arg13[%c2_163, %c0_164, %c0_165, %c0_166], %363 {strides = array<i32>} : memref<4x2x8x32xbf16, #tpu.memory_space<vmem>>, vector<1x2x8x32xbf16>,
    %364 = vector.extract_strided_slice %311 {offsets = [3, 0, 0, 0], sizes = [1, 2, 8, 32], strides = [1, 1, 1, 1]} : vector<4x2x8x32xf32> to vector<1x2x8x32xf32>
    %365 = vector.shape_cast %364 : vector<1x2x8x32xf32> to vector<2x8x32xf32>
    %366 = arith.subf %365, %359 : vector<2x8x32xf32>
    %cst_167 = arith.constant 5.000000e-01 : f32
    %367 = vector.broadcast %cst_167 : f32 to vector<2x8x32xf32>
    %368 = arith.mulf %366, %367 : vector<2x8x32xf32>
    %369 = arith.addf %359, %368 : vector<2x8x32xf32>
    %cst_168 = arith.constant 5.000000e-01 : f32
    %370 = vector.broadcast %cst_168 : f32 to vector<2x8x32xf32>
    %371 = arith.cmpf oge, %369, %370 : vector<2x8x32xf32>
    %372 = arith.extui %371 : vector<2x8x32xi1> to vector<2x8x32xi32>
    %373 = arith.sitofp %372 : vector<2x8x32xi32> to vector<2x8x32xf32>
    %374 = arith.truncf %373 : vector<2x8x32xf32> to vector<2x8x32xbf16>
    %c3_169 = arith.constant 3 : index
    %c0_170 = arith.constant 0 : index
    %c0_171 = arith.constant 0 : index
    %c0_172 = arith.constant 0 : index
    %375 = vector.load %arg13[%c3_169, %c0_170, %c0_171, %c0_172] : memref<4x2x8x32xbf16, #tpu.memory_space<vmem>>, vector<1x2x8x32xbf16>
    %376 = vector.shape_cast %375 : vector<1x2x8x32xbf16> to vector<2x8x32xbf16>
    %377 = vector.shape_cast %374 : vector<2x8x32xbf16> to vector<1x2x8x32xbf16>
    tpu.vector_store %arg13[%c3_169, %c0_170, %c0_171, %c0_172], %377 {strides = array<i32>} : memref<4x2x8x32xbf16, #tpu.memory_space<vmem>>, vector<1x2x8x32xbf16>,
    %c0_173 = arith.constant 0 : index
    %c0_174 = arith.constant 0 : index
    %c0_175 = arith.constant 0 : index
    %c0_176 = arith.constant 0 : index
    %378 = vector.load %arg13[%c0_173, %c0_174, %c0_175, %c0_176] : memref<4x2x8x32xbf16, #tpu.memory_space<vmem>>, vector<4x2x8x32xbf16>
    %379 = arith.extf %378 : vector<4x2x8x32xbf16> to vector<4x2x8x32xf32>
    %380 = vector.shape_cast %379 : vector<4x2x8x32xf32> to vector<64x32xf32>
    %c0_177 = arith.constant 0 : index
    %c0_178 = arith.constant 0 : index
    %381 = vector.load %arg5[%c0_177, %c0_178] : memref<32x32xf32, #tpu.memory_space<vmem>>, vector<32x32xf32>
    %cst_179 = arith.constant dense<0.000000e+00> : vector<64x32xf32>
    %382 = tpu.matmul %380, %381, %cst_179 {dimension_numbers = #tpu.dot_dimension_numbers<[1], [0], [0], [1], [0, 0, 1, 1], [], []>} : vector<64x32xf32>, vector<32x32xf32>, vector<64x32xf32> -> vector<64x32xf32>
    %c0_180 = arith.constant 0 : index
    %c0_181 = arith.constant 0 : index
    %383 = vector.load %arg6[%c0_180, %c0_181] : memref<1x32xf32, #tpu.memory_space<vmem>>, vector<1x32xf32>
    %384 = vector.broadcast %383 : vector<1x32xf32> to vector<64x32xf32>
    %385 = arith.addf %382, %384 : vector<64x32xf32>
    %c0_182 = arith.constant 0 : index
    %c0_183 = arith.constant 0 : index
    %386 = vector.load %arg7[%c0_182, %c0_183] : memref<1x32xf32, #tpu.memory_space<vmem>>, vector<1x32xf32>
    %c0_184 = arith.constant 0 : index
    %c0_185 = arith.constant 0 : index
    %387 = vector.load %arg8[%c0_184, %c0_185] : memref<1x32xf32, #tpu.memory_space<vmem>>, vector<1x32xf32>
    %cst_186 = arith.constant dense<0.000000e+00> : vector<64xf32>
    %388 = vector.multi_reduction <add>, %385, %cst_186 [1] : vector<64x32xf32> to vector<64xf32>
    %389 = vector.shape_cast %388 : vector<64xf32> to vector<64x1xf32>
    %cst_187 = arith.constant 3.200000e+01 : f32
    %390 = vector.broadcast %cst_187 : f32 to vector<64x1xf32>
    %391 = arith.divf %389, %390 : vector<64x1xf32>
    %392 = arith.mulf %385, %385 : vector<64x32xf32>
    %cst_188 = arith.constant dense<0.000000e+00> : vector<64xf32>
    %393 = vector.multi_reduction <add>, %392, %cst_188 [1] : vector<64x32xf32> to vector<64xf32>
    %394 = vector.shape_cast %393 : vector<64xf32> to vector<64x1xf32>
    %cst_189 = arith.constant 3.200000e+01 : f32
    %395 = vector.broadcast %cst_189 : f32 to vector<64x1xf32>
    %396 = arith.divf %394, %395 : vector<64x1xf32>
    %397 = arith.mulf %391, %391 : vector<64x1xf32>
    %398 = arith.subf %396, %397 : vector<64x1xf32>
    %399 = vector.broadcast %391 : vector<64x1xf32> to vector<64x32xf32>
    %400 = arith.subf %385, %399 : vector<64x32xf32>
    %cst_190 = arith.constant 9.99999974E-6 : f32
    %401 = vector.broadcast %cst_190 : f32 to vector<64x1xf32>
    %402 = arith.addf %398, %401 : vector<64x1xf32>
    %403 = math.rsqrt %402 : vector<64x1xf32>
    %404 = vector.broadcast %403 : vector<64x1xf32> to vector<64x32xf32>
    %405 = arith.mulf %400, %404 : vector<64x32xf32>
    %406 = vector.broadcast %386 : vector<1x32xf32> to vector<64x32xf32>
    %407 = arith.mulf %405, %406 : vector<64x32xf32>
    %408 = vector.broadcast %387 : vector<1x32xf32> to vector<64x32xf32>
    %409 = arith.addf %407, %408 : vector<64x32xf32>
    %410 = vector.shape_cast %409 : vector<64x32xf32> to vector<4x2x8x32xf32>
    %cst_191 = arith.constant 0.000000e+00 : f32
    %411 = vector.broadcast %cst_191 : f32 to vector<2x8x32xf32>
    %412 = vector.extract_strided_slice %410 {offsets = [0, 0, 0, 0], sizes = [1, 2, 8, 32], strides = [1, 1, 1, 1]} : vector<4x2x8x32xf32> to vector<1x2x8x32xf32>
    %413 = vector.shape_cast %412 : vector<1x2x8x32xf32> to vector<2x8x32xf32>
    %414 = arith.subf %413, %411 : vector<2x8x32xf32>
    %cst_192 = arith.constant 5.000000e-01 : f32
    %415 = vector.broadcast %cst_192 : f32 to vector<2x8x32xf32>
    %416 = arith.mulf %414, %415 : vector<2x8x32xf32>
    %417 = arith.addf %411, %416 : vector<2x8x32xf32>
    %cst_193 = arith.constant 1.000000e+00 : f32
    %418 = vector.broadcast %cst_193 : f32 to vector<2x8x32xf32>
    %419 = arith.cmpf oge, %417, %418 : vector<2x8x32xf32>
    %420 = arith.extui %419 : vector<2x8x32xi1> to vector<2x8x32xi32>
    %421 = arith.sitofp %420 : vector<2x8x32xi32> to vector<2x8x32xf32>
    %cst_194 = arith.constant 1.000000e+00 : f32
    %422 = vector.broadcast %cst_194 : f32 to vector<2x8x32xf32>
    %423 = arith.subf %422, %421 : vector<2x8x32xf32>
    %424 = arith.mulf %417, %423 : vector<2x8x32xf32>
    %425 = vector.extract_strided_slice %0 {offsets = [0, 0, 0, 0], sizes = [1, 2, 8, 32], strides = [1, 1, 1, 1]} : vector<4x2x8x32xf32> to vector<1x2x8x32xf32>
    %426 = vector.shape_cast %425 : vector<1x2x8x32xf32> to vector<2x8x32xf32>
    %427 = arith.addf %421, %426 : vector<2x8x32xf32>
    %c0_195 = arith.constant 0 : index
    %c0_196 = arith.constant 0 : index
    %c0_197 = arith.constant 0 : index
    %c0_198 = arith.constant 0 : index
    %428 = vector.load %arg9[%c0_195, %c0_196, %c0_197, %c0_198] : memref<4x2x8x32xf32, #tpu.memory_space<vmem>>, vector<1x2x8x32xf32>
    %429 = vector.shape_cast %428 : vector<1x2x8x32xf32> to vector<2x8x32xf32>
    %430 = vector.shape_cast %427 : vector<2x8x32xf32> to vector<1x2x8x32xf32>
    tpu.vector_store %arg9[%c0_195, %c0_196, %c0_197, %c0_198], %430 {strides = array<i32>} : memref<4x2x8x32xf32, #tpu.memory_space<vmem>>, vector<1x2x8x32xf32>,
    %431 = vector.extract_strided_slice %410 {offsets = [1, 0, 0, 0], sizes = [1, 2, 8, 32], strides = [1, 1, 1, 1]} : vector<4x2x8x32xf32> to vector<1x2x8x32xf32>
    %432 = vector.shape_cast %431 : vector<1x2x8x32xf32> to vector<2x8x32xf32>
    %433 = arith.subf %432, %424 : vector<2x8x32xf32>
    %cst_199 = arith.constant 5.000000e-01 : f32
    %434 = vector.broadcast %cst_199 : f32 to vector<2x8x32xf32>
    %435 = arith.mulf %433, %434 : vector<2x8x32xf32>
    %436 = arith.addf %424, %435 : vector<2x8x32xf32>
    %cst_200 = arith.constant 1.000000e+00 : f32
    %437 = vector.broadcast %cst_200 : f32 to vector<2x8x32xf32>
    %438 = arith.cmpf oge, %436, %437 : vector<2x8x32xf32>
    %439 = arith.extui %438 : vector<2x8x32xi1> to vector<2x8x32xi32>
    %440 = arith.sitofp %439 : vector<2x8x32xi32> to vector<2x8x32xf32>
    %cst_201 = arith.constant 1.000000e+00 : f32
    %441 = vector.broadcast %cst_201 : f32 to vector<2x8x32xf32>
    %442 = arith.subf %441, %440 : vector<2x8x32xf32>
    %443 = arith.mulf %436, %442 : vector<2x8x32xf32>
    %444 = vector.extract_strided_slice %0 {offsets = [1, 0, 0, 0], sizes = [1, 2, 8, 32], strides = [1, 1, 1, 1]} : vector<4x2x8x32xf32> to vector<1x2x8x32xf32>
    %445 = vector.shape_cast %444 : vector<1x2x8x32xf32> to vector<2x8x32xf32>
    %446 = arith.addf %440, %445 : vector<2x8x32xf32>
    %c1_202 = arith.constant 1 : index
    %c0_203 = arith.constant 0 : index
    %c0_204 = arith.constant 0 : index
    %c0_205 = arith.constant 0 : index
    %447 = vector.load %arg9[%c1_202, %c0_203, %c0_204, %c0_205] : memref<4x2x8x32xf32, #tpu.memory_space<vmem>>, vector<1x2x8x32xf32>
    %448 = vector.shape_cast %447 : vector<1x2x8x32xf32> to vector<2x8x32xf32>
    %449 = vector.shape_cast %446 : vector<2x8x32xf32> to vector<1x2x8x32xf32>
    tpu.vector_store %arg9[%c1_202, %c0_203, %c0_204, %c0_205], %449 {strides = array<i32>} : memref<4x2x8x32xf32, #tpu.memory_space<vmem>>, vector<1x2x8x32xf32>,
    %450 = vector.extract_strided_slice %410 {offsets = [2, 0, 0, 0], sizes = [1, 2, 8, 32], strides = [1, 1, 1, 1]} : vector<4x2x8x32xf32> to vector<1x2x8x32xf32>
    %451 = vector.shape_cast %450 : vector<1x2x8x32xf32> to vector<2x8x32xf32>
    %452 = arith.subf %451, %443 : vector<2x8x32xf32>
    %cst_206 = arith.constant 5.000000e-01 : f32
    %453 = vector.broadcast %cst_206 : f32 to vector<2x8x32xf32>
    %454 = arith.mulf %452, %453 : vector<2x8x32xf32>
    %455 = arith.addf %443, %454 : vector<2x8x32xf32>
    %cst_207 = arith.constant 1.000000e+00 : f32
    %456 = vector.broadcast %cst_207 : f32 to vector<2x8x32xf32>
    %457 = arith.cmpf oge, %455, %456 : vector<2x8x32xf32>
    %458 = arith.extui %457 : vector<2x8x32xi1> to vector<2x8x32xi32>
    %459 = arith.sitofp %458 : vector<2x8x32xi32> to vector<2x8x32xf32>
    %cst_208 = arith.constant 1.000000e+00 : f32
    %460 = vector.broadcast %cst_208 : f32 to vector<2x8x32xf32>
    %461 = arith.subf %460, %459 : vector<2x8x32xf32>
    %462 = arith.mulf %455, %461 : vector<2x8x32xf32>
    %463 = vector.extract_strided_slice %0 {offsets = [2, 0, 0, 0], sizes = [1, 2, 8, 32], strides = [1, 1, 1, 1]} : vector<4x2x8x32xf32> to vector<1x2x8x32xf32>
    %464 = vector.shape_cast %463 : vector<1x2x8x32xf32> to vector<2x8x32xf32>
    %465 = arith.addf %459, %464 : vector<2x8x32xf32>
    %c2_209 = arith.constant 2 : index
    %c0_210 = arith.constant 0 : index
    %c0_211 = arith.constant 0 : index
    %c0_212 = arith.constant 0 : index
    %466 = vector.load %arg9[%c2_209, %c0_210, %c0_211, %c0_212] : memref<4x2x8x32xf32, #tpu.memory_space<vmem>>, vector<1x2x8x32xf32>
    %467 = vector.shape_cast %466 : vector<1x2x8x32xf32> to vector<2x8x32xf32>
    %468 = vector.shape_cast %465 : vector<2x8x32xf32> to vector<1x2x8x32xf32>
    tpu.vector_store %arg9[%c2_209, %c0_210, %c0_211, %c0_212], %468 {strides = array<i32>} : memref<4x2x8x32xf32, #tpu.memory_space<vmem>>, vector<1x2x8x32xf32>,
    %469 = vector.extract_strided_slice %410 {offsets = [3, 0, 0, 0], sizes = [1, 2, 8, 32], strides = [1, 1, 1, 1]} : vector<4x2x8x32xf32> to vector<1x2x8x32xf32>
    %470 = vector.shape_cast %469 : vector<1x2x8x32xf32> to vector<2x8x32xf32>
    %471 = arith.subf %470, %462 : vector<2x8x32xf32>
    %cst_213 = arith.constant 5.000000e-01 : f32
    %472 = vector.broadcast %cst_213 : f32 to vector<2x8x32xf32>
    %473 = arith.mulf %471, %472 : vector<2x8x32xf32>
    %474 = arith.addf %462, %473 : vector<2x8x32xf32>
    %cst_214 = arith.constant 1.000000e+00 : f32
    %475 = vector.broadcast %cst_214 : f32 to vector<2x8x32xf32>
    %476 = arith.cmpf oge, %474, %475 : vector<2x8x32xf32>
    %477 = arith.extui %476 : vector<2x8x32xi1> to vector<2x8x32xi32>
    %478 = arith.sitofp %477 : vector<2x8x32xi32> to vector<2x8x32xf32>
    %479 = vector.extract_strided_slice %0 {offsets = [3, 0, 0, 0], sizes = [1, 2, 8, 32], strides = [1, 1, 1, 1]} : vector<4x2x8x32xf32> to vector<1x2x8x32xf32>
    %480 = vector.shape_cast %479 : vector<1x2x8x32xf32> to vector<2x8x32xf32>
    %481 = arith.addf %478, %480 : vector<2x8x32xf32>
    %c3_215 = arith.constant 3 : index
    %c0_216 = arith.constant 0 : index
    %c0_217 = arith.constant 0 : index
    %c0_218 = arith.constant 0 : index
    %482 = vector.load %arg9[%c3_215, %c0_216, %c0_217, %c0_218] : memref<4x2x8x32xf32, #tpu.memory_space<vmem>>, vector<1x2x8x32xf32>
    %483 = vector.shape_cast %482 : vector<1x2x8x32xf32> to vector<2x8x32xf32>
    %484 = vector.shape_cast %481 : vector<2x8x32xf32> to vector<1x2x8x32xf32>
    tpu.vector_store %arg9[%c3_215, %c0_216, %c0_217, %c0_218], %484 {strides = array<i32>} : memref<4x2x8x32xf32, #tpu.memory_space<vmem>>, vector<1x2x8x32xf32>,
    return
  }
  func.func @transform_0(%arg0: i32) -> (i32, i32, i32, i32) {
    %c0_i32 = arith.constant 0 : i32
    %c0_i32_0 = arith.constant 0 : i32
    %c0_i32_1 = arith.constant 0 : i32
    %c0_i32_2 = arith.constant 0 : i32
    return %c0_i32, %arg0, %c0_i32_0, %c0_i32_1 : i32, i32, i32, i32
  }
  func.func @transform_1(%arg0: i32) -> (i32, i32, i32) {
    %c0_i32 = arith.constant 0 : i32
    %c0_i32_0 = arith.constant 0 : i32
    %c0_i32_1 = arith.constant 0 : i32
    %c0_i32_2 = arith.constant 0 : i32
    return %c0_i32, %c0_i32_0, %c0_i32_1 : i32, i32, i32
  }
  func.func @transform_2(%arg0: i32) -> (i32, i32, i32) {
    %c0_i32 = arith.constant 0 : i32
    %c0_i32_0 = arith.constant 0 : i32
    %c0_i32_1 = arith.constant 0 : i32
    %c0_i32_2 = arith.constant 0 : i32
    return %c0_i32, %c0_i32_0, %c0_i32_1 : i32, i32, i32
  }
  func.func @transform_3(%arg0: i32) -> (i32, i32, i32) {
    %c0_i32 = arith.constant 0 : i32
    %c0_i32_0 = arith.constant 0 : i32
    %c0_i32_1 = arith.constant 0 : i32
    %c0_i32_2 = arith.constant 0 : i32
    return %c0_i32, %c0_i32_0, %c0_i32_1 : i32, i32, i32
  }
  func.func @transform_4(%arg0: i32) -> (i32, i32) {
    %c0_i32 = arith.constant 0 : i32
    %c0_i32_0 = arith.constant 0 : i32
    %c0_i32_1 = arith.constant 0 : i32
    return %c0_i32, %c0_i32_0 : i32, i32
  }
  func.func @transform_5(%arg0: i32) -> (i32, i32) {
    %c0_i32 = arith.constant 0 : i32
    %c0_i32_0 = arith.constant 0 : i32
    %c0_i32_1 = arith.constant 0 : i32
    return %c0_i32, %c0_i32_0 : i32, i32
  }
  func.func @transform_6(%arg0: i32) -> (i32, i32) {
    %c0_i32 = arith.constant 0 : i32
    %c0_i32_0 = arith.constant 0 : i32
    %c0_i32_1 = arith.constant 0 : i32
    return %c0_i32, %c0_i32_0 : i32, i32
  }
  func.func @transform_7(%arg0: i32) -> (i32, i32) {
    %c0_i32 = arith.constant 0 : i32
    %c0_i32_0 = arith.constant 0 : i32
    %c0_i32_1 = arith.constant 0 : i32
    return %c0_i32, %c0_i32_0 : i32, i32
  }
  func.func @transform_8(%arg0: i32) -> (i32, i32, i32, i32) {
    %c0_i32 = arith.constant 0 : i32
    %c0_i32_0 = arith.constant 0 : i32
    %c0_i32_1 = arith.constant 0 : i32
    %c0_i32_2 = arith.constant 0 : i32
    return %c0_i32, %arg0, %c0_i32_0, %c0_i32_1 : i32, i32, i32, i32
  }
}

</mosaic_0001>

<llo_original>
// kernel: block_forward.3
$region0: #{block_forward.3}
  #allocation0 [shape = 'u32[]', space=smem, size = 0x4, offset = 0x4, fixed_abs, tag = 'smem constant byte address 0x4 - core index']
  #allocation1 [shape = 'u32[144,128]{1,0:T(1,128)}', space=vmem, size = 0x12000, scoped, tag = 'internal scratch']
  #allocation2 [shape = 'bf16[4,16,256]{2,1,0:T(16,128)(2,1)}', space=vmem, size = 0x8000, scoped, tag = 'scratch operand']
  %s0 = inlined_call_operand.vmem [shape: f32[4,16,32], index: 0, kind: input, shape index: {}]
  %s1 = inlined_call_operand.vmem [shape: f32[32,256], index: 1, kind: input, shape index: {}]
  %s2 = inlined_call_operand.vmem [shape: f32[1,256], index: 2, kind: input, shape index: {}]
  %s3 = inlined_call_operand.vmem [shape: f32[1,256], index: 3, kind: input, shape index: {}]
  %s4 = inlined_call_operand.vmem [shape: f32[1,256], index: 4, kind: input, shape index: {}]
  %s5 = inlined_call_operand.vmem [shape: f32[256,32], index: 5, kind: input, shape index: {}]
  %s6 = inlined_call_operand.vmem [shape: f32[1,32], index: 6, kind: input, shape index: {}]
  %s7 = inlined_call_operand.vmem [shape: f32[1,32], index: 7, kind: input, shape index: {}]
  %s8 = inlined_call_operand.vmem [shape: f32[1,32], index: 8, kind: input, shape index: {}]
  %s9 = inlined_call_operand.hbm [shape: f32[4,16,32], index: 9, kind: output, shape index: {}]
  %s10 = sld [smem:[#allocation0]]
  $region46: #{block_forward.3} parent=0
    _
  %s12 = ssub.s32 1, %s10
  %s13 = scalar_select 0, %s12, %s10
  $region1: #{block_forward.3} parent=0
    #allocation3 [shape = 'u8[32768]{0}', space=vmem, size = 0x8000, scoped, tag = 'output window, operand 0, single buffered']
    #allocation4 [shape = 's32[1]{0}', space=sflag, size = 0x4, scoped, tag = 'scoped memory for block_forward.3']
    %14 = vsyncpa [#allocation4], 0
    // Predicated region
    $region2: #{block_forward.3} parent=1 // pred_check
      _
    $region3: #{block_forward.3} parent=1 // pred_check_branch
      %16 = sbr.rel (0) target = $region5
    $region4: #{block_forward.3} parent=1 // pred_region
      _
    $region5: #{block_forward.3} parent=1 // pred_fallthru
      _
    // Predicated region
    $region6: #{block_forward.3} parent=1 // pred_check
      _
    $region7: #{block_forward.3} parent=1 // pred_check_branch
      %18 = sbr.rel (0) target = $region9
    $region8: #{block_forward.3} parent=1 // pred_region
      _
    $region9: #{block_forward.3} parent=1 // pred_fallthru
      _
    // Predicated region
    $region10: #{block_forward.3} parent=1 // pred_check
      _
    $region11: #{block_forward.3} parent=1 // pred_check_branch
      %20 = sbr.rel (0) target = $region13
    $region12: #{block_forward.3} parent=1 // pred_region
      _
    $region13: #{block_forward.3} parent=1 // pred_fallthru
      _
    // Predicated region
    $region14: #{block_forward.3} parent=1 // pred_check
      _
    $region15: #{block_forward.3} parent=1 // pred_check_branch
      %22 = sbr.rel (0) target = $region17
    $region16: #{block_forward.3} parent=1 // pred_region
      _
    $region17: #{block_forward.3} parent=1 // pred_fallthru
      _
    // Predicated region
    $region18: #{block_forward.3} parent=1 // pred_check
      _
    $region19: #{block_forward.3} parent=1 // pred_check_branch
      %24 = sbr.rel (0) target = $region21
    $region20: #{block_forward.3} parent=1 // pred_region
      _
    $region21: #{block_forward.3} parent=1 // pred_fallthru
      _
    // Predicated region
    $region22: #{block_forward.3} parent=1 // pred_check
      _
    $region23: #{block_forward.3} parent=1 // pred_check_branch
      %26 = sbr.rel (0) target = $region25
    $region24: #{block_forward.3} parent=1 // pred_region
      _
    $region25: #{block_forward.3} parent=1 // pred_fallthru
      _
    // Predicated region
    $region26: #{block_forward.3} parent=1 // pred_check
      _
    $region27: #{block_forward.3} parent=1 // pred_check_branch
      %28 = sbr.rel (0) target = $region29
    $region28: #{block_forward.3} parent=1 // pred_region
      _
    $region29: #{block_forward.3} parent=1 // pred_fallthru
      _
    // Predicated region
    $region30: #{block_forward.3} parent=1 // pred_check
      _
    $region31: #{block_forward.3} parent=1 // pred_check_branch
      %30 = sbr.rel (0) target = $region33
    $region32: #{block_forward.3} parent=1 // pred_region
      _
    $region33: #{block_forward.3} parent=1 // pred_fallthru
      _
    // Predicated region
    $region34: #{block_forward.3} parent=1 // pred_check
      _
    $region35: #{block_forward.3} parent=1 // pred_check_branch
      %32 = sbr.rel (0) target = $region37
    $region36: #{block_forward.3} parent=1 // pred_region
      _
    $region37: #{block_forward.3} parent=1 // pred_fallthru
      _
    %v33 = vld [vmem:[%s0] sm:$0xff]
    %v34 = vld [vmem:[%s0 + $0x8] sm:$0xff]
    %v35 = vld [vmem:[%s0 + $0x10] sm:$0xff]
    %v36 = vld [vmem:[%s0 + $0x18] sm:$0xff]
    %v37 = vld [vmem:[%s0 + $0x20] sm:$0xff]
    %v38 = vld [vmem:[%s0 + $0x28] sm:$0xff]
    %v39 = vld [vmem:[%s0 + $0x30] sm:$0xff]
    %v40 = vld [vmem:[%s0 + $0x38] sm:$0xff]
    %v41 = vld [vmem:[%s1] sm:$0xff]
    %v42 = vld [vmem:[%s1 + $0x8] sm:$0xff]
    %v43 = vld [vmem:[%s1 + $0x10] sm:$0xff]
    %v44 = vld [vmem:[%s1 + $0x18] sm:$0xff]
    %v45 = vld [vmem:[%s1 + $0x20] sm:$0xff]
    %v46 = vld [vmem:[%s1 + $0x28] sm:$0xff]
    %v47 = vld [vmem:[%s1 + $0x30] sm:$0xff]
    %v48 = vld [vmem:[%s1 + $0x38] sm:$0xff]
    %v49 = vld [vmem:[%s2] sm:$0x3]
    %v51 = vlaneseq
    %v52 = vshrl.u32 %v51, 7
    %v53 = vsub.s32 0, %v52
    %v54 = vrot.slane %v49, %v53
    %v55 = vlaneseq
    %v56 = vshrl.u32 %v55, 7
    %v57 = vsub.s32 1, %v56
    %v58 = vrot.slane %v49, %v57
    %vm61 = vcmask 261120
    %v63 = vsel %vm61, %v33, 0
    %v66 = vsel %vm61, %v34, 0
    %v69 = vsel %vm61, %v35, 0
    %v72 = vsel %vm61, %v36, 0
    %v75 = vsel %vm61, %v37, 0
    %v78 = vsel %vm61, %v38, 0
    %v81 = vsel %vm61, %v39, 0
    %v84 = vsel %vm61, %v40, 0
    %86 = vmatprep.subr.mxu0 %v42
    %87 = vmatpush1.msra.mxu0 %v41
    %88 = vmatprep.subr.mxu0 %v44
    %89 = vmatpush1.msra.mxu0 %v43
    %90 = vmatprep.subr.mxu0 %v46
    %91 = vmatpush1.msra.mxu0 %v45
    %92 = vmatprep.subr.mxu0 %v48
    %93 = vmatpush1.msra.mxu0 %v47
    %94 = vmatprep.subr.mxu0 0.0
    %95 = vmatpush1.msra.mxu0 0.0
    %96 = vmatprep.subr.mxu0 0.0
    %97 = vmatpush1.msra.mxu0 0.0
    %98 = vmatprep.subr.mxu0 0.0
    %99 = vmatpush1.msra.mxu0 0.0
    %100 = vmatprep.subr.mxu0 0.0
    %101 = vmatpush1.msra.mxu0 0.0
    %102 = vmatprep.subr.mxu0 0.0
    %103 = vmatpush1.msra.mxu0 0.0
    %104 = vmatprep.subr.mxu0 0.0
    %105 = vmatpush1.msra.mxu0 0.0
    %106 = vmatprep.subr.mxu0 0.0
    %107 = vmatpush1.msra.mxu0 0.0
    %108 = vmatprep.subr.mxu0 0.0
    %109 = vmatpush1.msra.mxu0 0.0
    %110 = vmatprep.subr.mxu0 0.0
    %111 = vmatpush1.msra.mxu0 0.0
    %112 = vmatprep.subr.mxu0 0.0
    %113 = vmatpush1.msra.mxu0 0.0
    %114 = vmatprep.subr.mxu0 0.0
    %115 = vmatpush1.msra.mxu0 0.0
    %116 = vmatprep.subr.mxu0 0.0
    %117 = vmatpush1.msra.mxu0 0.0
    %118 = vmatprep.subr.mxu0 0.0
    %119 = vmatpush1.msra.mxu0 0.0
    %120 = vmatprep.subr.mxu0 0.0
    %121 = vmatpush1.msra.mxu0 0.0
    %122 = vmatprep.subr.mxu0 0.0
    %123 = vmatpush1.msra.mxu0 0.0
    %124 = vmatprep.subr.mxu0 0.0
    %125 = vmatpush1.msra.mxu0 0.0
    %126 = vmatprep.subr.mxu0 0.0
    %127 = vmatpush1.msra.mxu0 0.0
    %128 = vmatprep.subr.mxu0 0.0
    %129 = vmatpush1.msra.mxu0 0.0
    %130 = vmatprep.subr.mxu0 0.0
    %131 = vmatpush1.msra.mxu0 0.0
    %132 = vmatprep.subr.mxu0 0.0
    %133 = vmatpush1.msra.mxu0 0.0
    %134 = vmatprep.subr.mxu0 0.0
    %135 = vmatpush1.msra.mxu0 0.0
    %136 = vmatprep.subr.mxu0 0.0
    %137 = vmatpush1.msra.mxu0 0.0
    %138 = vmatprep.subr.mxu0 0.0
    %139 = vmatpush1.msra.mxu0 0.0
    %140 = vmatprep.subr.mxu0 0.0
    %141 = vmatpush1.msra.mxu0 0.0
    %142 = vmatprep.subr.mxu0 0.0
    %143 = vmatpush1.msra.mxu0 0.0
    %144 = vmatprep.subr.mxu0 0.0
    %145 = vmatpush1.msra.mxu0 0.0
    %146 = vmatprep.subr.mxu0 0.0
    %147 = vmatpush1.msra.mxu0 0.0
    %148 = vmatprep.subr.mxu0 0.0
    %149 = vmatpush1.msra.mxu0 0.0
    %150 = vmatprep.mubr.f32.mxu0 0.0
    %151 = vmatmul.mubr.f32.gmra.mrb[0].mxu0 %v63
    %v152 = vpop.f32.mrb[0].mxu0
    %v153 = vadd.f32 %v54, %v152
    %v154 = vpop.f32.mrb[0].mxu0
    %v155 = vadd.f32 %v58, %v154
    %156 = vmatprep.mubr.f32.mxu0 0.0
    %157 = vmatmul.mubr.f32.gmra.mrb[0].mxu0 %v66
    %v158 = vpop.f32.mrb[0].mxu0
    %v159 = vadd.f32 %v54, %v158
    %v160 = vpop.f32.mrb[0].mxu0
    %v161 = vadd.f32 %v58, %v160
    %162 = vmatprep.mubr.f32.mxu0 0.0
    %163 = vmatmul.mubr.f32.gmra.mrb[0].mxu0 %v69
    %v164 = vpop.f32.mrb[0].mxu0
    %v165 = vadd.f32 %v54, %v164
    %v166 = vpop.f32.mrb[0].mxu0
    %v167 = vadd.f32 %v58, %v166
    %168 = vmatprep.mubr.f32.mxu0 0.0
    %169 = vmatmul.mubr.f32.gmra.mrb[0].mxu0 %v72
    %v170 = vpop.f32.mrb[0].mxu0
    %v171 = vadd.f32 %v54, %v170
    %v172 = vpop.f32.mrb[0].mxu0
    %v173 = vadd.f32 %v58, %v172
    %174 = vmatprep.mubr.f32.mxu0 0.0
    %175 = vmatmul.mubr.f32.gmra.mrb[0].mxu0 %v75
    %v176 = vpop.f32.mrb[0].mxu0
    %v177 = vadd.f32 %v54, %v176
    %v178 = vpop.f32.mrb[0].mxu0
    %v179 = vadd.f32 %v58, %v178
    %180 = vmatprep.mubr.f32.mxu0 0.0
    %181 = vmatmul.mubr.f32.gmra.mrb[0].mxu0 %v78
    %v182 = vpop.f32.mrb[0].mxu0
    %v183 = vadd.f32 %v54, %v182
    %v184 = vpop.f32.mrb[0].mxu0
    %v185 = vadd.f32 %v58, %v184
    %186 = vmatprep.mubr.f32.mxu0 0.0
    %187 = vmatmul.mubr.f32.gmra.mrb[0].mxu0 %v81
    %v188 = vpop.f32.mrb[0].mxu0
    %v189 = vadd.f32 %v54, %v188
    %v190 = vpop.f32.mrb[0].mxu0
    %v191 = vadd.f32 %v58, %v190
    %192 = vmatprep.mubr.f32.mxu0 0.0
    %193 = vmatmul.mubr.f32.gmra.mrb[0].mxu0 %v84
    %v194 = vpop.f32.mrb[0].mxu0
    %v195 = vadd.f32 %v54, %v194
    %v196 = vpop.f32.mrb[0].mxu0
    %v197 = vadd.f32 %v58, %v196
    %198 = vdwg.mxu0
    %v199 = vld [vmem:[%s3] sm:$0x3]
    %v200 = vld [vmem:[%s4] sm:$0x3]
    %v201 = vadd.f32 %v153, %v155
    %202 = vadd.xlane.f32.xlu0 %v201
    %v203 = vpop.xlane.xlu0 %202
    %v204 = vadd.f32 %v159, %v161
    %205 = vadd.xlane.f32.xlu0 %v204
    %v206 = vpop.xlane.xlu0 %205
    %v207 = vadd.f32 %v165, %v167
    %208 = vadd.xlane.f32.xlu0 %v207
    %v209 = vpop.xlane.xlu0 %208
    %v210 = vadd.f32 %v171, %v173
    %211 = vadd.xlane.f32.xlu0 %v210
    %v212 = vpop.xlane.xlu0 %211
    %v213 = vadd.f32 %v177, %v179
    %214 = vadd.xlane.f32.xlu0 %v213
    %v215 = vpop.xlane.xlu0 %214
    %v216 = vadd.f32 %v183, %v185
    %217 = vadd.xlane.f32.xlu0 %v216
    %v218 = vpop.xlane.xlu0 %217
    %v219 = vadd.f32 %v189, %v191
    %220 = vadd.xlane.f32.xlu0 %v219
    %v221 = vpop.xlane.xlu0 %220
    %v222 = vadd.f32 %v195, %v197
    %223 = vadd.xlane.f32.xlu0 %v222
    %v224 = vpop.xlane.xlu0 %223
    %v225 = vrcp.pop 256.0
    %v226 = vmul.f32 %v203, %v225
    %v227 = vmul.f32 %v206, %v225
    %v228 = vmul.f32 %v209, %v225
    %v229 = vmul.f32 %v212, %v225
    %v230 = vmul.f32 %v215, %v225
    %v231 = vmul.f32 %v218, %v225
    %v232 = vmul.f32 %v221, %v225
    %v233 = vmul.f32 %v224, %v225
    %v234 = vmul.f32 %v153, %v153
    %v235 = vmul.f32 %v155, %v155
    %v236 = vmul.f32 %v159, %v159
    %v237 = vmul.f32 %v161, %v161
    %v238 = vmul.f32 %v165, %v165
    %v239 = vmul.f32 %v167, %v167
    %v240 = vmul.f32 %v171, %v171
    %v241 = vmul.f32 %v173, %v173
    %v242 = vmul.f32 %v177, %v177
    %v243 = vmul.f32 %v179, %v179
    %v244 = vmul.f32 %v183, %v183
    %v245 = vmul.f32 %v185, %v185
    %v246 = vmul.f32 %v189, %v189
    %v247 = vmul.f32 %v191, %v191
    %v248 = vmul.f32 %v195, %v195
    %v249 = vmul.f32 %v197, %v197
    %v250 = vadd.f32 %v234, %v235
    %251 = vadd.xlane.f32.xlu0 %v250
    %v252 = vpop.xlane.xlu0 %251
    %v253 = vadd.f32 %v236, %v237
    %254 = vadd.xlane.f32.xlu0 %v253
    %v255 = vpop.xlane.xlu0 %254
    %v256 = vadd.f32 %v238, %v239
    %257 = vadd.xlane.f32.xlu0 %v256
    %v258 = vpop.xlane.xlu0 %257
    %v259 = vadd.f32 %v240, %v241
    %260 = vadd.xlane.f32.xlu0 %v259
    %v261 = vpop.xlane.xlu0 %260
    %v262 = vadd.f32 %v242, %v243
    %263 = vadd.xlane.f32.xlu0 %v262
    %v264 = vpop.xlane.xlu0 %263
    %v265 = vadd.f32 %v244, %v245
    %266 = vadd.xlane.f32.xlu0 %v265
    %v267 = vpop.xlane.xlu0 %266
    %v268 = vadd.f32 %v246, %v247
    %269 = vadd.xlane.f32.xlu0 %v268
    %v270 = vpop.xlane.xlu0 %269
    %v271 = vadd.f32 %v248, %v249
    %272 = vadd.xlane.f32.xlu0 %v271
    %v273 = vpop.xlane.xlu0 %272
    %v274 = vmul.f32 %v252, %v225
    %v275 = vmul.f32 %v255, %v225
    %v276 = vmul.f32 %v258, %v225
    %v277 = vmul.f32 %v261, %v225
    %v278 = vmul.f32 %v264, %v225
    %v279 = vmul.f32 %v267, %v225
    %v280 = vmul.f32 %v270, %v225
    %v281 = vmul.f32 %v273, %v225
    %v282 = vmul.f32 %v226, %v226
    %v283 = vmul.f32 %v227, %v227
    %v284 = vmul.f32 %v228, %v228
    %v285 = vmul.f32 %v229, %v229
    %v286 = vmul.f32 %v230, %v230
    %v287 = vmul.f32 %v231, %v231
    %v288 = vmul.f32 %v232, %v232
    %v289 = vmul.f32 %v233, %v233
    %v290 = vsub.f32 %v274, %v282
    %v291 = vsub.f32 %v275, %v283
    %v292 = vsub.f32 %v276, %v284
    %v293 = vsub.f32 %v277, %v285
    %v294 = vsub.f32 %v278, %v286
    %v295 = vsub.f32 %v279, %v287
    %v296 = vsub.f32 %v280, %v288
    %v297 = vsub.f32 %v281, %v289
    %v298 = vsub.f32 %v153, %v226
    %v299 = vsub.f32 %v155, %v226
    %v300 = vsub.f32 %v159, %v227
    %v301 = vsub.f32 %v161, %v227
    %v302 = vsub.f32 %v165, %v228
    %v303 = vsub.f32 %v167, %v228
    %v304 = vsub.f32 %v171, %v229
    %v305 = vsub.f32 %v173, %v229
    %v306 = vsub.f32 %v177, %v230
    %v307 = vsub.f32 %v179, %v230
    %v308 = vsub.f32 %v183, %v231
    %v309 = vsub.f32 %v185, %v231
    %v310 = vsub.f32 %v189, %v232
    %v311 = vsub.f32 %v191, %v232
    %v312 = vsub.f32 %v195, %v233
    %v313 = vsub.f32 %v197, %v233
    %v314 = vadd.f32 %v290, 1e-05
    %v315 = vadd.f32 %v291, 1e-05
    %v316 = vadd.f32 %v292, 1e-05
    %v317 = vadd.f32 %v293, 1e-05
    %v318 = vadd.f32 %v294, 1e-05
    %v319 = vadd.f32 %v295, 1e-05
    %v320 = vadd.f32 %v296, 1e-05
    %v321 = vadd.f32 %v297, 1e-05
    %v322 = vrsqrt.pop %v314
    %v323 = vrsqrt.pop %v315
    %v324 = vrsqrt.pop %v316
    %v325 = vrsqrt.pop %v317
    %v326 = vrsqrt.pop %v318
    %v327 = vrsqrt.pop %v319
    %v328 = vrsqrt.pop %v320
    %v329 = vrsqrt.pop %v321
    %v330 = vmul.f32 %v298, %v322
    %v331 = vmul.f32 %v299, %v322
    %v332 = vmul.f32 %v300, %v323
    %v333 = vmul.f32 %v301, %v323
    %v334 = vmul.f32 %v302, %v324
    %v335 = vmul.f32 %v303, %v324
    %v336 = vmul.f32 %v304, %v325
    %v337 = vmul.f32 %v305, %v325
    %v338 = vmul.f32 %v306, %v326
    %v339 = vmul.f32 %v307, %v326
    %v340 = vmul.f32 %v308, %v327
    %v341 = vmul.f32 %v309, %v327
    %v342 = vmul.f32 %v310, %v328
    %v343 = vmul.f32 %v311, %v328
    %v344 = vmul.f32 %v312, %v329
    %v345 = vmul.f32 %v313, %v329
    %v347 = vlaneseq
    %v348 = vshrl.u32 %v347, 7
    %v349 = vsub.s32 0, %v348
    %v350 = vrot.slane %v199, %v349
    %v351 = vlaneseq
    %v352 = vshrl.u32 %v351, 7
    %v353 = vsub.s32 1, %v352
    %v354 = vrot.slane %v199, %v353
    %v357 = vmul.f32 %v330, %v350
    %v358 = vmul.f32 %v331, %v354
    %v359 = vmul.f32 %v332, %v350
    %v360 = vmul.f32 %v333, %v354
    %v361 = vmul.f32 %v334, %v350
    %v362 = vmul.f32 %v335, %v354
    %v363 = vmul.f32 %v336, %v350
    %v364 = vmul.f32 %v337, %v354
    %v365 = vmul.f32 %v338, %v350
    %v366 = vmul.f32 %v339, %v354
    %v367 = vmul.f32 %v340, %v350
    %v368 = vmul.f32 %v341, %v354
    %v369 = vmul.f32 %v342, %v350
    %v370 = vmul.f32 %v343, %v354
    %v371 = vmul.f32 %v344, %v350
    %v372 = vmul.f32 %v345, %v354
    %v374 = vlaneseq
    %v375 = vshrl.u32 %v374, 7
    %v376 = vsub.s32 0, %v375
    %v377 = vrot.slane %v200, %v376
    %v378 = vlaneseq
    %v379 = vshrl.u32 %v378, 7
    %v380 = vsub.s32 1, %v379
    %v381 = vrot.slane %v200, %v380
    %v384 = vadd.f32 %v357, %v377
    %v385 = vadd.f32 %v358, %v381
    %v386 = vadd.f32 %v359, %v377
    %v387 = vadd.f32 %v360, %v381
    %v388 = vadd.f32 %v361, %v377
    %v389 = vadd.f32 %v362, %v381
    %v390 = vadd.f32 %v363, %v377
    %v391 = vadd.f32 %v364, %v381
    %v392 = vadd.f32 %v365, %v377
    %v393 = vadd.f32 %v366, %v381
    %v394 = vadd.f32 %v367, %v377
    %v395 = vadd.f32 %v368, %v381
    %v396 = vadd.f32 %v369, %v377
    %v397 = vadd.f32 %v370, %v381
    %v398 = vadd.f32 %v371, %v377
    %v399 = vadd.f32 %v372, %v381
    %v400 = vmul.f32 %v384, 0.5
    %v401 = vmul.f32 %v385, 0.5
    %v402 = vmul.f32 %v386, 0.5
    %v403 = vmul.f32 %v387, 0.5
    %v404 = vadd.f32 %v400, 0.0
    %v405 = vadd.f32 %v401, 0.0
    %v406 = vadd.f32 %v402, 0.0
    %v407 = vadd.f32 %v403, 0.0
    %vm408 = vcmp.ge.f32.partialorder %v404, 1.0
    %vm409 = vcmp.ge.f32.partialorder %v405, 1.0
    %vm410 = vcmp.ge.f32.partialorder %v406, 1.0
    %vm411 = vcmp.ge.f32.partialorder %v407, 1.0
    %v412 = vsel %vm408, 1, 0
    %v413 = vsel %vm409, 1, 0
    %v414 = vsel %vm410, 1, 0
    %v415 = vsel %vm411, 1, 0
    %v416 = vcvt.s32.f32 %v412
    %v417 = vcvt.s32.f32 %v413
    %v418 = vcvt.s32.f32 %v414
    %v419 = vcvt.s32.f32 %v415
    %v420 = vsub.f32 1.0, %v416
    %v421 = vsub.f32 1.0, %v417
    %v422 = vsub.f32 1.0, %v418
    %v423 = vsub.f32 1.0, %v419
    %v424 = vmul.f32 %v404, %v420
    %v425 = vmul.f32 %v405, %v421
    %v426 = vmul.f32 %v406, %v422
    %v427 = vmul.f32 %v407, %v423
    %v428 = vpack.c.bf16 %v418, %v416
    %v429 = vpack.c.bf16 %v419, %v417
    %430 = vst [vmem:[#allocation2] sm:$0xff] %v428
    %431 = vst [vmem:[#allocation2 + $0x8] sm:$0xff] %v429
    %v432 = vsub.f32 %v388, %v424
    %v433 = vsub.f32 %v389, %v425
    %v434 = vsub.f32 %v390, %v426
    %v435 = vsub.f32 %v391, %v427
    %v436 = vmul.f32 %v432, 0.5
    %v437 = vmul.f32 %v433, 0.5
    %v438 = vmul.f32 %v434, 0.5
    %v439 = vmul.f32 %v435, 0.5
    %v440 = vadd.f32 %v424, %v436
    %v441 = vadd.f32 %v425, %v437
    %v442 = vadd.f32 %v426, %v438
    %v443 = vadd.f32 %v427, %v439
    %vm444 = vcmp.ge.f32.partialorder %v440, 1.0
    %vm445 = vcmp.ge.f32.partialorder %v441, 1.0
    %vm446 = vcmp.ge.f32.partialorder %v442, 1.0
    %vm447 = vcmp.ge.f32.partialorder %v443, 1.0
    %v448 = vsel %vm444, 1, 0
    %v449 = vsel %vm445, 1, 0
    %v450 = vsel %vm446, 1, 0
    %v451 = vsel %vm447, 1, 0
    %v452 = vcvt.s32.f32 %v448
    %v453 = vcvt.s32.f32 %v449
    %v454 = vcvt.s32.f32 %v450
    %v455 = vcvt.s32.f32 %v451
    %v456 = vsub.f32 1.0, %v452
    %v457 = vsub.f32 1.0, %v453
    %v458 = vsub.f32 1.0, %v454
    %v459 = vsub.f32 1.0, %v455
    %v460 = vmul.f32 %v440, %v456
    %v461 = vmul.f32 %v441, %v457
    %v462 = vmul.f32 %v442, %v458
    %v463 = vmul.f32 %v443, %v459
    %v464 = vpack.c.bf16 %v454, %v452
    %v465 = vpack.c.bf16 %v455, %v453
    %s466 = scalar_lea.vmem [#allocation2], 16
    %467 = vst [vmem:[%s466] sm:$0xff] %v464
    %468 = vst [vmem:[%s466 + $0x8] sm:$0xff] %v465
    %v469 = vsub.f32 %v392, %v460
    %v470 = vsub.f32 %v393, %v461
    %v471 = vsub.f32 %v394, %v462
    %v472 = vsub.f32 %v395, %v463
    %v473 = vmul.f32 %v469, 0.5
    %v474 = vmul.f32 %v470, 0.5
    %v475 = vmul.f32 %v471, 0.5
    %v476 = vmul.f32 %v472, 0.5
    %v477 = vadd.f32 %v460, %v473
    %v478 = vadd.f32 %v461, %v474
    %v479 = vadd.f32 %v462, %v475
    %v480 = vadd.f32 %v463, %v476
    %vm481 = vcmp.ge.f32.partialorder %v477, 1.0
    %vm482 = vcmp.ge.f32.partialorder %v478, 1.0
    %vm483 = vcmp.ge.f32.partialorder %v479, 1.0
    %vm484 = vcmp.ge.f32.partialorder %v480, 1.0
    %v485 = vsel %vm481, 1, 0
    %v486 = vsel %vm482, 1, 0
    %v487 = vsel %vm483, 1, 0
    %v488 = vsel %vm484, 1, 0
    %v489 = vcvt.s32.f32 %v485
    %v490 = vcvt.s32.f32 %v486
    %v491 = vcvt.s32.f32 %v487
    %v492 = vcvt.s32.f32 %v488
    %v493 = vsub.f32 1.0, %v489
    %v494 = vsub.f32 1.0, %v490
    %v495 = vsub.f32 1.0, %v491
    %v496 = vsub.f32 1.0, %v492
    %v497 = vmul.f32 %v477, %v493
    %v498 = vmul.f32 %v478, %v494
    %v499 = vmul.f32 %v479, %v495
    %v500 = vmul.f32 %v480, %v496
    %v501 = vpack.c.bf16 %v491, %v489
    %v502 = vpack.c.bf16 %v492, %v490
    %s503 = scalar_lea.vmem [#allocation2], 32
    %504 = vst [vmem:[%s503] sm:$0xff] %v501
    %505 = vst [vmem:[%s503 + $0x8] sm:$0xff] %v502
    %v506 = vsub.f32 %v396, %v497
    %v507 = vsub.f32 %v397, %v498
    %v508 = vsub.f32 %v398, %v499
    %v509 = vsub.f32 %v399, %v500
    %v510 = vmul.f32 %v506, 0.5
    %v511 = vmul.f32 %v507, 0.5
    %v512 = vmul.f32 %v508, 0.5
    %v513 = vmul.f32 %v509, 0.5
    %v514 = vadd.f32 %v497, %v510
    %v515 = vadd.f32 %v498, %v511
    %v516 = vadd.f32 %v499, %v512
    %v517 = vadd.f32 %v500, %v513
    %vm518 = vcmp.ge.f32.partialorder %v514, 1.0
    %vm519 = vcmp.ge.f32.partialorder %v515, 1.0
    %vm520 = vcmp.ge.f32.partialorder %v516, 1.0
    %vm521 = vcmp.ge.f32.partialorder %v517, 1.0
    %v522 = vsel %vm518, 1, 0
    %v523 = vsel %vm519, 1, 0
    %v524 = vsel %vm520, 1, 0
    %v525 = vsel %vm521, 1, 0
    %v526 = vcvt.s32.f32 %v522
    %v527 = vcvt.s32.f32 %v523
    %v528 = vcvt.s32.f32 %v524
    %v529 = vcvt.s32.f32 %v525
    %v530 = vpack.c.bf16 %v528, %v526
    %v531 = vpack.c.bf16 %v529, %v527
    %s532 = scalar_lea.vmem [#allocation2], 48
    %533 = vst [vmem:[%s532] sm:$0xff] %v530
    %534 = vst [vmem:[%s532 + $0x8] sm:$0xff] %v531
    %v535 = vld [vmem:[#allocation2] sm:$0xff]
    %v536 = vld [vmem:[#allocation2 + $0x8] sm:$0xff]
    %v537 = vld [vmem:[#allocation2 + $0x10] sm:$0xff]
    %v538 = vld [vmem:[#allocation2 + $0x18] sm:$0xff]
    %v539 = vld [vmem:[#allocation2 + $0x20] sm:$0xff]
    %v540 = vld [vmem:[#allocation2 + $0x28] sm:$0xff]
    %v541 = vld [vmem:[#allocation2 + $0x30] sm:$0xff]
    %v542 = vld [vmem:[#allocation2 + $0x38] sm:$0xff]
    %v543 = vunpack.c.l.bf16 %v535
    %v544 = vunpack.c.l.bf16 %v536
    %v545 = vunpack.c.h.bf16 %v535
    %v546 = vunpack.c.h.bf16 %v536
    %v547 = vunpack.c.l.bf16 %v537
    %v548 = vunpack.c.l.bf16 %v538
    %v549 = vunpack.c.h.bf16 %v537
    %v550 = vunpack.c.h.bf16 %v538
    %v551 = vunpack.c.l.bf16 %v539
    %v552 = vunpack.c.l.bf16 %v540
    %v553 = vunpack.c.h.bf16 %v539
    %v554 = vunpack.c.h.bf16 %v540
    %v555 = vunpack.c.l.bf16 %v541
    %v556 = vunpack.c.l.bf16 %v542
    %v557 = vunpack.c.h.bf16 %v541
    %v558 = vunpack.c.h.bf16 %v542
    %v559 = vld [vmem:[%s5] sm:$0xff]
    %v560 = vld [vmem:[%s5 + $0x8] sm:$0xff]
    %v561 = vld [vmem:[%s5 + $0x10] sm:$0xff]
    %v562 = vld [vmem:[%s5 + $0x18] sm:$0xff]
    %v563 = vld [vmem:[%s5 + $0x20] sm:$0xff]
    %v564 = vld [vmem:[%s5 + $0x28] sm:$0xff]
    %v565 = vld [vmem:[%s5 + $0x30] sm:$0xff]
    %v566 = vld [vmem:[%s5 + $0x38] sm:$0xff]
    %v567 = vld [vmem:[%s5 + $0x40] sm:$0xff]
    %v568 = vld [vmem:[%s5 + $0x48] sm:$0xff]
    %v569 = vld [vmem:[%s5 + $0x50] sm:$0xff]
    %v570 = vld [vmem:[%s5 + $0x58] sm:$0xff]
    %v571 = vld [vmem:[%s5 + $0x60] sm:$0xff]
    %v572 = vld [vmem:[%s5 + $0x68] sm:$0xff]
    %v573 = vld [vmem:[%s5 + $0x70] sm:$0xff]
    %v574 = vld [vmem:[%s5 + $0x78] sm:$0xff]
    %v575 = vld [vmem:[%s5 + $0x80] sm:$0xff]
    %v576 = vld [vmem:[%s5 + $0x88] sm:$0xff]
    %v577 = vld [vmem:[%s5 + $0x90] sm:$0xff]
    %v578 = vld [vmem:[%s5 + $0x98] sm:$0xff]
    %v579 = vld [vmem:[%s5 + $0xa0] sm:$0xff]
    %v580 = vld [vmem:[%s5 + $0xa8] sm:$0xff]
    %v581 = vld [vmem:[%s5 + $0xb0] sm:$0xff]
    %v582 = vld [vmem:[%s5 + $0xb8] sm:$0xff]
    %v583 = vld [vmem:[%s5 + $0xc0] sm:$0xff]
    %v584 = vld [vmem:[%s5 + $0xc8] sm:$0xff]
    %v585 = vld [vmem:[%s5 + $0xd0] sm:$0xff]
    %v586 = vld [vmem:[%s5 + $0xd8] sm:$0xff]
    %v587 = vld [vmem:[%s5 + $0xe0] sm:$0xff]
    %v588 = vld [vmem:[%s5 + $0xe8] sm:$0xff]
    %v589 = vld [vmem:[%s5 + $0xf0] sm:$0xff]
    %v590 = vld [vmem:[%s5 + $0xf8] sm:$0xff]
    %v591 = vld [vmem:[%s6] sm:$0x1]
    %v593 = vlaneseq
    %v594 = vshrl.u32 %v593, 7
    %v595 = vsub.s32 0, %v594
    %v596 = vrot.slane %v591, %v595
    %598 = vmatprep.subr.mxu0 0.0
    %599 = vmatpush1.msra.mxu0 %v559
    %600 = vmatprep.subr.mxu0 0.0
    %601 = vmatpush1.msra.mxu0 %v560
    %602 = vmatprep.subr.mxu0 0.0
    %603 = vmatpush1.msra.mxu0 %v561
    %604 = vmatprep.subr.mxu0 0.0
    %605 = vmatpush1.msra.mxu0 %v562
    %606 = vmatprep.subr.mxu0 0.0
    %607 = vmatpush1.msra.mxu0 %v563
    %608 = vmatprep.subr.mxu0 0.0
    %609 = vmatpush1.msra.mxu0 %v564
    %610 = vmatprep.subr.mxu0 0.0
    %611 = vmatpush1.msra.mxu0 %v565
    %612 = vmatprep.subr.mxu0 0.0
    %613 = vmatpush1.msra.mxu0 %v566
    %614 = vmatprep.subr.mxu0 0.0
    %615 = vmatpush1.msra.mxu0 %v567
    %616 = vmatprep.subr.mxu0 0.0
    %617 = vmatpush1.msra.mxu0 %v568
    %618 = vmatprep.subr.mxu0 0.0
    %619 = vmatpush1.msra.mxu0 %v569
    %620 = vmatprep.subr.mxu0 0.0
    %621 = vmatpush1.msra.mxu0 %v570
    %622 = vmatprep.subr.mxu0 0.0
    %623 = vmatpush1.msra.mxu0 %v571
    %624 = vmatprep.subr.mxu0 0.0
    %625 = vmatpush1.msra.mxu0 %v572
    %626 = vmatprep.subr.mxu0 0.0
    %627 = vmatpush1.msra.mxu0 %v573
    %628 = vmatprep.subr.mxu0 0.0
    %629 = vmatpush1.msra.mxu0 %v574
    %630 = vmatprep.subr.mxu0 0.0
    %631 = vmatpush1.msra.mxu0 %v575
    %632 = vmatprep.subr.mxu0 0.0
    %633 = vmatpush1.msra.mxu0 %v576
    %634 = vmatprep.subr.mxu0 0.0
    %635 = vmatpush1.msra.mxu0 %v577
    %636 = vmatprep.subr.mxu0 0.0
    %637 = vmatpush1.msra.mxu0 %v578
    %638 = vmatprep.subr.mxu0 0.0
    %639 = vmatpush1.msra.mxu0 %v579
    %640 = vmatprep.subr.mxu0 0.0
    %641 = vmatpush1.msra.mxu0 %v580
    %642 = vmatprep.subr.mxu0 0.0
    %643 = vmatpush1.msra.mxu0 %v581
    %644 = vmatprep.subr.mxu0 0.0
    %645 = vmatpush1.msra.mxu0 %v582
    %646 = vmatprep.subr.mxu0 0.0
    %647 = vmatpush1.msra.mxu0 %v583
    %648 = vmatprep.subr.mxu0 0.0
    %649 = vmatpush1.msra.mxu0 %v584
    %650 = vmatprep.subr.mxu0 0.0
    %651 = vmatpush1.msra.mxu0 %v585
    %652 = vmatprep.subr.mxu0 0.0
    %653 = vmatpush1.msra.mxu0 %v586
    %654 = vmatprep.subr.mxu0 0.0
    %655 = vmatpush1.msra.mxu0 %v587
    %656 = vmatprep.subr.mxu0 0.0
    %657 = vmatpush1.msra.mxu0 %v588
    %658 = vmatprep.subr.mxu0 0.0
    %659 = vmatpush1.msra.mxu0 %v589
    %660 = vmatprep.subr.mxu0 0.0
    %661 = vmatpush1.msra.mxu0 %v590
    %662 = vmatprep.mubr.f32.mxu0 %v544
    %663 = vmatmul.mubr.f32.gmra.mrb[0].mxu0 %v543
    %v664 = vpop.f32.mrb[0].mxu0
    %v665 = vadd.f32 %v596, %v664
    %v666 = vpop.f32.mrb[0].mxu0
    %667 = vmatprep.mubr.f32.mxu0 %v546
    %668 = vmatmul.mubr.f32.gmra.mrb[0].mxu0 %v545
    %v669 = vpop.f32.mrb[0].mxu0
    %v670 = vadd.f32 %v596, %v669
    %v671 = vpop.f32.mrb[0].mxu0
    %672 = vmatprep.mubr.f32.mxu0 %v548
    %673 = vmatmul.mubr.f32.gmra.mrb[0].mxu0 %v547
    %v674 = vpop.f32.mrb[0].mxu0
    %v675 = vadd.f32 %v596, %v674
    %v676 = vpop.f32.mrb[0].mxu0
    %677 = vmatprep.mubr.f32.mxu0 %v550
    %678 = vmatmul.mubr.f32.gmra.mrb[0].mxu0 %v549
    %v679 = vpop.f32.mrb[0].mxu0
    %v680 = vadd.f32 %v596, %v679
    %v681 = vpop.f32.mrb[0].mxu0
    %682 = vmatprep.mubr.f32.mxu0 %v552
    %683 = vmatmul.mubr.f32.gmra.mrb[0].mxu0 %v551
    %v684 = vpop.f32.mrb[0].mxu0
    %v685 = vadd.f32 %v596, %v684
    %v686 = vpop.f32.mrb[0].mxu0
    %687 = vmatprep.mubr.f32.mxu0 %v554
    %688 = vmatmul.mubr.f32.gmra.mrb[0].mxu0 %v553
    %v689 = vpop.f32.mrb[0].mxu0
    %v690 = vadd.f32 %v596, %v689
    %v691 = vpop.f32.mrb[0].mxu0
    %692 = vmatprep.mubr.f32.mxu0 %v556
    %693 = vmatmul.mubr.f32.gmra.mrb[0].mxu0 %v555
    %v694 = vpop.f32.mrb[0].mxu0
    %v695 = vadd.f32 %v596, %v694
    %v696 = vpop.f32.mrb[0].mxu0
    %697 = vmatprep.mubr.f32.mxu0 %v558
    %698 = vmatmul.mubr.f32.gmra.mrb[0].mxu0 %v557
    %v699 = vpop.f32.mrb[0].mxu0
    %v700 = vadd.f32 %v596, %v699
    %v701 = vpop.f32.mrb[0].mxu0
    %702 = vdwg.mxu0
    %v703 = vld [vmem:[%s7] sm:$0x1]
    %v704 = vld [vmem:[%s8] sm:$0x1]
    %v705 = vsel %vm61, %v665, 0.0
    %706 = vadd.xlane.f32.xlu0 %v705
    %v707 = vpop.xlane.xlu0 %706
    %v708 = vsel %vm61, %v670, 0.0
    %709 = vadd.xlane.f32.xlu0 %v708
    %v710 = vpop.xlane.xlu0 %709
    %v711 = vsel %vm61, %v675, 0.0
    %712 = vadd.xlane.f32.xlu0 %v711
    %v713 = vpop.xlane.xlu0 %712
    %v714 = vsel %vm61, %v680, 0.0
    %715 = vadd.xlane.f32.xlu0 %v714
    %v716 = vpop.xlane.xlu0 %715
    %v717 = vsel %vm61, %v685, 0.0
    %718 = vadd.xlane.f32.xlu0 %v717
    %v719 = vpop.xlane.xlu0 %718
    %v720 = vsel %vm61, %v690, 0.0
    %721 = vadd.xlane.f32.xlu0 %v720
    %v722 = vpop.xlane.xlu0 %721
    %v723 = vsel %vm61, %v695, 0.0
    %724 = vadd.xlane.f32.xlu0 %v723
    %v725 = vpop.xlane.xlu0 %724
    %v726 = vsel %vm61, %v700, 0.0
    %727 = vadd.xlane.f32.xlu0 %v726
    %v728 = vpop.xlane.xlu0 %727
    %v729 = vrcp.pop 32.0
    %v730 = vmul.f32 %v707, %v729
    %v731 = vmul.f32 %v710, %v729
    %v732 = vmul.f32 %v713, %v729
    %v733 = vmul.f32 %v716, %v729
    %v734 = vmul.f32 %v719, %v729
    %v735 = vmul.f32 %v722, %v729
    %v736 = vmul.f32 %v725, %v729
    %v737 = vmul.f32 %v728, %v729
    %v738 = vmul.f32 %v665, %v665
    %v739 = vmul.f32 %v670, %v670
    %v740 = vmul.f32 %v675, %v675
    %v741 = vmul.f32 %v680, %v680
    %v742 = vmul.f32 %v685, %v685
    %v743 = vmul.f32 %v690, %v690
    %v744 = vmul.f32 %v695, %v695
    %v745 = vmul.f32 %v700, %v700
    %v746 = vsel %vm61, %v738, 0.0
    %747 = vadd.xlane.f32.xlu0 %v746
    %v748 = vpop.xlane.xlu0 %747
    %v749 = vsel %vm61, %v739, 0.0
    %750 = vadd.xlane.f32.xlu0 %v749
    %v751 = vpop.xlane.xlu0 %750
    %v752 = vsel %vm61, %v740, 0.0
    %753 = vadd.xlane.f32.xlu0 %v752
    %v754 = vpop.xlane.xlu0 %753
    %v755 = vsel %vm61, %v741, 0.0
    %756 = vadd.xlane.f32.xlu0 %v755
    %v757 = vpop.xlane.xlu0 %756
    %v758 = vsel %vm61, %v742, 0.0
    %759 = vadd.xlane.f32.xlu0 %v758
    %v760 = vpop.xlane.xlu0 %759
    %v761 = vsel %vm61, %v743, 0.0
    %762 = vadd.xlane.f32.xlu0 %v761
    %v763 = vpop.xlane.xlu0 %762
    %v764 = vsel %vm61, %v744, 0.0
    %765 = vadd.xlane.f32.xlu0 %v764
    %v766 = vpop.xlane.xlu0 %765
    %v767 = vsel %vm61, %v745, 0.0
    %768 = vadd.xlane.f32.xlu0 %v767
    %v769 = vpop.xlane.xlu0 %768
    %v770 = vmul.f32 %v748, %v729
    %v771 = vmul.f32 %v751, %v729
    %v772 = vmul.f32 %v754, %v729
    %v773 = vmul.f32 %v757, %v729
    %v774 = vmul.f32 %v760, %v729
    %v775 = vmul.f32 %v763, %v729
    %v776 = vmul.f32 %v766, %v729
    %v777 = vmul.f32 %v769, %v729
    %v778 = vmul.f32 %v730, %v730
    %v779 = vmul.f32 %v731, %v731
    %v780 = vmul.f32 %v732, %v732
    %v781 = vmul.f32 %v733, %v733
    %v782 = vmul.f32 %v734, %v734
    %v783 = vmul.f32 %v735, %v735
    %v784 = vmul.f32 %v736, %v736
    %v785 = vmul.f32 %v737, %v737
    %v786 = vsub.f32 %v770, %v778
    %v787 = vsub.f32 %v771, %v779
    %v788 = vsub.f32 %v772, %v780
    %v789 = vsub.f32 %v773, %v781
    %v790 = vsub.f32 %v774, %v782
    %v791 = vsub.f32 %v775, %v783
    %v792 = vsub.f32 %v776, %v784
    %v793 = vsub.f32 %v777, %v785
    %v794 = vsub.f32 %v665, %v730
    %v795 = vsub.f32 %v670, %v731
    %v796 = vsub.f32 %v675, %v732
    %v797 = vsub.f32 %v680, %v733
    %v798 = vsub.f32 %v685, %v734
    %v799 = vsub.f32 %v690, %v735
    %v800 = vsub.f32 %v695, %v736
    %v801 = vsub.f32 %v700, %v737
    %v802 = vadd.f32 %v786, 1e-05
    %v803 = vadd.f32 %v787, 1e-05
    %v804 = vadd.f32 %v788, 1e-05
    %v805 = vadd.f32 %v789, 1e-05
    %v806 = vadd.f32 %v790, 1e-05
    %v807 = vadd.f32 %v791, 1e-05
    %v808 = vadd.f32 %v792, 1e-05
    %v809 = vadd.f32 %v793, 1e-05
    %v810 = vrsqrt.pop %v802
    %v811 = vrsqrt.pop %v803
    %v812 = vrsqrt.pop %v804
    %v813 = vrsqrt.pop %v805
    %v814 = vrsqrt.pop %v806
    %v815 = vrsqrt.pop %v807
    %v816 = vrsqrt.pop %v808
    %v817 = vrsqrt.pop %v809
    %v818 = vmul.f32 %v794, %v810
    %v819 = vmul.f32 %v795, %v811
    %v820 = vmul.f32 %v796, %v812
    %v821 = vmul.f32 %v797, %v813
    %v822 = vmul.f32 %v798, %v814
    %v823 = vmul.f32 %v799, %v815
    %v824 = vmul.f32 %v800, %v816
    %v825 = vmul.f32 %v801, %v817
    %v827 = vlaneseq
    %v828 = vshrl.u32 %v827, 7
    %v829 = vsub.s32 0, %v828
    %v830 = vrot.slane %v703, %v829
    %v832 = vmul.f32 %v818, %v830
    %v833 = vmul.f32 %v819, %v830
    %v834 = vmul.f32 %v820, %v830
    %v835 = vmul.f32 %v821, %v830
    %v836 = vmul.f32 %v822, %v830
    %v837 = vmul.f32 %v823, %v830
    %v838 = vmul.f32 %v824, %v830
    %v839 = vmul.f32 %v825, %v830
    %v841 = vlaneseq
    %v842 = vshrl.u32 %v841, 7
    %v843 = vsub.s32 0, %v842
    %v844 = vrot.slane %v704, %v843
    %v846 = vadd.f32 %v832, %v844
    %v847 = vadd.f32 %v833, %v844
    %v848 = vadd.f32 %v834, %v844
    %v849 = vadd.f32 %v835, %v844
    %v850 = vadd.f32 %v836, %v844
    %v851 = vadd.f32 %v837, %v844
    %v852 = vadd.f32 %v838, %v844
    %v853 = vadd.f32 %v839, %v844
    %v854 = vmul.f32 %v846, 0.5
    %v855 = vmul.f32 %v847, 0.5
    %v856 = vadd.f32 %v854, 0.0
    %v857 = vadd.f32 %v855, 0.0
    %vm858 = vcmp.ge.f32.partialorder %v856, 1.0
    %vm859 = vcmp.ge.f32.partialorder %v857, 1.0
    %v860 = vsel %vm858, 1, 0
    %v861 = vsel %vm859, 1, 0
    %v862 = vcvt.s32.f32 %v860
    %v863 = vcvt.s32.f32 %v861
    %v864 = vsub.f32 1.0, %v862
    %v865 = vsub.f32 1.0, %v863
    %v866 = vmul.f32 %v856, %v864
    %v867 = vmul.f32 %v857, %v865
    %v868 = vadd.f32 %v862, %v33
    %v869 = vadd.f32 %v863, %v34
    %870 = vst.msk [vmem:[#allocation3] sm:$0xff] %vm61, %v868
    %871 = vst.msk [vmem:[#allocation3 + $0x8] sm:$0xff] %vm61, %v869
    %v872 = vsub.f32 %v848, %v866
    %v873 = vsub.f32 %v849, %v867
    %v874 = vmul.f32 %v872, 0.5
    %v875 = vmul.f32 %v873, 0.5
    %v876 = vadd.f32 %v866, %v874
    %v877 = vadd.f32 %v867, %v875
    %vm878 = vcmp.ge.f32.partialorder %v876, 1.0
    %vm879 = vcmp.ge.f32.partialorder %v877, 1.0
    %v880 = vsel %vm878, 1, 0
    %v881 = vsel %vm879, 1, 0
    %v882 = vcvt.s32.f32 %v880
    %v883 = vcvt.s32.f32 %v881
    %v884 = vsub.f32 1.0, %v882
    %v885 = vsub.f32 1.0, %v883
    %v886 = vmul.f32 %v876, %v884
    %v887 = vmul.f32 %v877, %v885
    %v888 = vadd.f32 %v882, %v35
    %v889 = vadd.f32 %v883, %v36
    %s890 = scalar_lea.vmem [#allocation3], 16
    %891 = vst.msk [vmem:[%s890] sm:$0xff] %vm61, %v888
    %892 = vst.msk [vmem:[%s890 + $0x8] sm:$0xff] %vm61, %v889
    %v893 = vsub.f32 %v850, %v886
    %v894 = vsub.f32 %v851, %v887
    %v895 = vmul.f32 %v893, 0.5
    %v896 = vmul.f32 %v894, 0.5
    %v897 = vadd.f32 %v886, %v895
    %v898 = vadd.f32 %v887, %v896
    %vm899 = vcmp.ge.f32.partialorder %v897, 1.0
    %vm900 = vcmp.ge.f32.partialorder %v898, 1.0
    %v901 = vsel %vm899, 1, 0
    %v902 = vsel %vm900, 1, 0
    %v903 = vcvt.s32.f32 %v901
    %v904 = vcvt.s32.f32 %v902
    %v905 = vsub.f32 1.0, %v903
    %v906 = vsub.f32 1.0, %v904
    %v907 = vmul.f32 %v897, %v905
    %v908 = vmul.f32 %v898, %v906
    %v909 = vadd.f32 %v903, %v37
    %v910 = vadd.f32 %v904, %v38
    %s911 = scalar_lea.vmem [#allocation3], 32
    %912 = vst.msk [vmem:[%s911] sm:$0xff] %vm61, %v909
    %913 = vst.msk [vmem:[%s911 + $0x8] sm:$0xff] %vm61, %v910
    %v914 = vsub.f32 %v852, %v907
    %v915 = vsub.f32 %v853, %v908
    %v916 = vmul.f32 %v914, 0.5
    %v917 = vmul.f32 %v915, 0.5
    %v918 = vadd.f32 %v907, %v916
    %v919 = vadd.f32 %v908, %v917
    %vm920 = vcmp.ge.f32.partialorder %v918, 1.0
    %vm921 = vcmp.ge.f32.partialorder %v919, 1.0
    %v922 = vsel %vm920, 1, 0
    %v923 = vsel %vm921, 1, 0
    %v924 = vcvt.s32.f32 %v922
    %v925 = vcvt.s32.f32 %v923
    %v926 = vadd.f32 %v924, %v39
    %v927 = vadd.f32 %v925, %v40
    %s928 = scalar_lea.vmem [#allocation3], 48
    %929 = vst.msk [vmem:[%s928] sm:$0xff] %vm61, %v926
    %930 = vst.msk [vmem:[%s928 + $0x8] sm:$0xff] %vm61, %v927
    // Predicated region
    $region38: #{block_forward.3} parent=1 // pred_check
      _
    $region39: #{block_forward.3} parent=1 // pred_check_branch
      %932 = sbr.rel (0) target = $region41
    $region40: #{block_forward.3} parent=1 // pred_region
      %s934 = ssub.s32 1024, 1024
      %935 = vsyncadd [#allocation4], %s934
      %s936 = sshll.u32 [#allocation3], 4
      %s937 = int_to_ptr.vmem [resolvable:$true] %s936
      %942 = dma.vmem_to_hbm [thread:$0]  %s937, 1024, %s9, [#allocation4], 128, 128, 8
    $region41: #{block_forward.3} parent=1 // pred_fallthru
      _
    // Predicated region
    $region42: #{block_forward.3} parent=1 // pred_check
      _
    $region43: #{block_forward.3} parent=1 // pred_check_branch
      %944 = sbr.rel (0) target = $region45
    $region44: #{block_forward.3} parent=1 // pred_region
      %945 = dma.done [#allocation4], 1024
    $region45: #{block_forward.3} parent=1 // pred_fallthru
      _
    %946 = vsyncpa [#allocation4], 1

// kernel: block_forward.2
$region0: #{block_forward.2}
  #allocation0 [shape = 'u32[]', space=smem, size = 0x4, offset = 0x4, fixed_abs, tag = 'smem constant byte address 0x4 - core index']
  #allocation1 [shape = 'u32[144,128]{1,0:T(1,128)}', space=vmem, size = 0x12000, scoped, tag = 'internal scratch']
  #allocation2 [shape = 'bf16[4,2,8,32]{3,2,1,0:T(8,128)(2,1)}', space=vmem, size = 0x4000, scoped, tag = 'scratch operand']
  #allocation3 [shape = 'bf16[4,2,8,32]{3,2,1,0:T(8,128)(2,1)}', space=vmem, size = 0x4000, scoped, tag = 'scratch operand']
  #allocation4 [shape = 'bf16[4,2,8,32]{3,2,1,0:T(8,128)(2,1)}', space=vmem, size = 0x4000, scoped, tag = 'scratch operand']
  #allocation5 [shape = 'bf16[4,2,8,32]{3,2,1,0:T(8,128)(2,1)}', space=vmem, size = 0x4000, scoped, tag = 'scratch operand']
  %s0 = inlined_call_operand.vmem [shape: f32[4,2,8,32], index: 0, kind: input, shape index: {}]
  %s1 = inlined_call_operand.vmem [shape: f32[3,32,32], index: 1, kind: input, shape index: {}]
  %s2 = inlined_call_operand.vmem [shape: f32[3,1,32], index: 2, kind: input, shape index: {}]
  %s3 = inlined_call_operand.vmem [shape: f32[3,1,32], index: 3, kind: input, shape index: {}]
  %s4 = inlined_call_operand.vmem [shape: f32[32,32], index: 4, kind: input, shape index: {}]
  %s5 = inlined_call_operand.vmem [shape: f32[1,32], index: 5, kind: input, shape index: {}]
  %s6 = inlined_call_operand.vmem [shape: f32[1,32], index: 6, kind: input, shape index: {}]
  %s7 = inlined_call_operand.vmem [shape: f32[1,32], index: 7, kind: input, shape index: {}]
  %s8 = inlined_call_operand.vmem [shape: f32[4,2,8,32], index: 8, kind: output, shape index: {}]
  %s9 = sld [smem:[#allocation0]]
  $region42: #{block_forward.2} parent=0
    _
  %s11 = ssub.s32 1, %s9
  %s12 = scalar_select 0, %s11, %s9
  // Predicated region
  $region2: #{block_forward.2} parent=0 // pred_check
    _
  $region3: #{block_forward.2} parent=0 // pred_check_branch
    %14 = sbr.rel (0) target = $region5
  $region4: #{block_forward.2} parent=0 // pred_region
    _
  $region5: #{block_forward.2} parent=0 // pred_fallthru
    _
  // Predicated region
  $region6: #{block_forward.2} parent=0 // pred_check
    _
  $region7: #{block_forward.2} parent=0 // pred_check_branch
    %16 = sbr.rel (0) target = $region9
  $region8: #{block_forward.2} parent=0 // pred_region
    _
  $region9: #{block_forward.2} parent=0 // pred_fallthru
    _
  // Predicated region
  $region10: #{block_forward.2} parent=0 // pred_check
    _
  $region11: #{block_forward.2} parent=0 // pred_check_branch
    %18 = sbr.rel (0) target = $region13
  $region12: #{block_forward.2} parent=0 // pred_region
    _
  $region13: #{block_forward.2} parent=0 // pred_fallthru
    _
  // Predicated region
  $region14: #{block_forward.2} parent=0 // pred_check
    _
  $region15: #{block_forward.2} parent=0 // pred_check_branch
    %20 = sbr.rel (0) target = $region17
  $region16: #{block_forward.2} parent=0 // pred_region
    _
  $region17: #{block_forward.2} parent=0 // pred_fallthru
    _
  // Predicated region
  $region18: #{block_forward.2} parent=0 // pred_check
    _
  $region19: #{block_forward.2} parent=0 // pred_check_branch
    %22 = sbr.rel (0) target = $region21
  $region20: #{block_forward.2} parent=0 // pred_region
    _
  $region21: #{block_forward.2} parent=0 // pred_fallthru
    _
  // Predicated region
  $region22: #{block_forward.2} parent=0 // pred_check
    _
  $region23: #{block_forward.2} parent=0 // pred_check_branch
    %24 = sbr.rel (0) target = $region25
  $region24: #{block_forward.2} parent=0 // pred_region
    _
  $region25: #{block_forward.2} parent=0 // pred_fallthru
    _
  // Predicated region
  $region26: #{block_forward.2} parent=0 // pred_check
    _
  $region27: #{block_forward.2} parent=0 // pred_check_branch
    %26 = sbr.rel (0) target = $region29
  $region28: #{block_forward.2} parent=0 // pred_region
    _
  $region29: #{block_forward.2} parent=0 // pred_fallthru
    _
  // Predicated region
  $region30: #{block_forward.2} parent=0 // pred_check
    _
  $region31: #{block_forward.2} parent=0 // pred_check_branch
    %28 = sbr.rel (0) target = $region33
  $region32: #{block_forward.2} parent=0 // pred_region
    _
  $region33: #{block_forward.2} parent=0 // pred_fallthru
    _
  %v30 = vld [vmem:[%s0] sm:$0xff]
  %v31 = vld [vmem:[%s0 + $0x8] sm:$0xff]
  %v32 = vld [vmem:[%s0 + $0x10] sm:$0xff]
  %v33 = vld [vmem:[%s0 + $0x18] sm:$0xff]
  %v34 = vld [vmem:[%s0 + $0x20] sm:$0xff]
  %v35 = vld [vmem:[%s0 + $0x28] sm:$0xff]
  %v36 = vld [vmem:[%s0 + $0x30] sm:$0xff]
  %v37 = vld [vmem:[%s0 + $0x38] sm:$0xff]
  %v38 = vld [vmem:[%s1] sm:$0xff]
  %v39 = vld [vmem:[%s1 + $0x8] sm:$0xff]
  %v40 = vld [vmem:[%s1 + $0x10] sm:$0xff]
  %v41 = vld [vmem:[%s1 + $0x18] sm:$0xff]
  %vm42 = vcmask 261120
  %v44 = vsel %vm42, %v30, 0
  %v47 = vsel %vm42, %v31, 0
  %v50 = vsel %vm42, %v32, 0
  %v53 = vsel %vm42, %v33, 0
  %v56 = vsel %vm42, %v34, 0
  %v59 = vsel %vm42, %v35, 0
  %v62 = vsel %vm42, %v36, 0
  %v65 = vsel %vm42, %v37, 0
  %67 = vmatprep.subr.mxu0 0.0
  %68 = vmatpush1.msra.mxu0 %v38
  %69 = vmatprep.subr.mxu0 0.0
  %70 = vmatpush1.msra.mxu0 %v39
  %71 = vmatprep.subr.mxu0 0.0
  %72 = vmatpush1.msra.mxu0 %v40
  %73 = vmatprep.subr.mxu0 0.0
  %74 = vmatpush1.msra.mxu0 %v41
  %75 = vmatprep.subr.mxu0 0.0
  %76 = vmatpush1.msra.mxu0 0.0
  %77 = vmatprep.subr.mxu0 0.0
  %78 = vmatpush1.msra.mxu0 0.0
  %79 = vmatprep.subr.mxu0 0.0
  %80 = vmatpush1.msra.mxu0 0.0
  %81 = vmatprep.subr.mxu0 0.0
  %82 = vmatpush1.msra.mxu0 0.0
  %83 = vmatprep.subr.mxu0 0.0
  %84 = vmatpush1.msra.mxu0 0.0
  %85 = vmatprep.subr.mxu0 0.0
  %86 = vmatpush1.msra.mxu0 0.0
  %87 = vmatprep.subr.mxu0 0.0
  %88 = vmatpush1.msra.mxu0 0.0
  %89 = vmatprep.subr.mxu0 0.0
  %90 = vmatpush1.msra.mxu0 0.0
  %91 = vmatprep.subr.mxu0 0.0
  %92 = vmatpush1.msra.mxu0 0.0
  %93 = vmatprep.subr.mxu0 0.0
  %94 = vmatpush1.msra.mxu0 0.0
  %95 = vmatprep.subr.mxu0 0.0
  %96 = vmatpush1.msra.mxu0 0.0
  %97 = vmatprep.subr.mxu0 0.0
  %98 = vmatpush1.msra.mxu0 0.0
  %99 = vmatprep.subr.mxu0 0.0
  %100 = vmatpush1.msra.mxu0 0.0
  %101 = vmatprep.subr.mxu0 0.0
  %102 = vmatpush1.msra.mxu0 0.0
  %103 = vmatprep.subr.mxu0 0.0
  %104 = vmatpush1.msra.mxu0 0.0
  %105 = vmatprep.subr.mxu0 0.0
  %106 = vmatpush1.msra.mxu0 0.0
  %107 = vmatprep.subr.mxu0 0.0
  %108 = vmatpush1.msra.mxu0 0.0
  %109 = vmatprep.subr.mxu0 0.0
  %110 = vmatpush1.msra.mxu0 0.0
  %111 = vmatprep.subr.mxu0 0.0
  %112 = vmatpush1.msra.mxu0 0.0
  %113 = vmatprep.subr.mxu0 0.0
  %114 = vmatpush1.msra.mxu0 0.0
  %115 = vmatprep.subr.mxu0 0.0
  %116 = vmatpush1.msra.mxu0 0.0
  %117 = vmatprep.subr.mxu0 0.0
  %118 = vmatpush1.msra.mxu0 0.0
  %119 = vmatprep.subr.mxu0 0.0
  %120 = vmatpush1.msra.mxu0 0.0
  %121 = vmatprep.subr.mxu0 0.0
  %122 = vmatpush1.msra.mxu0 0.0
  %123 = vmatprep.subr.mxu0 0.0
  %124 = vmatpush1.msra.mxu0 0.0
  %125 = vmatprep.subr.mxu0 0.0
  %126 = vmatpush1.msra.mxu0 0.0
  %127 = vmatprep.subr.mxu0 0.0
  %128 = vmatpush1.msra.mxu0 0.0
  %129 = vmatprep.subr.mxu0 0.0
  %130 = vmatpush1.msra.mxu0 0.0
  %131 = vmatprep.mubr.f32.mxu0 0.0
  %132 = vmatmul.mubr.f32.gmra.mrb[0].mxu0 %v44
  %v133 = vpop.f32.mrb[0].mxu0
  %v134 = vadd.f32 0.0, %v133
  %v135 = vpop.f32.mrb[0].mxu0
  %136 = vmatprep.mubr.f32.mxu0 0.0
  %137 = vmatmul.mubr.f32.gmra.mrb[0].mxu0 %v47
  %v138 = vpop.f32.mrb[0].mxu0
  %v139 = vadd.f32 0.0, %v138
  %v140 = vpop.f32.mrb[0].mxu0
  %141 = vmatprep.mubr.f32.mxu0 0.0
  %142 = vmatmul.mubr.f32.gmra.mrb[0].mxu0 %v50
  %v143 = vpop.f32.mrb[0].mxu0
  %v144 = vadd.f32 0.0, %v143
  %v145 = vpop.f32.mrb[0].mxu0
  %146 = vmatprep.mubr.f32.mxu0 0.0
  %147 = vmatmul.mubr.f32.gmra.mrb[0].mxu0 %v53
  %v148 = vpop.f32.mrb[0].mxu0
  %v149 = vadd.f32 0.0, %v148
  %v150 = vpop.f32.mrb[0].mxu0
  %151 = vmatprep.mubr.f32.mxu0 0.0
  %152 = vmatmul.mubr.f32.gmra.mrb[0].mxu0 %v56
  %v153 = vpop.f32.mrb[0].mxu0
  %v154 = vadd.f32 0.0, %v153
  %v155 = vpop.f32.mrb[0].mxu0
  %156 = vmatprep.mubr.f32.mxu0 0.0
  %157 = vmatmul.mubr.f32.gmra.mrb[0].mxu0 %v59
  %v158 = vpop.f32.mrb[0].mxu0
  %v159 = vadd.f32 0.0, %v158
  %v160 = vpop.f32.mrb[0].mxu0
  %161 = vmatprep.mubr.f32.mxu0 0.0
  %162 = vmatmul.mubr.f32.gmra.mrb[0].mxu0 %v62
  %v163 = vpop.f32.mrb[0].mxu0
  %v164 = vadd.f32 0.0, %v163
  %v165 = vpop.f32.mrb[0].mxu0
  %166 = vmatprep.mubr.f32.mxu0 0.0
  %167 = vmatmul.mubr.f32.gmra.mrb[0].mxu0 %v65
  %v168 = vpop.f32.mrb[0].mxu0
  %v169 = vadd.f32 0.0, %v168
  %v170 = vpop.f32.mrb[0].mxu0
  %171 = vdwg.mxu0
  %v172 = vld [vmem:[%s2] sm:$0x1]
  %v173 = vld [vmem:[%s3] sm:$0x1]
  %v174 = vsel %vm42, %v134, 0.0
  %175 = vadd.xlane.f32.xlu0 %v174
  %v176 = vpop.xlane.xlu0 %175
  %v177 = vsel %vm42, %v139, 0.0
  %178 = vadd.xlane.f32.xlu0 %v177
  %v179 = vpop.xlane.xlu0 %178
  %v180 = vsel %vm42, %v144, 0.0
  %181 = vadd.xlane.f32.xlu0 %v180
  %v182 = vpop.xlane.xlu0 %181
  %v183 = vsel %vm42, %v149, 0.0
  %184 = vadd.xlane.f32.xlu0 %v183
  %v185 = vpop.xlane.xlu0 %184
  %v186 = vsel %vm42, %v154, 0.0
  %187 = vadd.xlane.f32.xlu0 %v186
  %v188 = vpop.xlane.xlu0 %187
  %v189 = vsel %vm42, %v159, 0.0
  %190 = vadd.xlane.f32.xlu0 %v189
  %v191 = vpop.xlane.xlu0 %190
  %v192 = vsel %vm42, %v164, 0.0
  %193 = vadd.xlane.f32.xlu0 %v192
  %v194 = vpop.xlane.xlu0 %193
  %v195 = vsel %vm42, %v169, 0.0
  %196 = vadd.xlane.f32.xlu0 %v195
  %v197 = vpop.xlane.xlu0 %196
  %v198 = vrcp.pop 32.0
  %v199 = vmul.f32 %v176, %v198
  %v200 = vmul.f32 %v179, %v198
  %v201 = vmul.f32 %v182, %v198
  %v202 = vmul.f32 %v185, %v198
  %v203 = vmul.f32 %v188, %v198
  %v204 = vmul.f32 %v191, %v198
  %v205 = vmul.f32 %v194, %v198
  %v206 = vmul.f32 %v197, %v198
  %v207 = vmul.f32 %v134, %v134
  %v208 = vmul.f32 %v139, %v139
  %v209 = vmul.f32 %v144, %v144
  %v210 = vmul.f32 %v149, %v149
  %v211 = vmul.f32 %v154, %v154
  %v212 = vmul.f32 %v159, %v159
  %v213 = vmul.f32 %v164, %v164
  %v214 = vmul.f32 %v169, %v169
  %v215 = vsel %vm42, %v207, 0.0
  %216 = vadd.xlane.f32.xlu0 %v215
  %v217 = vpop.xlane.xlu0 %216
  %v218 = vsel %vm42, %v208, 0.0
  %219 = vadd.xlane.f32.xlu0 %v218
  %v220 = vpop.xlane.xlu0 %219
  %v221 = vsel %vm42, %v209, 0.0
  %222 = vadd.xlane.f32.xlu0 %v221
  %v223 = vpop.xlane.xlu0 %222
  %v224 = vsel %vm42, %v210, 0.0
  %225 = vadd.xlane.f32.xlu0 %v224
  %v226 = vpop.xlane.xlu0 %225
  %v227 = vsel %vm42, %v211, 0.0
  %228 = vadd.xlane.f32.xlu0 %v227
  %v229 = vpop.xlane.xlu0 %228
  %v230 = vsel %vm42, %v212, 0.0
  %231 = vadd.xlane.f32.xlu0 %v230
  %v232 = vpop.xlane.xlu0 %231
  %v233 = vsel %vm42, %v213, 0.0
  %234 = vadd.xlane.f32.xlu0 %v233
  %v235 = vpop.xlane.xlu0 %234
  %v236 = vsel %vm42, %v214, 0.0
  %237 = vadd.xlane.f32.xlu0 %v236
  %v238 = vpop.xlane.xlu0 %237
  %v239 = vmul.f32 %v217, %v198
  %v240 = vmul.f32 %v220, %v198
  %v241 = vmul.f32 %v223, %v198
  %v242 = vmul.f32 %v226, %v198
  %v243 = vmul.f32 %v229, %v198
  %v244 = vmul.f32 %v232, %v198
  %v245 = vmul.f32 %v235, %v198
  %v246 = vmul.f32 %v238, %v198
  %v247 = vmul.f32 %v199, %v199
  %v248 = vmul.f32 %v200, %v200
  %v249 = vmul.f32 %v201, %v201
  %v250 = vmul.f32 %v202, %v202
  %v251 = vmul.f32 %v203, %v203
  %v252 = vmul.f32 %v204, %v204
  %v253 = vmul.f32 %v205, %v205
  %v254 = vmul.f32 %v206, %v206
  %v255 = vsub.f32 %v239, %v247
  %v256 = vsub.f32 %v240, %v248
  %v257 = vsub.f32 %v241, %v249
  %v258 = vsub.f32 %v242, %v250
  %v259 = vsub.f32 %v243, %v251
  %v260 = vsub.f32 %v244, %v252
  %v261 = vsub.f32 %v245, %v253
  %v262 = vsub.f32 %v246, %v254
  %v263 = vsub.f32 %v134, %v199
  %v264 = vsub.f32 %v139, %v200
  %v265 = vsub.f32 %v144, %v201
  %v266 = vsub.f32 %v149, %v202
  %v267 = vsub.f32 %v154, %v203
  %v268 = vsub.f32 %v159, %v204
  %v269 = vsub.f32 %v164, %v205
  %v270 = vsub.f32 %v169, %v206
  %v271 = vadd.f32 %v255, 1e-05
  %v272 = vadd.f32 %v256, 1e-05
  %v273 = vadd.f32 %v257, 1e-05
  %v274 = vadd.f32 %v258, 1e-05
  %v275 = vadd.f32 %v259, 1e-05
  %v276 = vadd.f32 %v260, 1e-05
  %v277 = vadd.f32 %v261, 1e-05
  %v278 = vadd.f32 %v262, 1e-05
  %v279 = vrsqrt.pop %v271
  %v280 = vrsqrt.pop %v272
  %v281 = vrsqrt.pop %v273
  %v282 = vrsqrt.pop %v274
  %v283 = vrsqrt.pop %v275
  %v284 = vrsqrt.pop %v276
  %v285 = vrsqrt.pop %v277
  %v286 = vrsqrt.pop %v278
  %v287 = vmul.f32 %v263, %v279
  %v288 = vmul.f32 %v264, %v280
  %v289 = vmul.f32 %v265, %v281
  %v290 = vmul.f32 %v266, %v282
  %v291 = vmul.f32 %v267, %v283
  %v292 = vmul.f32 %v268, %v284
  %v293 = vmul.f32 %v269, %v285
  %v294 = vmul.f32 %v270, %v286
  %v296 = vlaneseq
  %v297 = vshrl.u32 %v296, 7
  %v298 = vsub.s32 0, %v297
  %v299 = vrot.slane %v172, %v298
  %v301 = vmul.f32 %v287, %v299
  %v302 = vmul.f32 %v288, %v299
  %v303 = vmul.f32 %v289, %v299
  %v304 = vmul.f32 %v290, %v299
  %v305 = vmul.f32 %v291, %v299
  %v306 = vmul.f32 %v292, %v299
  %v307 = vmul.f32 %v293, %v299
  %v308 = vmul.f32 %v294, %v299
  %v310 = vlaneseq
  %v311 = vshrl.u32 %v310, 7
  %v312 = vsub.s32 0, %v311
  %v313 = vrot.slane %v173, %v312
  %v315 = vadd.f32 %v301, %v313
  %v316 = vadd.f32 %v302, %v313
  %v317 = vadd.f32 %v303, %v313
  %v318 = vadd.f32 %v304, %v313
  %v319 = vadd.f32 %v305, %v313
  %v320 = vadd.f32 %v306, %v313
  %v321 = vadd.f32 %v307, %v313
  %v322 = vadd.f32 %v308, %v313
  %v323 = vmul.f32 %v315, 0.5
  %v324 = vmul.f32 %v316, 0.5
  %v325 = vadd.f32 %v323, 0.0
  %v326 = vadd.f32 %v324, 0.0
  %vm327 = vcmp.ge.f32.partialorder %v325, 1.0
  %vm328 = vcmp.ge.f32.partialorder %v326, 1.0
  %v329 = vsel %vm327, 1, 0
  %v330 = vsel %vm328, 1, 0
  %v331 = vcvt.s32.f32 %v329
  %v332 = vcvt.s32.f32 %v330
  %v333 = vsub.f32 1.0, %v331
  %v334 = vsub.f32 1.0, %v332
  %v335 = vmul.f32 %v325, %v333
  %v336 = vmul.f32 %v326, %v334
  %v337 = vpack.c.bf16 %v331, %v331
  %v338 = vpack.c.bf16 %v332, %v332
  %vm339 = vcmask 257024
  %340 = vst.msk [vmem:[#allocation2] sm:$0xf] %vm339, %v337
  %341 = vst.msk [vmem:[#allocation2 + $0x4] sm:$0xf] %vm339, %v338
  %v342 = vsub.f32 %v317, %v335
  %v343 = vsub.f32 %v318, %v336
  %v344 = vmul.f32 %v342, 0.5
  %v345 = vmul.f32 %v343, 0.5
  %v346 = vadd.f32 %v335, %v344
  %v347 = vadd.f32 %v336, %v345
  %vm348 = vcmp.ge.f32.partialorder %v346, 1.0
  %vm349 = vcmp.ge.f32.partialorder %v347, 1.0
  %v350 = vsel %vm348, 1, 0
  %v351 = vsel %vm349, 1, 0
  %v352 = vcvt.s32.f32 %v350
  %v353 = vcvt.s32.f32 %v351
  %v354 = vsub.f32 1.0, %v352
  %v355 = vsub.f32 1.0, %v353
  %v356 = vmul.f32 %v346, %v354
  %v357 = vmul.f32 %v347, %v355
  %v358 = vpack.c.bf16 %v352, %v352
  %v359 = vpack.c.bf16 %v353, %v353
  %s360 = scalar_lea.vmem [#allocation2], 8
  %361 = vst.msk [vmem:[%s360] sm:$0xf] %vm339, %v358
  %362 = vst.msk [vmem:[%s360 + $0x4] sm:$0xf] %vm339, %v359
  %v363 = vsub.f32 %v319, %v356
  %v364 = vsub.f32 %v320, %v357
  %v365 = vmul.f32 %v363, 0.5
  %v366 = vmul.f32 %v364, 0.5
  %v367 = vadd.f32 %v356, %v365
  %v368 = vadd.f32 %v357, %v366
  %vm369 = vcmp.ge.f32.partialorder %v367, 1.0
  %vm370 = vcmp.ge.f32.partialorder %v368, 1.0
  %v371 = vsel %vm369, 1, 0
  %v372 = vsel %vm370, 1, 0
  %v373 = vcvt.s32.f32 %v371
  %v374 = vcvt.s32.f32 %v372
  %v375 = vsub.f32 1.0, %v373
  %v376 = vsub.f32 1.0, %v374
  %v377 = vmul.f32 %v367, %v375
  %v378 = vmul.f32 %v368, %v376
  %v379 = vpack.c.bf16 %v373, %v373
  %v380 = vpack.c.bf16 %v374, %v374
  %s381 = scalar_lea.vmem [#allocation2], 16
  %382 = vst.msk [vmem:[%s381] sm:$0xf] %vm339, %v379
  %383 = vst.msk [vmem:[%s381 + $0x4] sm:$0xf] %vm339, %v380
  %v384 = vsub.f32 %v321, %v377
  %v385 = vsub.f32 %v322, %v378
  %v386 = vmul.f32 %v384, 0.5
  %v387 = vmul.f32 %v385, 0.5
  %v388 = vadd.f32 %v377, %v386
  %v389 = vadd.f32 %v378, %v387
  %vm390 = vcmp.ge.f32.partialorder %v388, 1.0
  %vm391 = vcmp.ge.f32.partialorder %v389, 1.0
  %v392 = vsel %vm390, 1, 0
  %v393 = vsel %vm391, 1, 0
  %v394 = vcvt.s32.f32 %v392
  %v395 = vcvt.s32.f32 %v393
  %v396 = vpack.c.bf16 %v394, %v394
  %v397 = vpack.c.bf16 %v395, %v395
  %s398 = scalar_lea.vmem [#allocation2], 24
  %399 = vst.msk [vmem:[%s398] sm:$0xf] %vm339, %v396
  %400 = vst.msk [vmem:[%s398 + $0x4] sm:$0xf] %vm339, %v397
  %s401 = scalar_lea.vmem %s1, 32
  %v402 = vld [vmem:[%s401] sm:$0xff]
  %v403 = vld [vmem:[%s401 + $0x8] sm:$0xff]
  %v404 = vld [vmem:[%s401 + $0x10] sm:$0xff]
  %v405 = vld [vmem:[%s401 + $0x18] sm:$0xff]
  %406 = vmatprep.subr.mxu0 0.0
  %407 = vmatpush1.msra.mxu0 %v402
  %408 = vmatprep.subr.mxu0 0.0
  %409 = vmatpush1.msra.mxu0 %v403
  %410 = vmatprep.subr.mxu0 0.0
  %411 = vmatpush1.msra.mxu0 %v404
  %412 = vmatprep.subr.mxu0 0.0
  %413 = vmatpush1.msra.mxu0 %v405
  %414 = vmatprep.subr.mxu0 0.0
  %415 = vmatpush1.msra.mxu0 0.0
  %416 = vmatprep.subr.mxu0 0.0
  %417 = vmatpush1.msra.mxu0 0.0
  %418 = vmatprep.subr.mxu0 0.0
  %419 = vmatpush1.msra.mxu0 0.0
  %420 = vmatprep.subr.mxu0 0.0
  %421 = vmatpush1.msra.mxu0 0.0
  %422 = vmatprep.subr.mxu0 0.0
  %423 = vmatpush1.msra.mxu0 0.0
  %424 = vmatprep.subr.mxu0 0.0
  %425 = vmatpush1.msra.mxu0 0.0
  %426 = vmatprep.subr.mxu0 0.0
  %427 = vmatpush1.msra.mxu0 0.0
  %428 = vmatprep.subr.mxu0 0.0
  %429 = vmatpush1.msra.mxu0 0.0
  %430 = vmatprep.subr.mxu0 0.0
  %431 = vmatpush1.msra.mxu0 0.0
  %432 = vmatprep.subr.mxu0 0.0
  %433 = vmatpush1.msra.mxu0 0.0
  %434 = vmatprep.subr.mxu0 0.0
  %435 = vmatpush1.msra.mxu0 0.0
  %436 = vmatprep.subr.mxu0 0.0
  %437 = vmatpush1.msra.mxu0 0.0
  %438 = vmatprep.subr.mxu0 0.0
  %439 = vmatpush1.msra.mxu0 0.0
  %440 = vmatprep.subr.mxu0 0.0
  %441 = vmatpush1.msra.mxu0 0.0
  %442 = vmatprep.subr.mxu0 0.0
  %443 = vmatpush1.msra.mxu0 0.0
  %444 = vmatprep.subr.mxu0 0.0
  %445 = vmatpush1.msra.mxu0 0.0
  %446 = vmatprep.subr.mxu0 0.0
  %447 = vmatpush1.msra.mxu0 0.0
  %448 = vmatprep.subr.mxu0 0.0
  %449 = vmatpush1.msra.mxu0 0.0
  %450 = vmatprep.subr.mxu0 0.0
  %451 = vmatpush1.msra.mxu0 0.0
  %452 = vmatprep.subr.mxu0 0.0
  %453 = vmatpush1.msra.mxu0 0.0
  %454 = vmatprep.subr.mxu0 0.0
  %455 = vmatpush1.msra.mxu0 0.0
  %456 = vmatprep.subr.mxu0 0.0
  %457 = vmatpush1.msra.mxu0 0.0
  %458 = vmatprep.subr.mxu0 0.0
  %459 = vmatpush1.msra.mxu0 0.0
  %460 = vmatprep.subr.mxu0 0.0
  %461 = vmatpush1.msra.mxu0 0.0
  %462 = vmatprep.subr.mxu0 0.0
  %463 = vmatpush1.msra.mxu0 0.0
  %464 = vmatprep.subr.mxu0 0.0
  %465 = vmatpush1.msra.mxu0 0.0
  %466 = vmatprep.subr.mxu0 0.0
  %467 = vmatpush1.msra.mxu0 0.0
  %468 = vmatprep.subr.mxu0 0.0
  %469 = vmatpush1.msra.mxu0 0.0
  %470 = vmatprep.mubr.f32.mxu0 0.0
  %471 = vmatmul.mubr.f32.gmra.mrb[0].mxu0 %v44
  %v472 = vpop.f32.mrb[0].mxu0
  %v473 = vadd.f32 0.0, %v472
  %v474 = vpop.f32.mrb[0].mxu0
  %475 = vmatprep.mubr.f32.mxu0 0.0
  %476 = vmatmul.mubr.f32.gmra.mrb[0].mxu0 %v47
  %v477 = vpop.f32.mrb[0].mxu0
  %v478 = vadd.f32 0.0, %v477
  %v479 = vpop.f32.mrb[0].mxu0
  %480 = vmatprep.mubr.f32.mxu0 0.0
  %481 = vmatmul.mubr.f32.gmra.mrb[0].mxu0 %v50
  %v482 = vpop.f32.mrb[0].mxu0
  %v483 = vadd.f32 0.0, %v482
  %v484 = vpop.f32.mrb[0].mxu0
  %485 = vmatprep.mubr.f32.mxu0 0.0
  %486 = vmatmul.mubr.f32.gmra.mrb[0].mxu0 %v53
  %v487 = vpop.f32.mrb[0].mxu0
  %v488 = vadd.f32 0.0, %v487
  %v489 = vpop.f32.mrb[0].mxu0
  %490 = vmatprep.mubr.f32.mxu0 0.0
  %491 = vmatmul.mubr.f32.gmra.mrb[0].mxu0 %v56
  %v492 = vpop.f32.mrb[0].mxu0
  %v493 = vadd.f32 0.0, %v492
  %v494 = vpop.f32.mrb[0].mxu0
  %495 = vmatprep.mubr.f32.mxu0 0.0
  %496 = vmatmul.mubr.f32.gmra.mrb[0].mxu0 %v59
  %v497 = vpop.f32.mrb[0].mxu0
  %v498 = vadd.f32 0.0, %v497
  %v499 = vpop.f32.mrb[0].mxu0
  %500 = vmatprep.mubr.f32.mxu0 0.0
  %501 = vmatmul.mubr.f32.gmra.mrb[0].mxu0 %v62
  %v502 = vpop.f32.mrb[0].mxu0
  %v503 = vadd.f32 0.0, %v502
  %v504 = vpop.f32.mrb[0].mxu0
  %505 = vmatprep.mubr.f32.mxu0 0.0
  %506 = vmatmul.mubr.f32.gmra.mrb[0].mxu0 %v65
  %v507 = vpop.f32.mrb[0].mxu0
  %v508 = vadd.f32 0.0, %v507
  %v509 = vpop.f32.mrb[0].mxu0
  %510 = vdwg.mxu0
  %s511 = scalar_lea.vmem %s2, 1
  %v512 = vld [vmem:[%s511] sm:$0x1]
  %s513 = scalar_lea.vmem %s3, 1
  %v514 = vld [vmem:[%s513] sm:$0x1]
  %v515 = vsel %vm42, %v473, 0.0
  %516 = vadd.xlane.f32.xlu0 %v515
  %v517 = vpop.xlane.xlu0 %516
  %v518 = vsel %vm42, %v478, 0.0
  %519 = vadd.xlane.f32.xlu0 %v518
  %v520 = vpop.xlane.xlu0 %519
  %v521 = vsel %vm42, %v483, 0.0
  %522 = vadd.xlane.f32.xlu0 %v521
  %v523 = vpop.xlane.xlu0 %522
  %v524 = vsel %vm42, %v488, 0.0
  %525 = vadd.xlane.f32.xlu0 %v524
  %v526 = vpop.xlane.xlu0 %525
  %v527 = vsel %vm42, %v493, 0.0
  %528 = vadd.xlane.f32.xlu0 %v527
  %v529 = vpop.xlane.xlu0 %528
  %v530 = vsel %vm42, %v498, 0.0
  %531 = vadd.xlane.f32.xlu0 %v530
  %v532 = vpop.xlane.xlu0 %531
  %v533 = vsel %vm42, %v503, 0.0
  %534 = vadd.xlane.f32.xlu0 %v533
  %v535 = vpop.xlane.xlu0 %534
  %v536 = vsel %vm42, %v508, 0.0
  %537 = vadd.xlane.f32.xlu0 %v536
  %v538 = vpop.xlane.xlu0 %537
  %v539 = vmul.f32 %v517, %v198
  %v540 = vmul.f32 %v520, %v198
  %v541 = vmul.f32 %v523, %v198
  %v542 = vmul.f32 %v526, %v198
  %v543 = vmul.f32 %v529, %v198
  %v544 = vmul.f32 %v532, %v198
  %v545 = vmul.f32 %v535, %v198
  %v546 = vmul.f32 %v538, %v198
  %v547 = vmul.f32 %v473, %v473
  %v548 = vmul.f32 %v478, %v478
  %v549 = vmul.f32 %v483, %v483
  %v550 = vmul.f32 %v488, %v488
  %v551 = vmul.f32 %v493, %v493
  %v552 = vmul.f32 %v498, %v498
  %v553 = vmul.f32 %v503, %v503
  %v554 = vmul.f32 %v508, %v508
  %v555 = vsel %vm42, %v547, 0.0
  %556 = vadd.xlane.f32.xlu0 %v555
  %v557 = vpop.xlane.xlu0 %556
  %v558 = vsel %vm42, %v548, 0.0
  %559 = vadd.xlane.f32.xlu0 %v558
  %v560 = vpop.xlane.xlu0 %559
  %v561 = vsel %vm42, %v549, 0.0
  %562 = vadd.xlane.f32.xlu0 %v561
  %v563 = vpop.xlane.xlu0 %562
  %v564 = vsel %vm42, %v550, 0.0
  %565 = vadd.xlane.f32.xlu0 %v564
  %v566 = vpop.xlane.xlu0 %565
  %v567 = vsel %vm42, %v551, 0.0
  %568 = vadd.xlane.f32.xlu0 %v567
  %v569 = vpop.xlane.xlu0 %568
  %v570 = vsel %vm42, %v552, 0.0
  %571 = vadd.xlane.f32.xlu0 %v570
  %v572 = vpop.xlane.xlu0 %571
  %v573 = vsel %vm42, %v553, 0.0
  %574 = vadd.xlane.f32.xlu0 %v573
  %v575 = vpop.xlane.xlu0 %574
  %v576 = vsel %vm42, %v554, 0.0
  %577 = vadd.xlane.f32.xlu0 %v576
  %v578 = vpop.xlane.xlu0 %577
  %v579 = vmul.f32 %v557, %v198
  %v580 = vmul.f32 %v560, %v198
  %v581 = vmul.f32 %v563, %v198
  %v582 = vmul.f32 %v566, %v198
  %v583 = vmul.f32 %v569, %v198
  %v584 = vmul.f32 %v572, %v198
  %v585 = vmul.f32 %v575, %v198
  %v586 = vmul.f32 %v578, %v198
  %v587 = vmul.f32 %v539, %v539
  %v588 = vmul.f32 %v540, %v540
  %v589 = vmul.f32 %v541, %v541
  %v590 = vmul.f32 %v542, %v542
  %v591 = vmul.f32 %v543, %v543
  %v592 = vmul.f32 %v544, %v544
  %v593 = vmul.f32 %v545, %v545
  %v594 = vmul.f32 %v546, %v546
  %v595 = vsub.f32 %v579, %v587
  %v596 = vsub.f32 %v580, %v588
  %v597 = vsub.f32 %v581, %v589
  %v598 = vsub.f32 %v582, %v590
  %v599 = vsub.f32 %v583, %v591
  %v600 = vsub.f32 %v584, %v592
  %v601 = vsub.f32 %v585, %v593
  %v602 = vsub.f32 %v586, %v594
  %v603 = vsub.f32 %v473, %v539
  %v604 = vsub.f32 %v478, %v540
  %v605 = vsub.f32 %v483, %v541
  %v606 = vsub.f32 %v488, %v542
  %v607 = vsub.f32 %v493, %v543
  %v608 = vsub.f32 %v498, %v544
  %v609 = vsub.f32 %v503, %v545
  %v610 = vsub.f32 %v508, %v546
  %v611 = vadd.f32 %v595, 1e-05
  %v612 = vadd.f32 %v596, 1e-05
  %v613 = vadd.f32 %v597, 1e-05
  %v614 = vadd.f32 %v598, 1e-05
  %v615 = vadd.f32 %v599, 1e-05
  %v616 = vadd.f32 %v600, 1e-05
  %v617 = vadd.f32 %v601, 1e-05
  %v618 = vadd.f32 %v602, 1e-05
  %v619 = vrsqrt.pop %v611
  %v620 = vrsqrt.pop %v612
  %v621 = vrsqrt.pop %v613
  %v622 = vrsqrt.pop %v614
  %v623 = vrsqrt.pop %v615
  %v624 = vrsqrt.pop %v616
  %v625 = vrsqrt.pop %v617
  %v626 = vrsqrt.pop %v618
  %v627 = vmul.f32 %v603, %v619
  %v628 = vmul.f32 %v604, %v620
  %v629 = vmul.f32 %v605, %v621
  %v630 = vmul.f32 %v606, %v622
  %v631 = vmul.f32 %v607, %v623
  %v632 = vmul.f32 %v608, %v624
  %v633 = vmul.f32 %v609, %v625
  %v634 = vmul.f32 %v610, %v626
  %v636 = vlaneseq
  %v637 = vshrl.u32 %v636, 7
  %v638 = vsub.s32 0, %v637
  %v639 = vrot.slane %v512, %v638
  %v641 = vmul.f32 %v627, %v639
  %v642 = vmul.f32 %v628, %v639
  %v643 = vmul.f32 %v629, %v639
  %v644 = vmul.f32 %v630, %v639
  %v645 = vmul.f32 %v631, %v639
  %v646 = vmul.f32 %v632, %v639
  %v647 = vmul.f32 %v633, %v639
  %v648 = vmul.f32 %v634, %v639
  %v650 = vlaneseq
  %v651 = vshrl.u32 %v650, 7
  %v652 = vsub.s32 0, %v651
  %v653 = vrot.slane %v514, %v652
  %v655 = vadd.f32 %v641, %v653
  %v656 = vadd.f32 %v642, %v653
  %v657 = vadd.f32 %v643, %v653
  %v658 = vadd.f32 %v644, %v653
  %v659 = vadd.f32 %v645, %v653
  %v660 = vadd.f32 %v646, %v653
  %v661 = vadd.f32 %v647, %v653
  %v662 = vadd.f32 %v648, %v653
  %v663 = vmul.f32 %v655, 0.5
  %v664 = vmul.f32 %v656, 0.5
  %v665 = vadd.f32 %v663, 0.0
  %v666 = vadd.f32 %v664, 0.0
  %vm667 = vcmp.ge.f32.partialorder %v665, 1.0
  %vm668 = vcmp.ge.f32.partialorder %v666, 1.0
  %v669 = vsel %vm667, 1, 0
  %v670 = vsel %vm668, 1, 0
  %v671 = vcvt.s32.f32 %v669
  %v672 = vcvt.s32.f32 %v670
  %v673 = vsub.f32 1.0, %v671
  %v674 = vsub.f32 1.0, %v672
  %v675 = vmul.f32 %v665, %v673
  %v676 = vmul.f32 %v666, %v674
  %v677 = vpack.c.bf16 %v671, %v671
  %v678 = vpack.c.bf16 %v672, %v672
  %679 = vst.msk [vmem:[#allocation3] sm:$0xf] %vm339, %v677
  %680 = vst.msk [vmem:[#allocation3 + $0x4] sm:$0xf] %vm339, %v678
  %v681 = vsub.f32 %v657, %v675
  %v682 = vsub.f32 %v658, %v676
  %v683 = vmul.f32 %v681, 0.5
  %v684 = vmul.f32 %v682, 0.5
  %v685 = vadd.f32 %v675, %v683
  %v686 = vadd.f32 %v676, %v684
  %vm687 = vcmp.ge.f32.partialorder %v685, 1.0
  %vm688 = vcmp.ge.f32.partialorder %v686, 1.0
  %v689 = vsel %vm687, 1, 0
  %v690 = vsel %vm688, 1, 0
  %v691 = vcvt.s32.f32 %v689
  %v692 = vcvt.s32.f32 %v690
  %v693 = vsub.f32 1.0, %v691
  %v694 = vsub.f32 1.0, %v692
  %v695 = vmul.f32 %v685, %v693
  %v696 = vmul.f32 %v686, %v694
  %v697 = vpack.c.bf16 %v691, %v691
  %v698 = vpack.c.bf16 %v692, %v692
  %s699 = scalar_lea.vmem [#allocation3], 8
  %700 = vst.msk [vmem:[%s699] sm:$0xf] %vm339, %v697
  %701 = vst.msk [vmem:[%s699 + $0x4] sm:$0xf] %vm339, %v698
  %v702 = vsub.f32 %v659, %v695
  %v703 = vsub.f32 %v660, %v696
  %v704 = vmul.f32 %v702, 0.5
  %v705 = vmul.f32 %v703, 0.5
  %v706 = vadd.f32 %v695, %v704
  %v707 = vadd.f32 %v696, %v705
  %vm708 = vcmp.ge.f32.partialorder %v706, 1.0
  %vm709 = vcmp.ge.f32.partialorder %v707, 1.0
  %v710 = vsel %vm708, 1, 0
  %v711 = vsel %vm709, 1, 0
  %v712 = vcvt.s32.f32 %v710
  %v713 = vcvt.s32.f32 %v711
  %v714 = vsub.f32 1.0, %v712
  %v715 = vsub.f32 1.0, %v713
  %v716 = vmul.f32 %v706, %v714
  %v717 = vmul.f32 %v707, %v715
  %v718 = vpack.c.bf16 %v712, %v712
  %v719 = vpack.c.bf16 %v713, %v713
  %s720 = scalar_lea.vmem [#allocation3], 16
  %721 = vst.msk [vmem:[%s720] sm:$0xf] %vm339, %v718
  %722 = vst.msk [vmem:[%s720 + $0x4] sm:$0xf] %vm339, %v719
  %v723 = vsub.f32 %v661, %v716
  %v724 = vsub.f32 %v662, %v717
  %v725 = vmul.f32 %v723, 0.5
  %v726 = vmul.f32 %v724, 0.5
  %v727 = vadd.f32 %v716, %v725
  %v728 = vadd.f32 %v717, %v726
  %vm729 = vcmp.ge.f32.partialorder %v727, 1.0
  %vm730 = vcmp.ge.f32.partialorder %v728, 1.0
  %v731 = vsel %vm729, 1, 0
  %v732 = vsel %vm730, 1, 0
  %v733 = vcvt.s32.f32 %v731
  %v734 = vcvt.s32.f32 %v732
  %v735 = vpack.c.bf16 %v733, %v733
  %v736 = vpack.c.bf16 %v734, %v734
  %s737 = scalar_lea.vmem [#allocation3], 24
  %738 = vst.msk [vmem:[%s737] sm:$0xf] %vm339, %v735
  %739 = vst.msk [vmem:[%s737 + $0x4] sm:$0xf] %vm339, %v736
  %s740 = scalar_lea.vmem %s1, 64
  %v741 = vld [vmem:[%s740] sm:$0xff]
  %v742 = vld [vmem:[%s740 + $0x8] sm:$0xff]
  %v743 = vld [vmem:[%s740 + $0x10] sm:$0xff]
  %v744 = vld [vmem:[%s740 + $0x18] sm:$0xff]
  %745 = vmatprep.subr.mxu0 0.0
  %746 = vmatpush1.msra.mxu0 %v741
  %747 = vmatprep.subr.mxu0 0.0
  %748 = vmatpush1.msra.mxu0 %v742
  %749 = vmatprep.subr.mxu0 0.0
  %750 = vmatpush1.msra.mxu0 %v743
  %751 = vmatprep.subr.mxu0 0.0
  %752 = vmatpush1.msra.mxu0 %v744
  %753 = vmatprep.subr.mxu0 0.0
  %754 = vmatpush1.msra.mxu0 0.0
  %755 = vmatprep.subr.mxu0 0.0
  %756 = vmatpush1.msra.mxu0 0.0
  %757 = vmatprep.subr.mxu0 0.0
  %758 = vmatpush1.msra.mxu0 0.0
  %759 = vmatprep.subr.mxu0 0.0
  %760 = vmatpush1.msra.mxu0 0.0
  %761 = vmatprep.subr.mxu0 0.0
  %762 = vmatpush1.msra.mxu0 0.0
  %763 = vmatprep.subr.mxu0 0.0
  %764 = vmatpush1.msra.mxu0 0.0
  %765 = vmatprep.subr.mxu0 0.0
  %766 = vmatpush1.msra.mxu0 0.0
  %767 = vmatprep.subr.mxu0 0.0
  %768 = vmatpush1.msra.mxu0 0.0
  %769 = vmatprep.subr.mxu0 0.0
  %770 = vmatpush1.msra.mxu0 0.0
  %771 = vmatprep.subr.mxu0 0.0
  %772 = vmatpush1.msra.mxu0 0.0
  %773 = vmatprep.subr.mxu0 0.0
  %774 = vmatpush1.msra.mxu0 0.0
  %775 = vmatprep.subr.mxu0 0.0
  %776 = vmatpush1.msra.mxu0 0.0
  %777 = vmatprep.subr.mxu0 0.0
  %778 = vmatpush1.msra.mxu0 0.0
  %779 = vmatprep.subr.mxu0 0.0
  %780 = vmatpush1.msra.mxu0 0.0
  %781 = vmatprep.subr.mxu0 0.0
  %782 = vmatpush1.msra.mxu0 0.0
  %783 = vmatprep.subr.mxu0 0.0
  %784 = vmatpush1.msra.mxu0 0.0
  %785 = vmatprep.subr.mxu0 0.0
  %786 = vmatpush1.msra.mxu0 0.0
  %787 = vmatprep.subr.mxu0 0.0
  %788 = vmatpush1.msra.mxu0 0.0
  %789 = vmatprep.subr.mxu0 0.0
  %790 = vmatpush1.msra.mxu0 0.0
  %791 = vmatprep.subr.mxu0 0.0
  %792 = vmatpush1.msra.mxu0 0.0
  %793 = vmatprep.subr.mxu0 0.0
  %794 = vmatpush1.msra.mxu0 0.0
  %795 = vmatprep.subr.mxu0 0.0
  %796 = vmatpush1.msra.mxu0 0.0
  %797 = vmatprep.subr.mxu0 0.0
  %798 = vmatpush1.msra.mxu0 0.0
  %799 = vmatprep.subr.mxu0 0.0
  %800 = vmatpush1.msra.mxu0 0.0
  %801 = vmatprep.subr.mxu0 0.0
  %802 = vmatpush1.msra.mxu0 0.0
  %803 = vmatprep.subr.mxu0 0.0
  %804 = vmatpush1.msra.mxu0 0.0
  %805 = vmatprep.subr.mxu0 0.0
  %806 = vmatpush1.msra.mxu0 0.0
  %807 = vmatprep.subr.mxu0 0.0
  %808 = vmatpush1.msra.mxu0 0.0
  %809 = vmatprep.mubr.f32.mxu0 0.0
  %810 = vmatmul.mubr.f32.gmra.mrb[0].mxu0 %v44
  %v811 = vpop.f32.mrb[0].mxu0
  %v812 = vadd.f32 0.0, %v811
  %v813 = vpop.f32.mrb[0].mxu0
  %814 = vmatprep.mubr.f32.mxu0 0.0
  %815 = vmatmul.mubr.f32.gmra.mrb[0].mxu0 %v47
  %v816 = vpop.f32.mrb[0].mxu0
  %v817 = vadd.f32 0.0, %v816
  %v818 = vpop.f32.mrb[0].mxu0
  %819 = vmatprep.mubr.f32.mxu0 0.0
  %820 = vmatmul.mubr.f32.gmra.mrb[0].mxu0 %v50
  %v821 = vpop.f32.mrb[0].mxu0
  %v822 = vadd.f32 0.0, %v821
  %v823 = vpop.f32.mrb[0].mxu0
  %824 = vmatprep.mubr.f32.mxu0 0.0
  %825 = vmatmul.mubr.f32.gmra.mrb[0].mxu0 %v53
  %v826 = vpop.f32.mrb[0].mxu0
  %v827 = vadd.f32 0.0, %v826
  %v828 = vpop.f32.mrb[0].mxu0
  %829 = vmatprep.mubr.f32.mxu0 0.0
  %830 = vmatmul.mubr.f32.gmra.mrb[0].mxu0 %v56
  %v831 = vpop.f32.mrb[0].mxu0
  %v832 = vadd.f32 0.0, %v831
  %v833 = vpop.f32.mrb[0].mxu0
  %834 = vmatprep.mubr.f32.mxu0 0.0
  %835 = vmatmul.mubr.f32.gmra.mrb[0].mxu0 %v59
  %v836 = vpop.f32.mrb[0].mxu0
  %v837 = vadd.f32 0.0, %v836
  %v838 = vpop.f32.mrb[0].mxu0
  %839 = vmatprep.mubr.f32.mxu0 0.0
  %840 = vmatmul.mubr.f32.gmra.mrb[0].mxu0 %v62
  %v841 = vpop.f32.mrb[0].mxu0
  %v842 = vadd.f32 0.0, %v841
  %v843 = vpop.f32.mrb[0].mxu0
  %844 = vmatprep.mubr.f32.mxu0 0.0
  %845 = vmatmul.mubr.f32.gmra.mrb[0].mxu0 %v65
  %v846 = vpop.f32.mrb[0].mxu0
  %v847 = vadd.f32 0.0, %v846
  %v848 = vpop.f32.mrb[0].mxu0
  %849 = vdwg.mxu0
  %s850 = scalar_lea.vmem %s2, 2
  %v851 = vld [vmem:[%s850] sm:$0x1]
  %s852 = scalar_lea.vmem %s3, 2
  %v853 = vld [vmem:[%s852] sm:$0x1]
  %v854 = vsel %vm42, %v812, 0.0
  %855 = vadd.xlane.f32.xlu0 %v854
  %v856 = vpop.xlane.xlu0 %855
  %v857 = vsel %vm42, %v817, 0.0
  %858 = vadd.xlane.f32.xlu0 %v857
  %v859 = vpop.xlane.xlu0 %858
  %v860 = vsel %vm42, %v822, 0.0
  %861 = vadd.xlane.f32.xlu0 %v860
  %v862 = vpop.xlane.xlu0 %861
  %v863 = vsel %vm42, %v827, 0.0
  %864 = vadd.xlane.f32.xlu0 %v863
  %v865 = vpop.xlane.xlu0 %864
  %v866 = vsel %vm42, %v832, 0.0
  %867 = vadd.xlane.f32.xlu0 %v866
  %v868 = vpop.xlane.xlu0 %867
  %v869 = vsel %vm42, %v837, 0.0
  %870 = vadd.xlane.f32.xlu0 %v869
  %v871 = vpop.xlane.xlu0 %870
  %v872 = vsel %vm42, %v842, 0.0
  %873 = vadd.xlane.f32.xlu0 %v872
  %v874 = vpop.xlane.xlu0 %873
  %v875 = vsel %vm42, %v847, 0.0
  %876 = vadd.xlane.f32.xlu0 %v875
  %v877 = vpop.xlane.xlu0 %876
  %v878 = vmul.f32 %v856, %v198
  %v879 = vmul.f32 %v859, %v198
  %v880 = vmul.f32 %v862, %v198
  %v881 = vmul.f32 %v865, %v198
  %v882 = vmul.f32 %v868, %v198
  %v883 = vmul.f32 %v871, %v198
  %v884 = vmul.f32 %v874, %v198
  %v885 = vmul.f32 %v877, %v198
  %v886 = vmul.f32 %v812, %v812
  %v887 = vmul.f32 %v817, %v817
  %v888 = vmul.f32 %v822, %v822
  %v889 = vmul.f32 %v827, %v827
  %v890 = vmul.f32 %v832, %v832
  %v891 = vmul.f32 %v837, %v837
  %v892 = vmul.f32 %v842, %v842
  %v893 = vmul.f32 %v847, %v847
  %v894 = vsel %vm42, %v886, 0.0
  %895 = vadd.xlane.f32.xlu0 %v894
  %v896 = vpop.xlane.xlu0 %895
  %v897 = vsel %vm42, %v887, 0.0
  %898 = vadd.xlane.f32.xlu0 %v897
  %v899 = vpop.xlane.xlu0 %898
  %v900 = vsel %vm42, %v888, 0.0
  %901 = vadd.xlane.f32.xlu0 %v900
  %v902 = vpop.xlane.xlu0 %901
  %v903 = vsel %vm42, %v889, 0.0
  %904 = vadd.xlane.f32.xlu0 %v903
  %v905 = vpop.xlane.xlu0 %904
  %v906 = vsel %vm42, %v890, 0.0
  %907 = vadd.xlane.f32.xlu0 %v906
  %v908 = vpop.xlane.xlu0 %907
  %v909 = vsel %vm42, %v891, 0.0
  %910 = vadd.xlane.f32.xlu0 %v909
  %v911 = vpop.xlane.xlu0 %910
  %v912 = vsel %vm42, %v892, 0.0
  %913 = vadd.xlane.f32.xlu0 %v912
  %v914 = vpop.xlane.xlu0 %913
  %v915 = vsel %vm42, %v893, 0.0
  %916 = vadd.xlane.f32.xlu0 %v915
  %v917 = vpop.xlane.xlu0 %916
  %v918 = vmul.f32 %v896, %v198
  %v919 = vmul.f32 %v899, %v198
  %v920 = vmul.f32 %v902, %v198
  %v921 = vmul.f32 %v905, %v198
  %v922 = vmul.f32 %v908, %v198
  %v923 = vmul.f32 %v911, %v198
  %v924 = vmul.f32 %v914, %v198
  %v925 = vmul.f32 %v917, %v198
  %v926 = vmul.f32 %v878, %v878
  %v927 = vmul.f32 %v879, %v879
  %v928 = vmul.f32 %v880, %v880
  %v929 = vmul.f32 %v881, %v881
  %v930 = vmul.f32 %v882, %v882
  %v931 = vmul.f32 %v883, %v883
  %v932 = vmul.f32 %v884, %v884
  %v933 = vmul.f32 %v885, %v885
  %v934 = vsub.f32 %v918, %v926
  %v935 = vsub.f32 %v919, %v927
  %v936 = vsub.f32 %v920, %v928
  %v937 = vsub.f32 %v921, %v929
  %v938 = vsub.f32 %v922, %v930
  %v939 = vsub.f32 %v923, %v931
  %v940 = vsub.f32 %v924, %v932
  %v941 = vsub.f32 %v925, %v933
  %v942 = vsub.f32 %v812, %v878
  %v943 = vsub.f32 %v817, %v879
  %v944 = vsub.f32 %v822, %v880
  %v945 = vsub.f32 %v827, %v881
  %v946 = vsub.f32 %v832, %v882
  %v947 = vsub.f32 %v837, %v883
  %v948 = vsub.f32 %v842, %v884
  %v949 = vsub.f32 %v847, %v885
  %v950 = vadd.f32 %v934, 1e-05
  %v951 = vadd.f32 %v935, 1e-05
  %v952 = vadd.f32 %v936, 1e-05
  %v953 = vadd.f32 %v937, 1e-05
  %v954 = vadd.f32 %v938, 1e-05
  %v955 = vadd.f32 %v939, 1e-05
  %v956 = vadd.f32 %v940, 1e-05
  %v957 = vadd.f32 %v941, 1e-05
  %v958 = vrsqrt.pop %v950
  %v959 = vrsqrt.pop %v951
  %v960 = vrsqrt.pop %v952
  %v961 = vrsqrt.pop %v953
  %v962 = vrsqrt.pop %v954
  %v963 = vrsqrt.pop %v955
  %v964 = vrsqrt.pop %v956
  %v965 = vrsqrt.pop %v957
  %v966 = vmul.f32 %v942, %v958
  %v967 = vmul.f32 %v943, %v959
  %v968 = vmul.f32 %v944, %v960
  %v969 = vmul.f32 %v945, %v961
  %v970 = vmul.f32 %v946, %v962
  %v971 = vmul.f32 %v947, %v963
  %v972 = vmul.f32 %v948, %v964
  %v973 = vmul.f32 %v949, %v965
  %v975 = vlaneseq
  %v976 = vshrl.u32 %v975, 7
  %v977 = vsub.s32 0, %v976
  %v978 = vrot.slane %v851, %v977
  %v980 = vmul.f32 %v966, %v978
  %v981 = vmul.f32 %v967, %v978
  %v982 = vmul.f32 %v968, %v978
  %v983 = vmul.f32 %v969, %v978
  %v984 = vmul.f32 %v970, %v978
  %v985 = vmul.f32 %v971, %v978
  %v986 = vmul.f32 %v972, %v978
  %v987 = vmul.f32 %v973, %v978
  %v989 = vlaneseq
  %v990 = vshrl.u32 %v989, 7
  %v991 = vsub.s32 0, %v990
  %v992 = vrot.slane %v853, %v991
  %v994 = vadd.f32 %v980, %v992
  %v995 = vadd.f32 %v981, %v992
  %v996 = vadd.f32 %v982, %v992
  %v997 = vadd.f32 %v983, %v992
  %v998 = vadd.f32 %v984, %v992
  %v999 = vadd.f32 %v985, %v992
  %v1000 = vadd.f32 %v986, %v992
  %v1001 = vadd.f32 %v987, %v992
  %v1002 = vmul.f32 %v994, 0.5
  %v1003 = vmul.f32 %v995, 0.5
  %v1004 = vadd.f32 %v1002, 0.0
  %v1005 = vadd.f32 %v1003, 0.0
  %vm1006 = vcmp.ge.f32.partialorder %v1004, 1.0
  %vm1007 = vcmp.ge.f32.partialorder %v1005, 1.0
  %v1008 = vsel %vm1006, 1, 0
  %v1009 = vsel %vm1007, 1, 0
  %v1010 = vcvt.s32.f32 %v1008
  %v1011 = vcvt.s32.f32 %v1009
  %v1012 = vsub.f32 1.0, %v1010
  %v1013 = vsub.f32 1.0, %v1011
  %v1014 = vmul.f32 %v1004, %v1012
  %v1015 = vmul.f32 %v1005, %v1013
  %v1016 = vpack.c.bf16 %v1010, %v1010
  %v1017 = vpack.c.bf16 %v1011, %v1011
  %1018 = vst.msk [vmem:[#allocation4] sm:$0xf] %vm339, %v1016
  %1019 = vst.msk [vmem:[#allocation4 + $0x4] sm:$0xf] %vm339, %v1017
  %v1020 = vsub.f32 %v996, %v1014
  %v1021 = vsub.f32 %v997, %v1015
  %v1022 = vmul.f32 %v1020, 0.5
  %v1023 = vmul.f32 %v1021, 0.5
  %v1024 = vadd.f32 %v1014, %v1022
  %v1025 = vadd.f32 %v1015, %v1023
  %vm1026 = vcmp.ge.f32.partialorder %v1024, 1.0
  %vm1027 = vcmp.ge.f32.partialorder %v1025, 1.0
  %v1028 = vsel %vm1026, 1, 0
  %v1029 = vsel %vm1027, 1, 0
  %v1030 = vcvt.s32.f32 %v1028
  %v1031 = vcvt.s32.f32 %v1029
  %v1032 = vsub.f32 1.0, %v1030
  %v1033 = vsub.f32 1.0, %v1031
  %v1034 = vmul.f32 %v1024, %v1032
  %v1035 = vmul.f32 %v1025, %v1033
  %v1036 = vpack.c.bf16 %v1030, %v1030
  %v1037 = vpack.c.bf16 %v1031, %v1031
  %s1038 = scalar_lea.vmem [#allocation4], 8
  %1039 = vst.msk [vmem:[%s1038] sm:$0xf] %vm339, %v1036
  %1040 = vst.msk [vmem:[%s1038 + $0x4] sm:$0xf] %vm339, %v1037
  %v1041 = vsub.f32 %v998, %v1034
  %v1042 = vsub.f32 %v999, %v1035
  %v1043 = vmul.f32 %v1041, 0.5
  %v1044 = vmul.f32 %v1042, 0.5
  %v1045 = vadd.f32 %v1034, %v1043
  %v1046 = vadd.f32 %v1035, %v1044
  %vm1047 = vcmp.ge.f32.partialorder %v1045, 1.0
  %vm1048 = vcmp.ge.f32.partialorder %v1046, 1.0
  %v1049 = vsel %vm1047, 1, 0
  %v1050 = vsel %vm1048, 1, 0
  %v1051 = vcvt.s32.f32 %v1049
  %v1052 = vcvt.s32.f32 %v1050
  %v1053 = vsub.f32 1.0, %v1051
  %v1054 = vsub.f32 1.0, %v1052
  %v1055 = vmul.f32 %v1045, %v1053
  %v1056 = vmul.f32 %v1046, %v1054
  %v1057 = vpack.c.bf16 %v1051, %v1051
  %v1058 = vpack.c.bf16 %v1052, %v1052
  %s1059 = scalar_lea.vmem [#allocation4], 16
  %1060 = vst.msk [vmem:[%s1059] sm:$0xf] %vm339, %v1057
  %1061 = vst.msk [vmem:[%s1059 + $0x4] sm:$0xf] %vm339, %v1058
  %v1062 = vsub.f32 %v1000, %v1055
  %v1063 = vsub.f32 %v1001, %v1056
  %v1064 = vmul.f32 %v1062, 0.5
  %v1065 = vmul.f32 %v1063, 0.5
  %v1066 = vadd.f32 %v1055, %v1064
  %v1067 = vadd.f32 %v1056, %v1065
  %vm1068 = vcmp.ge.f32.partialorder %v1066, 1.0
  %vm1069 = vcmp.ge.f32.partialorder %v1067, 1.0
  %v1070 = vsel %vm1068, 1, 0
  %v1071 = vsel %vm1069, 1, 0
  %v1072 = vcvt.s32.f32 %v1070
  %v1073 = vcvt.s32.f32 %v1071
  %v1074 = vpack.c.bf16 %v1072, %v1072
  %v1075 = vpack.c.bf16 %v1073, %v1073
  %s1076 = scalar_lea.vmem [#allocation4], 24
  %1077 = vst.msk [vmem:[%s1076] sm:$0xf] %vm339, %v1074
  %1078 = vst.msk [vmem:[%s1076 + $0x4] sm:$0xf] %vm339, %v1075
  %v1079 = vld [vmem:[#allocation2] sm:$0xf]
  %v1080 = vld [vmem:[#allocation2 + $0x4] sm:$0xf]
  %v1081 = vld [vmem:[#allocation2 + $0x8] sm:$0xf]
  %v1082 = vld [vmem:[#allocation2 + $0xc] sm:$0xf]
  %v1083 = vld [vmem:[#allocation2 + $0x10] sm:$0xf]
  %v1084 = vld [vmem:[#allocation2 + $0x14] sm:$0xf]
  %v1085 = vld [vmem:[#allocation2 + $0x18] sm:$0xf]
  %v1086 = vld [vmem:[#allocation2 + $0x1c] sm:$0xf]
  %v1087 = vld [vmem:[#allocation3] sm:$0xf]
  %v1088 = vld [vmem:[#allocation3 + $0x4] sm:$0xf]
  %v1089 = vld [vmem:[#allocation3 + $0x8] sm:$0xf]
  %v1090 = vld [vmem:[#allocation3 + $0xc] sm:$0xf]
  %v1091 = vld [vmem:[#allocation3 + $0x10] sm:$0xf]
  %v1092 = vld [vmem:[#allocation3 + $0x14] sm:$0xf]
  %v1093 = vld [vmem:[#allocation3 + $0x18] sm:$0xf]
  %v1094 = vld [vmem:[#allocation3 + $0x1c] sm:$0xf]
  %v1095 = vld [vmem:[#allocation4] sm:$0xf]
  %v1096 = vld [vmem:[#allocation4 + $0x4] sm:$0xf]
  %v1097 = vld [vmem:[#allocation4 + $0x8] sm:$0xf]
  %v1098 = vld [vmem:[#allocation4 + $0xc] sm:$0xf]
  %v1099 = vld [vmem:[#allocation4 + $0x10] sm:$0xf]
  %v1100 = vld [vmem:[#allocation4 + $0x14] sm:$0xf]
  %v1101 = vld [vmem:[#allocation4 + $0x18] sm:$0xf]
  %v1102 = vld [vmem:[#allocation4 + $0x1c] sm:$0xf]
  %vm1103 = vcmask 130048
  %v1105 = vsel %vm1103, %v1079, 0
  %v1108 = vsel %vm1103, %v1087, 0
  %1110 = vmatprep.subr.bf16.mxu0 0
  %1111 = vmatpush1.bf16.xpose.msra.mxu0 %v1108
  %1112 = vmatprep.subr.bf16.mxu0 0
  %1113 = vmatpush1.bf16.xpose.msra.mxu0 0
  %1114 = vmatprep.subr.bf16.mxu0 0
  %1115 = vmatpush1.bf16.xpose.msra.mxu0 0
  %1116 = vmatprep.subr.bf16.mxu0 0
  %1117 = vmatpush1.bf16.xpose.msra.mxu0 0
  %1118 = vmatprep.subr.bf16.mxu0 0
  %1119 = vmatpush1.bf16.xpose.msra.mxu0 0
  %1120 = vmatprep.subr.bf16.mxu0 0
  %1121 = vmatpush1.bf16.xpose.msra.mxu0 0
  %1122 = vmatprep.subr.bf16.mxu0 0
  %1123 = vmatpush1.bf16.xpose.msra.mxu0 0
  %1124 = vmatprep.subr.bf16.mxu0 0
  %1125 = vmatpush1.bf16.xpose.msra.mxu0 0
  %1126 = vmatprep.subr.bf16.mxu0 0
  %1127 = vmatpush1.bf16.xpose.msra.mxu0 0
  %1128 = vmatprep.subr.bf16.mxu0 0
  %1129 = vmatpush1.bf16.xpose.msra.mxu0 0
  %1130 = vmatprep.subr.bf16.mxu0 0
  %1131 = vmatpush1.bf16.xpose.msra.mxu0 0
  %1132 = vmatprep.subr.bf16.mxu0 0
  %1133 = vmatpush1.bf16.xpose.msra.mxu0 0
  %1134 = vmatprep.subr.bf16.mxu0 0
  %1135 = vmatpush1.bf16.xpose.msra.mxu0 0
  %1136 = vmatprep.subr.bf16.mxu0 0
  %1137 = vmatpush1.bf16.xpose.msra.mxu0 0
  %1138 = vmatprep.subr.bf16.mxu0 0
  %1139 = vmatpush1.bf16.xpose.msra.mxu0 0
  %1140 = vmatprep.subr.bf16.mxu0 0
  %1141 = vmatpush1.bf16.xpose.msra.mxu0 0
  %1142 = vmatprep.mubr.bf16.mxu0 0
  %1143 = vmatmul.mubr.bf16.gmra.mrb[0].mxu0 %v1105
  %v1144 = vpop.f32.mrb[0].mxu0
  %v1145 = vadd.f32 0.0, %v1144
  %v1146 = vpop.f32.mrb[0].mxu0
  %v1147 = vpop.f32.mrb[0].mxu0
  %v1148 = vpop.f32.mrb[0].mxu0
  %1149 = vdwg.mxu0
  %v1151 = vsel %vm1103, %v1080, 0
  %v1154 = vsel %vm1103, %v1088, 0
  %1156 = vmatprep.subr.bf16.mxu0 0
  %1157 = vmatpush1.bf16.xpose.msra.mxu0 %v1154
  %1158 = vmatprep.subr.bf16.mxu0 0
  %1159 = vmatpush1.bf16.xpose.msra.mxu0 0
  %1160 = vmatprep.subr.bf16.mxu0 0
  %1161 = vmatpush1.bf16.xpose.msra.mxu0 0
  %1162 = vmatprep.subr.bf16.mxu0 0
  %1163 = vmatpush1.bf16.xpose.msra.mxu0 0
  %1164 = vmatprep.subr.bf16.mxu0 0
  %1165 = vmatpush1.bf16.xpose.msra.mxu0 0
  %1166 = vmatprep.subr.bf16.mxu0 0
  %1167 = vmatpush1.bf16.xpose.msra.mxu0 0
  %1168 = vmatprep.subr.bf16.mxu0 0
  %1169 = vmatpush1.bf16.xpose.msra.mxu0 0
  %1170 = vmatprep.subr.bf16.mxu0 0
  %1171 = vmatpush1.bf16.xpose.msra.mxu0 0
  %1172 = vmatprep.subr.bf16.mxu0 0
  %1173 = vmatpush1.bf16.xpose.msra.mxu0 0
  %1174 = vmatprep.subr.bf16.mxu0 0
  %1175 = vmatpush1.bf16.xpose.msra.mxu0 0
  %1176 = vmatprep.subr.bf16.mxu0 0
  %1177 = vmatpush1.bf16.xpose.msra.mxu0 0
  %1178 = vmatprep.subr.bf16.mxu0 0
  %1179 = vmatpush1.bf16.xpose.msra.mxu0 0
  %1180 = vmatprep.subr.bf16.mxu0 0
  %1181 = vmatpush1.bf16.xpose.msra.mxu0 0
  %1182 = vmatprep.subr.bf16.mxu0 0
  %1183 = vmatpush1.bf16.xpose.msra.mxu0 0
  %1184 = vmatprep.subr.bf16.mxu0 0
  %1185 = vmatpush1.bf16.xpose.msra.mxu0 0
  %1186 = vmatprep.subr.bf16.mxu0 0
  %1187 = vmatpush1.bf16.xpose.msra.mxu0 0
  %1188 = vmatprep.mubr.bf16.mxu0 0
  %1189 = vmatmul.mubr.bf16.gmra.mrb[0].mxu0 %v1151
  %v1190 = vpop.f32.mrb[0].mxu0
  %v1191 = vadd.f32 0.0, %v1190
  %v1192 = vpop.f32.mrb[0].mxu0
  %v1193 = vpop.f32.mrb[0].mxu0
  %v1194 = vpop.f32.mrb[0].mxu0
  %1195 = vdwg.mxu0
  %v1197 = vsel %vm1103, %v1081, 0
  %v1200 = vsel %vm1103, %v1089, 0
  %1202 = vmatprep.subr.bf16.mxu0 0
  %1203 = vmatpush1.bf16.xpose.msra.mxu0 %v1200
  %1204 = vmatprep.subr.bf16.mxu0 0
  %1205 = vmatpush1.bf16.xpose.msra.mxu0 0
  %1206 = vmatprep.subr.bf16.mxu0 0
  %1207 = vmatpush1.bf16.xpose.msra.mxu0 0
  %1208 = vmatprep.subr.bf16.mxu0 0
  %1209 = vmatpush1.bf16.xpose.msra.mxu0 0
  %1210 = vmatprep.subr.bf16.mxu0 0
  %1211 = vmatpush1.bf16.xpose.msra.mxu0 0
  %1212 = vmatprep.subr.bf16.mxu0 0
  %1213 = vmatpush1.bf16.xpose.msra.mxu0 0
  %1214 = vmatprep.subr.bf16.mxu0 0
  %1215 = vmatpush1.bf16.xpose.msra.mxu0 0
  %1216 = vmatprep.subr.bf16.mxu0 0
  %1217 = vmatpush1.bf16.xpose.msra.mxu0 0
  %1218 = vmatprep.subr.bf16.mxu0 0
  %1219 = vmatpush1.bf16.xpose.msra.mxu0 0
  %1220 = vmatprep.subr.bf16.mxu0 0
  %1221 = vmatpush1.bf16.xpose.msra.mxu0 0
  %1222 = vmatprep.subr.bf16.mxu0 0
  %1223 = vmatpush1.bf16.xpose.msra.mxu0 0
  %1224 = vmatprep.subr.bf16.mxu0 0
  %1225 = vmatpush1.bf16.xpose.msra.mxu0 0
  %1226 = vmatprep.subr.bf16.mxu0 0
  %1227 = vmatpush1.bf16.xpose.msra.mxu0 0
  %1228 = vmatprep.subr.bf16.mxu0 0
  %1229 = vmatpush1.bf16.xpose.msra.mxu0 0
  %1230 = vmatprep.subr.bf16.mxu0 0
  %1231 = vmatpush1.bf16.xpose.msra.mxu0 0
  %1232 = vmatprep.subr.bf16.mxu0 0
  %1233 = vmatpush1.bf16.xpose.msra.mxu0 0
  %1234 = vmatprep.mubr.bf16.mxu0 0
  %1235 = vmatmul.mubr.bf16.gmra.mrb[0].mxu0 %v1197
  %v1236 = vpop.f32.mrb[0].mxu0
  %v1237 = vadd.f32 0.0, %v1236
  %v1238 = vpop.f32.mrb[0].mxu0
  %v1239 = vpop.f32.mrb[0].mxu0
  %v1240 = vpop.f32.mrb[0].mxu0
  %1241 = vdwg.mxu0
  %v1243 = vsel %vm1103, %v1082, 0
  %v1246 = vsel %vm1103, %v1090, 0
  %1248 = vmatprep.subr.bf16.mxu0 0
  %1249 = vmatpush1.bf16.xpose.msra.mxu0 %v1246
  %1250 = vmatprep.subr.bf16.mxu0 0
  %1251 = vmatpush1.bf16.xpose.msra.mxu0 0
  %1252 = vmatprep.subr.bf16.mxu0 0
  %1253 = vmatpush1.bf16.xpose.msra.mxu0 0
  %1254 = vmatprep.subr.bf16.mxu0 0
  %1255 = vmatpush1.bf16.xpose.msra.mxu0 0
  %1256 = vmatprep.subr.bf16.mxu0 0
  %1257 = vmatpush1.bf16.xpose.msra.mxu0 0
  %1258 = vmatprep.subr.bf16.mxu0 0
  %1259 = vmatpush1.bf16.xpose.msra.mxu0 0
  %1260 = vmatprep.subr.bf16.mxu0 0
  %1261 = vmatpush1.bf16.xpose.msra.mxu0 0
  %1262 = vmatprep.subr.bf16.mxu0 0
  %1263 = vmatpush1.bf16.xpose.msra.mxu0 0
  %1264 = vmatprep.subr.bf16.mxu0 0
  %1265 = vmatpush1.bf16.xpose.msra.mxu0 0
  %1266 = vmatprep.subr.bf16.mxu0 0
  %1267 = vmatpush1.bf16.xpose.msra.mxu0 0
  %1268 = vmatprep.subr.bf16.mxu0 0
  %1269 = vmatpush1.bf16.xpose.msra.mxu0 0
  %1270 = vmatprep.subr.bf16.mxu0 0
  %1271 = vmatpush1.bf16.xpose.msra.mxu0 0
  %1272 = vmatprep.subr.bf16.mxu0 0
  %1273 = vmatpush1.bf16.xpose.msra.mxu0 0
  %1274 = vmatprep.subr.bf16.mxu0 0
  %1275 = vmatpush1.bf16.xpose.msra.mxu0 0
  %1276 = vmatprep.subr.bf16.mxu0 0
  %1277 = vmatpush1.bf16.xpose.msra.mxu0 0
  %1278 = vmatprep.subr.bf16.mxu0 0
  %1279 = vmatpush1.bf16.xpose.msra.mxu0 0
  %1280 = vmatprep.mubr.bf16.mxu0 0
  %1281 = vmatmul.mubr.bf16.gmra.mrb[0].mxu0 %v1243
  %v1282 = vpop.f32.mrb[0].mxu0
  %v1283 = vadd.f32 0.0, %v1282
  %v1284 = vpop.f32.mrb[0].mxu0
  %v1285 = vpop.f32.mrb[0].mxu0
  %v1286 = vpop.f32.mrb[0].mxu0
  %1287 = vdwg.mxu0
  %v1289 = vsel %vm1103, %v1083, 0
  %v1292 = vsel %vm1103, %v1091, 0
  %1294 = vmatprep.subr.bf16.mxu0 0
  %1295 = vmatpush1.bf16.xpose.msra.mxu0 %v1292
  %1296 = vmatprep.subr.bf16.mxu0 0
  %1297 = vmatpush1.bf16.xpose.msra.mxu0 0
  %1298 = vmatprep.subr.bf16.mxu0 0
  %1299 = vmatpush1.bf16.xpose.msra.mxu0 0
  %1300 = vmatprep.subr.bf16.mxu0 0
  %1301 = vmatpush1.bf16.xpose.msra.mxu0 0
  %1302 = vmatprep.subr.bf16.mxu0 0
  %1303 = vmatpush1.bf16.xpose.msra.mxu0 0
  %1304 = vmatprep.subr.bf16.mxu0 0
  %1305 = vmatpush1.bf16.xpose.msra.mxu0 0
  %1306 = vmatprep.subr.bf16.mxu0 0
  %1307 = vmatpush1.bf16.xpose.msra.mxu0 0
  %1308 = vmatprep.subr.bf16.mxu0 0
  %1309 = vmatpush1.bf16.xpose.msra.mxu0 0
  %1310 = vmatprep.subr.bf16.mxu0 0
  %1311 = vmatpush1.bf16.xpose.msra.mxu0 0
  %1312 = vmatprep.subr.bf16.mxu0 0
  %1313 = vmatpush1.bf16.xpose.msra.mxu0 0
  %1314 = vmatprep.subr.bf16.mxu0 0
  %1315 = vmatpush1.bf16.xpose.msra.mxu0 0
  %1316 = vmatprep.subr.bf16.mxu0 0
  %1317 = vmatpush1.bf16.xpose.msra.mxu0 0
  %1318 = vmatprep.subr.bf16.mxu0 0
  %1319 = vmatpush1.bf16.xpose.msra.mxu0 0
  %1320 = vmatprep.subr.bf16.mxu0 0
  %1321 = vmatpush1.bf16.xpose.msra.mxu0 0
  %1322 = vmatprep.subr.bf16.mxu0 0
  %1323 = vmatpush1.bf16.xpose.msra.mxu0 0
  %1324 = vmatprep.subr.bf16.mxu0 0
  %1325 = vmatpush1.bf16.xpose.msra.mxu0 0
  %1326 = vmatprep.mubr.bf16.mxu0 0
  %1327 = vmatmul.mubr.bf16.gmra.mrb[0].mxu0 %v1289
  %v1328 = vpop.f32.mrb[0].mxu0
  %v1329 = vadd.f32 0.0, %v1328
  %v1330 = vpop.f32.mrb[0].mxu0
  %v1331 = vpop.f32.mrb[0].mxu0
  %v1332 = vpop.f32.mrb[0].mxu0
  %1333 = vdwg.mxu0
  %v1335 = vsel %vm1103, %v1084, 0
  %v1338 = vsel %vm1103, %v1092, 0
  %1340 = vmatprep.subr.bf16.mxu0 0
  %1341 = vmatpush1.bf16.xpose.msra.mxu0 %v1338
  %1342 = vmatprep.subr.bf16.mxu0 0
  %1343 = vmatpush1.bf16.xpose.msra.mxu0 0
  %1344 = vmatprep.subr.bf16.mxu0 0
  %1345 = vmatpush1.bf16.xpose.msra.mxu0 0
  %1346 = vmatprep.subr.bf16.mxu0 0
  %1347 = vmatpush1.bf16.xpose.msra.mxu0 0
  %1348 = vmatprep.subr.bf16.mxu0 0
  %1349 = vmatpush1.bf16.xpose.msra.mxu0 0
  %1350 = vmatprep.subr.bf16.mxu0 0
  %1351 = vmatpush1.bf16.xpose.msra.mxu0 0
  %1352 = vmatprep.subr.bf16.mxu0 0
  %1353 = vmatpush1.bf16.xpose.msra.mxu0 0
  %1354 = vmatprep.subr.bf16.mxu0 0
  %1355 = vmatpush1.bf16.xpose.msra.mxu0 0
  %1356 = vmatprep.subr.bf16.mxu0 0
  %1357 = vmatpush1.bf16.xpose.msra.mxu0 0
  %1358 = vmatprep.subr.bf16.mxu0 0
  %1359 = vmatpush1.bf16.xpose.msra.mxu0 0
  %1360 = vmatprep.subr.bf16.mxu0 0
  %1361 = vmatpush1.bf16.xpose.msra.mxu0 0
  %1362 = vmatprep.subr.bf16.mxu0 0
  %1363 = vmatpush1.bf16.xpose.msra.mxu0 0
  %1364 = vmatprep.subr.bf16.mxu0 0
  %1365 = vmatpush1.bf16.xpose.msra.mxu0 0
  %1366 = vmatprep.subr.bf16.mxu0 0
  %1367 = vmatpush1.bf16.xpose.msra.mxu0 0
  %1368 = vmatprep.subr.bf16.mxu0 0
  %1369 = vmatpush1.bf16.xpose.msra.mxu0 0
  %1370 = vmatprep.subr.bf16.mxu0 0
  %1371 = vmatpush1.bf16.xpose.msra.mxu0 0
  %1372 = vmatprep.mubr.bf16.mxu0 0
  %1373 = vmatmul.mubr.bf16.gmra.mrb[0].mxu0 %v1335
  %v1374 = vpop.f32.mrb[0].mxu0
  %v1375 = vadd.f32 0.0, %v1374
  %v1376 = vpop.f32.mrb[0].mxu0
  %v1377 = vpop.f32.mrb[0].mxu0
  %v1378 = vpop.f32.mrb[0].mxu0
  %1379 = vdwg.mxu0
  %v1381 = vsel %vm1103, %v1085, 0
  %v1384 = vsel %vm1103, %v1093, 0
  %1386 = vmatprep.subr.bf16.mxu0 0
  %1387 = vmatpush1.bf16.xpose.msra.mxu0 %v1384
  %1388 = vmatprep.subr.bf16.mxu0 0
  %1389 = vmatpush1.bf16.xpose.msra.mxu0 0
  %1390 = vmatprep.subr.bf16.mxu0 0
  %1391 = vmatpush1.bf16.xpose.msra.mxu0 0
  %1392 = vmatprep.subr.bf16.mxu0 0
  %1393 = vmatpush1.bf16.xpose.msra.mxu0 0
  %1394 = vmatprep.subr.bf16.mxu0 0
  %1395 = vmatpush1.bf16.xpose.msra.mxu0 0
  %1396 = vmatprep.subr.bf16.mxu0 0
  %1397 = vmatpush1.bf16.xpose.msra.mxu0 0
  %1398 = vmatprep.subr.bf16.mxu0 0
  %1399 = vmatpush1.bf16.xpose.msra.mxu0 0
  %1400 = vmatprep.subr.bf16.mxu0 0
  %1401 = vmatpush1.bf16.xpose.msra.mxu0 0
  %1402 = vmatprep.subr.bf16.mxu0 0
  %1403 = vmatpush1.bf16.xpose.msra.mxu0 0
  %1404 = vmatprep.subr.bf16.mxu0 0
  %1405 = vmatpush1.bf16.xpose.msra.mxu0 0
  %1406 = vmatprep.subr.bf16.mxu0 0
  %1407 = vmatpush1.bf16.xpose.msra.mxu0 0
  %1408 = vmatprep.subr.bf16.mxu0 0
  %1409 = vmatpush1.bf16.xpose.msra.mxu0 0
  %1410 = vmatprep.subr.bf16.mxu0 0
  %1411 = vmatpush1.bf16.xpose.msra.mxu0 0
  %1412 = vmatprep.subr.bf16.mxu0 0
  %1413 = vmatpush1.bf16.xpose.msra.mxu0 0
  %1414 = vmatprep.subr.bf16.mxu0 0
  %1415 = vmatpush1.bf16.xpose.msra.mxu0 0
  %1416 = vmatprep.subr.bf16.mxu0 0
  %1417 = vmatpush1.bf16.xpose.msra.mxu0 0
  %1418 = vmatprep.mubr.bf16.mxu0 0
  %1419 = vmatmul.mubr.bf16.gmra.mrb[0].mxu0 %v1381
  %v1420 = vpop.f32.mrb[0].mxu0
  %v1421 = vadd.f32 0.0, %v1420
  %v1422 = vpop.f32.mrb[0].mxu0
  %v1423 = vpop.f32.mrb[0].mxu0
  %v1424 = vpop.f32.mrb[0].mxu0
  %1425 = vdwg.mxu0
  %v1427 = vsel %vm1103, %v1086, 0
  %v1430 = vsel %vm1103, %v1094, 0
  %1432 = vmatprep.subr.bf16.mxu0 0
  %1433 = vmatpush1.bf16.xpose.msra.mxu0 %v1430
  %1434 = vmatprep.subr.bf16.mxu0 0
  %1435 = vmatpush1.bf16.xpose.msra.mxu0 0
  %1436 = vmatprep.subr.bf16.mxu0 0
  %1437 = vmatpush1.bf16.xpose.msra.mxu0 0
  %1438 = vmatprep.subr.bf16.mxu0 0
  %1439 = vmatpush1.bf16.xpose.msra.mxu0 0
  %1440 = vmatprep.subr.bf16.mxu0 0
  %1441 = vmatpush1.bf16.xpose.msra.mxu0 0
  %1442 = vmatprep.subr.bf16.mxu0 0
  %1443 = vmatpush1.bf16.xpose.msra.mxu0 0
  %1444 = vmatprep.subr.bf16.mxu0 0
  %1445 = vmatpush1.bf16.xpose.msra.mxu0 0
  %1446 = vmatprep.subr.bf16.mxu0 0
  %1447 = vmatpush1.bf16.xpose.msra.mxu0 0
  %1448 = vmatprep.subr.bf16.mxu0 0
  %1449 = vmatpush1.bf16.xpose.msra.mxu0 0
  %1450 = vmatprep.subr.bf16.mxu0 0
  %1451 = vmatpush1.bf16.xpose.msra.mxu0 0
  %1452 = vmatprep.subr.bf16.mxu0 0
  %1453 = vmatpush1.bf16.xpose.msra.mxu0 0
  %1454 = vmatprep.subr.bf16.mxu0 0
  %1455 = vmatpush1.bf16.xpose.msra.mxu0 0
  %1456 = vmatprep.subr.bf16.mxu0 0
  %1457 = vmatpush1.bf16.xpose.msra.mxu0 0
  %1458 = vmatprep.subr.bf16.mxu0 0
  %1459 = vmatpush1.bf16.xpose.msra.mxu0 0
  %1460 = vmatprep.subr.bf16.mxu0 0
  %1461 = vmatpush1.bf16.xpose.msra.mxu0 0
  %1462 = vmatprep.subr.bf16.mxu0 0
  %1463 = vmatpush1.bf16.xpose.msra.mxu0 0
  %1464 = vmatprep.mubr.bf16.mxu0 0
  %1465 = vmatmul.mubr.bf16.gmra.mrb[0].mxu0 %v1427
  %v1466 = vpop.f32.mrb[0].mxu0
  %v1467 = vadd.f32 0.0, %v1466
  %v1468 = vpop.f32.mrb[0].mxu0
  %v1469 = vpop.f32.mrb[0].mxu0
  %v1470 = vpop.f32.mrb[0].mxu0
  %1471 = vdwg.mxu0
  %v1472 = vpack.c.bf16 %v1145, %v1145
  %v1473 = vpack.c.bf16 %v1191, %v1191
  %v1474 = vpack.c.bf16 %v1237, %v1237
  %v1475 = vpack.c.bf16 %v1283, %v1283
  %v1476 = vpack.c.bf16 %v1329, %v1329
  %v1477 = vpack.c.bf16 %v1375, %v1375
  %v1478 = vpack.c.bf16 %v1421, %v1421
  %v1479 = vpack.c.bf16 %v1467, %v1467
  %vm1480 = vcmask 64512
  %v1482 = vsel %vm1480, %v1472, 0
  %vm1484 = vcmask 1043456
  %v1486 = vsel %vm1484, %v1095, 0
  %1488 = vmatprep.subr.bf16.mxu0 0
  %1489 = vmatpush1.bf16.msra.mxu0 %v1486
  %1490 = vmatprep.subr.bf16.mxu0 0
  %1491 = vmatpush1.bf16.msra.mxu0 0
  %1492 = vmatprep.subr.bf16.mxu0 0
  %1493 = vmatpush1.bf16.msra.mxu0 0
  %1494 = vmatprep.subr.bf16.mxu0 0
  %1495 = vmatpush1.bf16.msra.mxu0 0
  %1496 = vmatprep.subr.bf16.mxu0 0
  %1497 = vmatpush1.bf16.msra.mxu0 0
  %1498 = vmatprep.subr.bf16.mxu0 0
  %1499 = vmatpush1.bf16.msra.mxu0 0
  %1500 = vmatprep.subr.bf16.mxu0 0
  %1501 = vmatpush1.bf16.msra.mxu0 0
  %1502 = vmatprep.subr.bf16.mxu0 0
  %1503 = vmatpush1.bf16.msra.mxu0 0
  %1504 = vmatprep.subr.bf16.mxu0 0
  %1505 = vmatpush1.bf16.msra.mxu0 0
  %1506 = vmatprep.subr.bf16.mxu0 0
  %1507 = vmatpush1.bf16.msra.mxu0 0
  %1508 = vmatprep.subr.bf16.mxu0 0
  %1509 = vmatpush1.bf16.msra.mxu0 0
  %1510 = vmatprep.subr.bf16.mxu0 0
  %1511 = vmatpush1.bf16.msra.mxu0 0
  %1512 = vmatprep.subr.bf16.mxu0 0
  %1513 = vmatpush1.bf16.msra.mxu0 0
  %1514 = vmatprep.subr.bf16.mxu0 0
  %1515 = vmatpush1.bf16.msra.mxu0 0
  %1516 = vmatprep.subr.bf16.mxu0 0
  %1517 = vmatpush1.bf16.msra.mxu0 0
  %1518 = vmatprep.subr.bf16.mxu0 0
  %1519 = vmatpush1.bf16.msra.mxu0 0
  %1520 = vmatprep.mubr.bf16.mxu0 0
  %1521 = vmatmul.mubr.bf16.gmra.mrb[0].mxu0 %v1482
  %v1522 = vpop.f32.mrb[0].mxu0
  %v1523 = vadd.f32 0.0, %v1522
  %v1524 = vpop.f32.mrb[0].mxu0
  %v1525 = vpop.f32.mrb[0].mxu0
  %v1526 = vpop.f32.mrb[0].mxu0
  %1527 = vdwg.mxu0
  %v1529 = vsel %vm1480, %v1473, 0
  %v1532 = vsel %vm1484, %v1096, 0
  %1534 = vmatprep.subr.bf16.mxu0 0
  %1535 = vmatpush1.bf16.msra.mxu0 %v1532
  %1536 = vmatprep.subr.bf16.mxu0 0
  %1537 = vmatpush1.bf16.msra.mxu0 0
  %1538 = vmatprep.subr.bf16.mxu0 0
  %1539 = vmatpush1.bf16.msra.mxu0 0
  %1540 = vmatprep.subr.bf16.mxu0 0
  %1541 = vmatpush1.bf16.msra.mxu0 0
  %1542 = vmatprep.subr.bf16.mxu0 0
  %1543 = vmatpush1.bf16.msra.mxu0 0
  %1544 = vmatprep.subr.bf16.mxu0 0
  %1545 = vmatpush1.bf16.msra.mxu0 0
  %1546 = vmatprep.subr.bf16.mxu0 0
  %1547 = vmatpush1.bf16.msra.mxu0 0
  %1548 = vmatprep.subr.bf16.mxu0 0
  %1549 = vmatpush1.bf16.msra.mxu0 0
  %1550 = vmatprep.subr.bf16.mxu0 0
  %1551 = vmatpush1.bf16.msra.mxu0 0
  %1552 = vmatprep.subr.bf16.mxu0 0
  %1553 = vmatpush1.bf16.msra.mxu0 0
  %1554 = vmatprep.subr.bf16.mxu0 0
  %1555 = vmatpush1.bf16.msra.mxu0 0
  %1556 = vmatprep.subr.bf16.mxu0 0
  %1557 = vmatpush1.bf16.msra.mxu0 0
  %1558 = vmatprep.subr.bf16.mxu0 0
  %1559 = vmatpush1.bf16.msra.mxu0 0
  %1560 = vmatprep.subr.bf16.mxu0 0
  %1561 = vmatpush1.bf16.msra.mxu0 0
  %1562 = vmatprep.subr.bf16.mxu0 0
  %1563 = vmatpush1.bf16.msra.mxu0 0
  %1564 = vmatprep.subr.bf16.mxu0 0
  %1565 = vmatpush1.bf16.msra.mxu0 0
  %1566 = vmatprep.mubr.bf16.mxu0 0
  %1567 = vmatmul.mubr.bf16.gmra.mrb[0].mxu0 %v1529
  %v1568 = vpop.f32.mrb[0].mxu0
  %v1569 = vadd.f32 0.0, %v1568
  %v1570 = vpop.f32.mrb[0].mxu0
  %v1571 = vpop.f32.mrb[0].mxu0
  %v1572 = vpop.f32.mrb[0].mxu0
  %1573 = vdwg.mxu0
  %v1575 = vsel %vm1480, %v1474, 0
  %v1578 = vsel %vm1484, %v1097, 0
  %1580 = vmatprep.subr.bf16.mxu0 0
  %1581 = vmatpush1.bf16.msra.mxu0 %v1578
  %1582 = vmatprep.subr.bf16.mxu0 0
  %1583 = vmatpush1.bf16.msra.mxu0 0
  %1584 = vmatprep.subr.bf16.mxu0 0
  %1585 = vmatpush1.bf16.msra.mxu0 0
  %1586 = vmatprep.subr.bf16.mxu0 0
  %1587 = vmatpush1.bf16.msra.mxu0 0
  %1588 = vmatprep.subr.bf16.mxu0 0
  %1589 = vmatpush1.bf16.msra.mxu0 0
  %1590 = vmatprep.subr.bf16.mxu0 0
  %1591 = vmatpush1.bf16.msra.mxu0 0
  %1592 = vmatprep.subr.bf16.mxu0 0
  %1593 = vmatpush1.bf16.msra.mxu0 0
  %1594 = vmatprep.subr.bf16.mxu0 0
  %1595 = vmatpush1.bf16.msra.mxu0 0
  %1596 = vmatprep.subr.bf16.mxu0 0
  %1597 = vmatpush1.bf16.msra.mxu0 0
  %1598 = vmatprep.subr.bf16.mxu0 0
  %1599 = vmatpush1.bf16.msra.mxu0 0
  %1600 = vmatprep.subr.bf16.mxu0 0
  %1601 = vmatpush1.bf16.msra.mxu0 0
  %1602 = vmatprep.subr.bf16.mxu0 0
  %1603 = vmatpush1.bf16.msra.mxu0 0
  %1604 = vmatprep.subr.bf16.mxu0 0
  %1605 = vmatpush1.bf16.msra.mxu0 0
  %1606 = vmatprep.subr.bf16.mxu0 0
  %1607 = vmatpush1.bf16.msra.mxu0 0
  %1608 = vmatprep.subr.bf16.mxu0 0
  %1609 = vmatpush1.bf16.msra.mxu0 0
  %1610 = vmatprep.subr.bf16.mxu0 0
  %1611 = vmatpush1.bf16.msra.mxu0 0
  %1612 = vmatprep.mubr.bf16.mxu0 0
  %1613 = vmatmul.mubr.bf16.gmra.mrb[0].mxu0 %v1575
  %v1614 = vpop.f32.mrb[0].mxu0
  %v1615 = vadd.f32 0.0, %v1614
  %v1616 = vpop.f32.mrb[0].mxu0
  %v1617 = vpop.f32.mrb[0].mxu0
  %v1618 = vpop.f32.mrb[0].mxu0
  %1619 = vdwg.mxu0
  %v1621 = vsel %vm1480, %v1475, 0
  %v1624 = vsel %vm1484, %v1098, 0
  %1626 = vmatprep.subr.bf16.mxu0 0
  %1627 = vmatpush1.bf16.msra.mxu0 %v1624
  %1628 = vmatprep.subr.bf16.mxu0 0
  %1629 = vmatpush1.bf16.msra.mxu0 0
  %1630 = vmatprep.subr.bf16.mxu0 0
  %1631 = vmatpush1.bf16.msra.mxu0 0
  %1632 = vmatprep.subr.bf16.mxu0 0
  %1633 = vmatpush1.bf16.msra.mxu0 0
  %1634 = vmatprep.subr.bf16.mxu0 0
  %1635 = vmatpush1.bf16.msra.mxu0 0
  %1636 = vmatprep.subr.bf16.mxu0 0
  %1637 = vmatpush1.bf16.msra.mxu0 0
  %1638 = vmatprep.subr.bf16.mxu0 0
  %1639 = vmatpush1.bf16.msra.mxu0 0
  %1640 = vmatprep.subr.bf16.mxu0 0
  %1641 = vmatpush1.bf16.msra.mxu0 0
  %1642 = vmatprep.subr.bf16.mxu0 0
  %1643 = vmatpush1.bf16.msra.mxu0 0
  %1644 = vmatprep.subr.bf16.mxu0 0
  %1645 = vmatpush1.bf16.msra.mxu0 0
  %1646 = vmatprep.subr.bf16.mxu0 0
  %1647 = vmatpush1.bf16.msra.mxu0 0
  %1648 = vmatprep.subr.bf16.mxu0 0
  %1649 = vmatpush1.bf16.msra.mxu0 0
  %1650 = vmatprep.subr.bf16.mxu0 0
  %1651 = vmatpush1.bf16.msra.mxu0 0
  %1652 = vmatprep.subr.bf16.mxu0 0
  %1653 = vmatpush1.bf16.msra.mxu0 0
  %1654 = vmatprep.subr.bf16.mxu0 0
  %1655 = vmatpush1.bf16.msra.mxu0 0
  %1656 = vmatprep.subr.bf16.mxu0 0
  %1657 = vmatpush1.bf16.msra.mxu0 0
  %1658 = vmatprep.mubr.bf16.mxu0 0
  %1659 = vmatmul.mubr.bf16.gmra.mrb[0].mxu0 %v1621
  %v1660 = vpop.f32.mrb[0].mxu0
  %v1661 = vadd.f32 0.0, %v1660
  %v1662 = vpop.f32.mrb[0].mxu0
  %v1663 = vpop.f32.mrb[0].mxu0
  %v1664 = vpop.f32.mrb[0].mxu0
  %1665 = vdwg.mxu0
  %v1667 = vsel %vm1480, %v1476, 0
  %v1670 = vsel %vm1484, %v1099, 0
  %1672 = vmatprep.subr.bf16.mxu0 0
  %1673 = vmatpush1.bf16.msra.mxu0 %v1670
  %1674 = vmatprep.subr.bf16.mxu0 0
  %1675 = vmatpush1.bf16.msra.mxu0 0
  %1676 = vmatprep.subr.bf16.mxu0 0
  %1677 = vmatpush1.bf16.msra.mxu0 0
  %1678 = vmatprep.subr.bf16.mxu0 0
  %1679 = vmatpush1.bf16.msra.mxu0 0
  %1680 = vmatprep.subr.bf16.mxu0 0
  %1681 = vmatpush1.bf16.msra.mxu0 0
  %1682 = vmatprep.subr.bf16.mxu0 0
  %1683 = vmatpush1.bf16.msra.mxu0 0
  %1684 = vmatprep.subr.bf16.mxu0 0
  %1685 = vmatpush1.bf16.msra.mxu0 0
  %1686 = vmatprep.subr.bf16.mxu0 0
  %1687 = vmatpush1.bf16.msra.mxu0 0
  %1688 = vmatprep.subr.bf16.mxu0 0
  %1689 = vmatpush1.bf16.msra.mxu0 0
  %1690 = vmatprep.subr.bf16.mxu0 0
  %1691 = vmatpush1.bf16.msra.mxu0 0
  %1692 = vmatprep.subr.bf16.mxu0 0
  %1693 = vmatpush1.bf16.msra.mxu0 0
  %1694 = vmatprep.subr.bf16.mxu0 0
  %1695 = vmatpush1.bf16.msra.mxu0 0
  %1696 = vmatprep.subr.bf16.mxu0 0
  %1697 = vmatpush1.bf16.msra.mxu0 0
  %1698 = vmatprep.subr.bf16.mxu0 0
  %1699 = vmatpush1.bf16.msra.mxu0 0
  %1700 = vmatprep.subr.bf16.mxu0 0
  %1701 = vmatpush1.bf16.msra.mxu0 0
  %1702 = vmatprep.subr.bf16.mxu0 0
  %1703 = vmatpush1.bf16.msra.mxu0 0
  %1704 = vmatprep.mubr.bf16.mxu0 0
  %1705 = vmatmul.mubr.bf16.gmra.mrb[0].mxu0 %v1667
  %v1706 = vpop.f32.mrb[0].mxu0
  %v1707 = vadd.f32 0.0, %v1706
  %v1708 = vpop.f32.mrb[0].mxu0
  %v1709 = vpop.f32.mrb[0].mxu0
  %v1710 = vpop.f32.mrb[0].mxu0
  %1711 = vdwg.mxu0
  %v1713 = vsel %vm1480, %v1477, 0
  %v1716 = vsel %vm1484, %v1100, 0
  %1718 = vmatprep.subr.bf16.mxu0 0
  %1719 = vmatpush1.bf16.msra.mxu0 %v1716
  %1720 = vmatprep.subr.bf16.mxu0 0
  %1721 = vmatpush1.bf16.msra.mxu0 0
  %1722 = vmatprep.subr.bf16.mxu0 0
  %1723 = vmatpush1.bf16.msra.mxu0 0
  %1724 = vmatprep.subr.bf16.mxu0 0
  %1725 = vmatpush1.bf16.msra.mxu0 0
  %1726 = vmatprep.subr.bf16.mxu0 0
  %1727 = vmatpush1.bf16.msra.mxu0 0
  %1728 = vmatprep.subr.bf16.mxu0 0
  %1729 = vmatpush1.bf16.msra.mxu0 0
  %1730 = vmatprep.subr.bf16.mxu0 0
  %1731 = vmatpush1.bf16.msra.mxu0 0
  %1732 = vmatprep.subr.bf16.mxu0 0
  %1733 = vmatpush1.bf16.msra.mxu0 0
  %1734 = vmatprep.subr.bf16.mxu0 0
  %1735 = vmatpush1.bf16.msra.mxu0 0
  %1736 = vmatprep.subr.bf16.mxu0 0
  %1737 = vmatpush1.bf16.msra.mxu0 0
  %1738 = vmatprep.subr.bf16.mxu0 0
  %1739 = vmatpush1.bf16.msra.mxu0 0
  %1740 = vmatprep.subr.bf16.mxu0 0
  %1741 = vmatpush1.bf16.msra.mxu0 0
  %1742 = vmatprep.subr.bf16.mxu0 0
  %1743 = vmatpush1.bf16.msra.mxu0 0
  %1744 = vmatprep.subr.bf16.mxu0 0
  %1745 = vmatpush1.bf16.msra.mxu0 0
  %1746 = vmatprep.subr.bf16.mxu0 0
  %1747 = vmatpush1.bf16.msra.mxu0 0
  %1748 = vmatprep.subr.bf16.mxu0 0
  %1749 = vmatpush1.bf16.msra.mxu0 0
  %1750 = vmatprep.mubr.bf16.mxu0 0
  %1751 = vmatmul.mubr.bf16.gmra.mrb[0].mxu0 %v1713
  %v1752 = vpop.f32.mrb[0].mxu0
  %v1753 = vadd.f32 0.0, %v1752
  %v1754 = vpop.f32.mrb[0].mxu0
  %v1755 = vpop.f32.mrb[0].mxu0
  %v1756 = vpop.f32.mrb[0].mxu0
  %1757 = vdwg.mxu0
  %v1759 = vsel %vm1480, %v1478, 0
  %v1762 = vsel %vm1484, %v1101, 0
  %1764 = vmatprep.subr.bf16.mxu0 0
  %1765 = vmatpush1.bf16.msra.mxu0 %v1762
  %1766 = vmatprep.subr.bf16.mxu0 0
  %1767 = vmatpush1.bf16.msra.mxu0 0
  %1768 = vmatprep.subr.bf16.mxu0 0
  %1769 = vmatpush1.bf16.msra.mxu0 0
  %1770 = vmatprep.subr.bf16.mxu0 0
  %1771 = vmatpush1.bf16.msra.mxu0 0
  %1772 = vmatprep.subr.bf16.mxu0 0
  %1773 = vmatpush1.bf16.msra.mxu0 0
  %1774 = vmatprep.subr.bf16.mxu0 0
  %1775 = vmatpush1.bf16.msra.mxu0 0
  %1776 = vmatprep.subr.bf16.mxu0 0
  %1777 = vmatpush1.bf16.msra.mxu0 0
  %1778 = vmatprep.subr.bf16.mxu0 0
  %1779 = vmatpush1.bf16.msra.mxu0 0
  %1780 = vmatprep.subr.bf16.mxu0 0
  %1781 = vmatpush1.bf16.msra.mxu0 0
  %1782 = vmatprep.subr.bf16.mxu0 0
  %1783 = vmatpush1.bf16.msra.mxu0 0
  %1784 = vmatprep.subr.bf16.mxu0 0
  %1785 = vmatpush1.bf16.msra.mxu0 0
  %1786 = vmatprep.subr.bf16.mxu0 0
  %1787 = vmatpush1.bf16.msra.mxu0 0
  %1788 = vmatprep.subr.bf16.mxu0 0
  %1789 = vmatpush1.bf16.msra.mxu0 0
  %1790 = vmatprep.subr.bf16.mxu0 0
  %1791 = vmatpush1.bf16.msra.mxu0 0
  %1792 = vmatprep.subr.bf16.mxu0 0
  %1793 = vmatpush1.bf16.msra.mxu0 0
  %1794 = vmatprep.subr.bf16.mxu0 0
  %1795 = vmatpush1.bf16.msra.mxu0 0
  %1796 = vmatprep.mubr.bf16.mxu0 0
  %1797 = vmatmul.mubr.bf16.gmra.mrb[0].mxu0 %v1759
  %v1798 = vpop.f32.mrb[0].mxu0
  %v1799 = vadd.f32 0.0, %v1798
  %v1800 = vpop.f32.mrb[0].mxu0
  %v1801 = vpop.f32.mrb[0].mxu0
  %v1802 = vpop.f32.mrb[0].mxu0
  %1803 = vdwg.mxu0
  %v1805 = vsel %vm1480, %v1479, 0
  %v1808 = vsel %vm1484, %v1102, 0
  %1810 = vmatprep.subr.bf16.mxu0 0
  %1811 = vmatpush1.bf16.msra.mxu0 %v1808
  %1812 = vmatprep.subr.bf16.mxu0 0
  %1813 = vmatpush1.bf16.msra.mxu0 0
  %1814 = vmatprep.subr.bf16.mxu0 0
  %1815 = vmatpush1.bf16.msra.mxu0 0
  %1816 = vmatprep.subr.bf16.mxu0 0
  %1817 = vmatpush1.bf16.msra.mxu0 0
  %1818 = vmatprep.subr.bf16.mxu0 0
  %1819 = vmatpush1.bf16.msra.mxu0 0
  %1820 = vmatprep.subr.bf16.mxu0 0
  %1821 = vmatpush1.bf16.msra.mxu0 0
  %1822 = vmatprep.subr.bf16.mxu0 0
  %1823 = vmatpush1.bf16.msra.mxu0 0
  %1824 = vmatprep.subr.bf16.mxu0 0
  %1825 = vmatpush1.bf16.msra.mxu0 0
  %1826 = vmatprep.subr.bf16.mxu0 0
  %1827 = vmatpush1.bf16.msra.mxu0 0
  %1828 = vmatprep.subr.bf16.mxu0 0
  %1829 = vmatpush1.bf16.msra.mxu0 0
  %1830 = vmatprep.subr.bf16.mxu0 0
  %1831 = vmatpush1.bf16.msra.mxu0 0
  %1832 = vmatprep.subr.bf16.mxu0 0
  %1833 = vmatpush1.bf16.msra.mxu0 0
  %1834 = vmatprep.subr.bf16.mxu0 0
  %1835 = vmatpush1.bf16.msra.mxu0 0
  %1836 = vmatprep.subr.bf16.mxu0 0
  %1837 = vmatpush1.bf16.msra.mxu0 0
  %1838 = vmatprep.subr.bf16.mxu0 0
  %1839 = vmatpush1.bf16.msra.mxu0 0
  %1840 = vmatprep.subr.bf16.mxu0 0
  %1841 = vmatpush1.bf16.msra.mxu0 0
  %1842 = vmatprep.mubr.bf16.mxu0 0
  %1843 = vmatmul.mubr.bf16.gmra.mrb[0].mxu0 %v1805
  %v1844 = vpop.f32.mrb[0].mxu0
  %v1845 = vadd.f32 0.0, %v1844
  %v1846 = vpop.f32.mrb[0].mxu0
  %v1847 = vpop.f32.mrb[0].mxu0
  %v1848 = vpop.f32.mrb[0].mxu0
  %1849 = vdwg.mxu0
  %v1851 = vunpack.c.l.b16 %v1079
  %v1852 = vpack.c.b16 %v1851, %v1851
  %1853 = vrot.lane.b32.xlu0 %v1852, 112
  %v1854 = vpop.permute.xlu0 %1853
  %v1856 = vunpack.c.l.b16 %v1087
  %v1857 = vpack.c.b16 %v1856, %v1856
  %1858 = vrot.lane.b32.xlu0 %v1857, 112
  %v1859 = vpop.permute.xlu0 %1858
  %v1861 = vsel %vm1103, %v1854, 0
  %v1864 = vsel %vm1103, %v1859, 0
  %1866 = vmatprep.subr.bf16.mxu0 0
  %1867 = vmatpush1.bf16.xpose.msra.mxu0 %v1864
  %1868 = vmatprep.subr.bf16.mxu0 0
  %1869 = vmatpush1.bf16.xpose.msra.mxu0 0
  %1870 = vmatprep.subr.bf16.mxu0 0
  %1871 = vmatpush1.bf16.xpose.msra.mxu0 0
  %1872 = vmatprep.subr.bf16.mxu0 0
  %1873 = vmatpush1.bf16.xpose.msra.mxu0 0
  %1874 = vmatprep.subr.bf16.mxu0 0
  %1875 = vmatpush1.bf16.xpose.msra.mxu0 0
  %1876 = vmatprep.subr.bf16.mxu0 0
  %1877 = vmatpush1.bf16.xpose.msra.mxu0 0
  %1878 = vmatprep.subr.bf16.mxu0 0
  %1879 = vmatpush1.bf16.xpose.msra.mxu0 0
  %1880 = vmatprep.subr.bf16.mxu0 0
  %1881 = vmatpush1.bf16.xpose.msra.mxu0 0
  %1882 = vmatprep.subr.bf16.mxu0 0
  %1883 = vmatpush1.bf16.xpose.msra.mxu0 0
  %1884 = vmatprep.subr.bf16.mxu0 0
  %1885 = vmatpush1.bf16.xpose.msra.mxu0 0
  %1886 = vmatprep.subr.bf16.mxu0 0
  %1887 = vmatpush1.bf16.xpose.msra.mxu0 0
  %1888 = vmatprep.subr.bf16.mxu0 0
  %1889 = vmatpush1.bf16.xpose.msra.mxu0 0
  %1890 = vmatprep.subr.bf16.mxu0 0
  %1891 = vmatpush1.bf16.xpose.msra.mxu0 0
  %1892 = vmatprep.subr.bf16.mxu0 0
  %1893 = vmatpush1.bf16.xpose.msra.mxu0 0
  %1894 = vmatprep.subr.bf16.mxu0 0
  %1895 = vmatpush1.bf16.xpose.msra.mxu0 0
  %1896 = vmatprep.subr.bf16.mxu0 0
  %1897 = vmatpush1.bf16.xpose.msra.mxu0 0
  %1898 = vmatprep.mubr.bf16.mxu0 0
  %1899 = vmatmul.mubr.bf16.gmra.mrb[0].mxu0 %v1861
  %v1900 = vpop.f32.mrb[0].mxu0
  %v1901 = vadd.f32 0.0, %v1900
  %v1902 = vpop.f32.mrb[0].mxu0
  %v1903 = vpop.f32.mrb[0].mxu0
  %v1904 = vpop.f32.mrb[0].mxu0
  %1905 = vdwg.mxu0
  %v1907 = vunpack.c.l.b16 %v1080
  %v1908 = vpack.c.b16 %v1907, %v1907
  %1909 = vrot.lane.b32.xlu0 %v1908, 112
  %v1910 = vpop.permute.xlu0 %1909
  %v1912 = vunpack.c.l.b16 %v1088
  %v1913 = vpack.c.b16 %v1912, %v1912
  %1914 = vrot.lane.b32.xlu0 %v1913, 112
  %v1915 = vpop.permute.xlu0 %1914
  %v1917 = vsel %vm1103, %v1910, 0
  %v1920 = vsel %vm1103, %v1915, 0
  %1922 = vmatprep.subr.bf16.mxu0 0
  %1923 = vmatpush1.bf16.xpose.msra.mxu0 %v1920
  %1924 = vmatprep.subr.bf16.mxu0 0
  %1925 = vmatpush1.bf16.xpose.msra.mxu0 0
  %1926 = vmatprep.subr.bf16.mxu0 0
  %1927 = vmatpush1.bf16.xpose.msra.mxu0 0
  %1928 = vmatprep.subr.bf16.mxu0 0
  %1929 = vmatpush1.bf16.xpose.msra.mxu0 0
  %1930 = vmatprep.subr.bf16.mxu0 0
  %1931 = vmatpush1.bf16.xpose.msra.mxu0 0
  %1932 = vmatprep.subr.bf16.mxu0 0
  %1933 = vmatpush1.bf16.xpose.msra.mxu0 0
  %1934 = vmatprep.subr.bf16.mxu0 0
  %1935 = vmatpush1.bf16.xpose.msra.mxu0 0
  %1936 = vmatprep.subr.bf16.mxu0 0
  %1937 = vmatpush1.bf16.xpose.msra.mxu0 0
  %1938 = vmatprep.subr.bf16.mxu0 0
  %1939 = vmatpush1.bf16.xpose.msra.mxu0 0
  %1940 = vmatprep.subr.bf16.mxu0 0
  %1941 = vmatpush1.bf16.xpose.msra.mxu0 0
  %1942 = vmatprep.subr.bf16.mxu0 0
  %1943 = vmatpush1.bf16.xpose.msra.mxu0 0
  %1944 = vmatprep.subr.bf16.mxu0 0
  %1945 = vmatpush1.bf16.xpose.msra.mxu0 0
  %1946 = vmatprep.subr.bf16.mxu0 0
  %1947 = vmatpush1.bf16.xpose.msra.mxu0 0
  %1948 = vmatprep.subr.bf16.mxu0 0
  %1949 = vmatpush1.bf16.xpose.msra.mxu0 0
  %1950 = vmatprep.subr.bf16.mxu0 0
  %1951 = vmatpush1.bf16.xpose.msra.mxu0 0
  %1952 = vmatprep.subr.bf16.mxu0 0
  %1953 = vmatpush1.bf16.xpose.msra.mxu0 0
  %1954 = vmatprep.mubr.bf16.mxu0 0
  %1955 = vmatmul.mubr.bf16.gmra.mrb[0].mxu0 %v1917
  %v1956 = vpop.f32.mrb[0].mxu0
  %v1957 = vadd.f32 0.0, %v1956
  %v1958 = vpop.f32.mrb[0].mxu0
  %v1959 = vpop.f32.mrb[0].mxu0
  %v1960 = vpop.f32.mrb[0].mxu0
  %1961 = vdwg.mxu0
  %v1963 = vunpack.c.l.b16 %v1081
  %v1964 = vpack.c.b16 %v1963, %v1963
  %1965 = vrot.lane.b32.xlu0 %v1964, 112
  %v1966 = vpop.permute.xlu0 %1965
  %v1968 = vunpack.c.l.b16 %v1089
  %v1969 = vpack.c.b16 %v1968, %v1968
  %1970 = vrot.lane.b32.xlu0 %v1969, 112
  %v1971 = vpop.permute.xlu0 %1970
  %v1973 = vsel %vm1103, %v1966, 0
  %v1976 = vsel %vm1103, %v1971, 0
  %1978 = vmatprep.subr.bf16.mxu0 0
  %1979 = vmatpush1.bf16.xpose.msra.mxu0 %v1976
  %1980 = vmatprep.subr.bf16.mxu0 0
  %1981 = vmatpush1.bf16.xpose.msra.mxu0 0
  %1982 = vmatprep.subr.bf16.mxu0 0
  %1983 = vmatpush1.bf16.xpose.msra.mxu0 0
  %1984 = vmatprep.subr.bf16.mxu0 0
  %1985 = vmatpush1.bf16.xpose.msra.mxu0 0
  %1986 = vmatprep.subr.bf16.mxu0 0
  %1987 = vmatpush1.bf16.xpose.msra.mxu0 0
  %1988 = vmatprep.subr.bf16.mxu0 0
  %1989 = vmatpush1.bf16.xpose.msra.mxu0 0
  %1990 = vmatprep.subr.bf16.mxu0 0
  %1991 = vmatpush1.bf16.xpose.msra.mxu0 0
  %1992 = vmatprep.subr.bf16.mxu0 0
  %1993 = vmatpush1.bf16.xpose.msra.mxu0 0
  %1994 = vmatprep.subr.bf16.mxu0 0
  %1995 = vmatpush1.bf16.xpose.msra.mxu0 0
  %1996 = vmatprep.subr.bf16.mxu0 0
  %1997 = vmatpush1.bf16.xpose.msra.mxu0 0
  %1998 = vmatprep.subr.bf16.mxu0 0
  %1999 = vmatpush1.bf16.xpose.msra.mxu0 0
  %2000 = vmatprep.subr.bf16.mxu0 0
  %2001 = vmatpush1.bf16.xpose.msra.mxu0 0
  %2002 = vmatprep.subr.bf16.mxu0 0
  %2003 = vmatpush1.bf16.xpose.msra.mxu0 0
  %2004 = vmatprep.subr.bf16.mxu0 0
  %2005 = vmatpush1.bf16.xpose.msra.mxu0 0
  %2006 = vmatprep.subr.bf16.mxu0 0
  %2007 = vmatpush1.bf16.xpose.msra.mxu0 0
  %2008 = vmatprep.subr.bf16.mxu0 0
  %2009 = vmatpush1.bf16.xpose.msra.mxu0 0
  %2010 = vmatprep.mubr.bf16.mxu0 0
  %2011 = vmatmul.mubr.bf16.gmra.mrb[0].mxu0 %v1973
  %v2012 = vpop.f32.mrb[0].mxu0
  %v2013 = vadd.f32 0.0, %v2012
  %v2014 = vpop.f32.mrb[0].mxu0
  %v2015 = vpop.f32.mrb[0].mxu0
  %v2016 = vpop.f32.mrb[0].mxu0
  %2017 = vdwg.mxu0
  %v2019 = vunpack.c.l.b16 %v1082
  %v2020 = vpack.c.b16 %v2019, %v2019
  %2021 = vrot.lane.b32.xlu0 %v2020, 112
  %v2022 = vpop.permute.xlu0 %2021
  %v2024 = vunpack.c.l.b16 %v1090
  %v2025 = vpack.c.b16 %v2024, %v2024
  %2026 = vrot.lane.b32.xlu0 %v2025, 112
  %v2027 = vpop.permute.xlu0 %2026
  %v2029 = vsel %vm1103, %v2022, 0
  %v2032 = vsel %vm1103, %v2027, 0
  %2034 = vmatprep.subr.bf16.mxu0 0
  %2035 = vmatpush1.bf16.xpose.msra.mxu0 %v2032
  %2036 = vmatprep.subr.bf16.mxu0 0
  %2037 = vmatpush1.bf16.xpose.msra.mxu0 0
  %2038 = vmatprep.subr.bf16.mxu0 0
  %2039 = vmatpush1.bf16.xpose.msra.mxu0 0
  %2040 = vmatprep.subr.bf16.mxu0 0
  %2041 = vmatpush1.bf16.xpose.msra.mxu0 0
  %2042 = vmatprep.subr.bf16.mxu0 0
  %2043 = vmatpush1.bf16.xpose.msra.mxu0 0
  %2044 = vmatprep.subr.bf16.mxu0 0
  %2045 = vmatpush1.bf16.xpose.msra.mxu0 0
  %2046 = vmatprep.subr.bf16.mxu0 0
  %2047 = vmatpush1.bf16.xpose.msra.mxu0 0
  %2048 = vmatprep.subr.bf16.mxu0 0
  %2049 = vmatpush1.bf16.xpose.msra.mxu0 0
  %2050 = vmatprep.subr.bf16.mxu0 0
  %2051 = vmatpush1.bf16.xpose.msra.mxu0 0
  %2052 = vmatprep.subr.bf16.mxu0 0
  %2053 = vmatpush1.bf16.xpose.msra.mxu0 0
  %2054 = vmatprep.subr.bf16.mxu0 0
  %2055 = vmatpush1.bf16.xpose.msra.mxu0 0
  %2056 = vmatprep.subr.bf16.mxu0 0
  %2057 = vmatpush1.bf16.xpose.msra.mxu0 0
  %2058 = vmatprep.subr.bf16.mxu0 0
  %2059 = vmatpush1.bf16.xpose.msra.mxu0 0
  %2060 = vmatprep.subr.bf16.mxu0 0
  %2061 = vmatpush1.bf16.xpose.msra.mxu0 0
  %2062 = vmatprep.subr.bf16.mxu0 0
  %2063 = vmatpush1.bf16.xpose.msra.mxu0 0
  %2064 = vmatprep.subr.bf16.mxu0 0
  %2065 = vmatpush1.bf16.xpose.msra.mxu0 0
  %2066 = vmatprep.mubr.bf16.mxu0 0
  %2067 = vmatmul.mubr.bf16.gmra.mrb[0].mxu0 %v2029
  %v2068 = vpop.f32.mrb[0].mxu0
  %v2069 = vadd.f32 0.0, %v2068
  %v2070 = vpop.f32.mrb[0].mxu0
  %v2071 = vpop.f32.mrb[0].mxu0
  %v2072 = vpop.f32.mrb[0].mxu0
  %2073 = vdwg.mxu0
  %v2075 = vunpack.c.l.b16 %v1083
  %v2076 = vpack.c.b16 %v2075, %v2075
  %2077 = vrot.lane.b32.xlu0 %v2076, 112
  %v2078 = vpop.permute.xlu0 %2077
  %v2080 = vunpack.c.l.b16 %v1091
  %v2081 = vpack.c.b16 %v2080, %v2080
  %2082 = vrot.lane.b32.xlu0 %v2081, 112
  %v2083 = vpop.permute.xlu0 %2082
  %v2085 = vsel %vm1103, %v2078, 0
  %v2088 = vsel %vm1103, %v2083, 0
  %2090 = vmatprep.subr.bf16.mxu0 0
  %2091 = vmatpush1.bf16.xpose.msra.mxu0 %v2088
  %2092 = vmatprep.subr.bf16.mxu0 0
  %2093 = vmatpush1.bf16.xpose.msra.mxu0 0
  %2094 = vmatprep.subr.bf16.mxu0 0
  %2095 = vmatpush1.bf16.xpose.msra.mxu0 0
  %2096 = vmatprep.subr.bf16.mxu0 0
  %2097 = vmatpush1.bf16.xpose.msra.mxu0 0
  %2098 = vmatprep.subr.bf16.mxu0 0
  %2099 = vmatpush1.bf16.xpose.msra.mxu0 0
  %2100 = vmatprep.subr.bf16.mxu0 0
  %2101 = vmatpush1.bf16.xpose.msra.mxu0 0
  %2102 = vmatprep.subr.bf16.mxu0 0
  %2103 = vmatpush1.bf16.xpose.msra.mxu0 0
  %2104 = vmatprep.subr.bf16.mxu0 0
  %2105 = vmatpush1.bf16.xpose.msra.mxu0 0
  %2106 = vmatprep.subr.bf16.mxu0 0
  %2107 = vmatpush1.bf16.xpose.msra.mxu0 0
  %2108 = vmatprep.subr.bf16.mxu0 0
  %2109 = vmatpush1.bf16.xpose.msra.mxu0 0
  %2110 = vmatprep.subr.bf16.mxu0 0
  %2111 = vmatpush1.bf16.xpose.msra.mxu0 0
  %2112 = vmatprep.subr.bf16.mxu0 0
  %2113 = vmatpush1.bf16.xpose.msra.mxu0 0
  %2114 = vmatprep.subr.bf16.mxu0 0
  %2115 = vmatpush1.bf16.xpose.msra.mxu0 0
  %2116 = vmatprep.subr.bf16.mxu0 0
  %2117 = vmatpush1.bf16.xpose.msra.mxu0 0
  %2118 = vmatprep.subr.bf16.mxu0 0
  %2119 = vmatpush1.bf16.xpose.msra.mxu0 0
  %2120 = vmatprep.subr.bf16.mxu0 0
  %2121 = vmatpush1.bf16.xpose.msra.mxu0 0
  %2122 = vmatprep.mubr.bf16.mxu0 0
  %2123 = vmatmul.mubr.bf16.gmra.mrb[0].mxu0 %v2085
  %v2124 = vpop.f32.mrb[0].mxu0
  %v2125 = vadd.f32 0.0, %v2124
  %v2126 = vpop.f32.mrb[0].mxu0
  %v2127 = vpop.f32.mrb[0].mxu0
  %v2128 = vpop.f32.mrb[0].mxu0
  %2129 = vdwg.mxu0
  %v2131 = vunpack.c.l.b16 %v1084
  %v2132 = vpack.c.b16 %v2131, %v2131
  %2133 = vrot.lane.b32.xlu0 %v2132, 112
  %v2134 = vpop.permute.xlu0 %2133
  %v2136 = vunpack.c.l.b16 %v1092
  %v2137 = vpack.c.b16 %v2136, %v2136
  %2138 = vrot.lane.b32.xlu0 %v2137, 112
  %v2139 = vpop.permute.xlu0 %2138
  %v2141 = vsel %vm1103, %v2134, 0
  %v2144 = vsel %vm1103, %v2139, 0
  %2146 = vmatprep.subr.bf16.mxu0 0
  %2147 = vmatpush1.bf16.xpose.msra.mxu0 %v2144
  %2148 = vmatprep.subr.bf16.mxu0 0
  %2149 = vmatpush1.bf16.xpose.msra.mxu0 0
  %2150 = vmatprep.subr.bf16.mxu0 0
  %2151 = vmatpush1.bf16.xpose.msra.mxu0 0
  %2152 = vmatprep.subr.bf16.mxu0 0
  %2153 = vmatpush1.bf16.xpose.msra.mxu0 0
  %2154 = vmatprep.subr.bf16.mxu0 0
  %2155 = vmatpush1.bf16.xpose.msra.mxu0 0
  %2156 = vmatprep.subr.bf16.mxu0 0
  %2157 = vmatpush1.bf16.xpose.msra.mxu0 0
  %2158 = vmatprep.subr.bf16.mxu0 0
  %2159 = vmatpush1.bf16.xpose.msra.mxu0 0
  %2160 = vmatprep.subr.bf16.mxu0 0
  %2161 = vmatpush1.bf16.xpose.msra.mxu0 0
  %2162 = vmatprep.subr.bf16.mxu0 0
  %2163 = vmatpush1.bf16.xpose.msra.mxu0 0
  %2164 = vmatprep.subr.bf16.mxu0 0
  %2165 = vmatpush1.bf16.xpose.msra.mxu0 0
  %2166 = vmatprep.subr.bf16.mxu0 0
  %2167 = vmatpush1.bf16.xpose.msra.mxu0 0
  %2168 = vmatprep.subr.bf16.mxu0 0
  %2169 = vmatpush1.bf16.xpose.msra.mxu0 0
  %2170 = vmatprep.subr.bf16.mxu0 0
  %2171 = vmatpush1.bf16.xpose.msra.mxu0 0
  %2172 = vmatprep.subr.bf16.mxu0 0
  %2173 = vmatpush1.bf16.xpose.msra.mxu0 0
  %2174 = vmatprep.subr.bf16.mxu0 0
  %2175 = vmatpush1.bf16.xpose.msra.mxu0 0
  %2176 = vmatprep.subr.bf16.mxu0 0
  %2177 = vmatpush1.bf16.xpose.msra.mxu0 0
  %2178 = vmatprep.mubr.bf16.mxu0 0
  %2179 = vmatmul.mubr.bf16.gmra.mrb[0].mxu0 %v2141
  %v2180 = vpop.f32.mrb[0].mxu0
  %v2181 = vadd.f32 0.0, %v2180
  %v2182 = vpop.f32.mrb[0].mxu0
  %v2183 = vpop.f32.mrb[0].mxu0
  %v2184 = vpop.f32.mrb[0].mxu0
  %2185 = vdwg.mxu0
  %v2187 = vunpack.c.l.b16 %v1085
  %v2188 = vpack.c.b16 %v2187, %v2187
  %2189 = vrot.lane.b32.xlu0 %v2188, 112
  %v2190 = vpop.permute.xlu0 %2189
  %v2192 = vunpack.c.l.b16 %v1093
  %v2193 = vpack.c.b16 %v2192, %v2192
  %2194 = vrot.lane.b32.xlu0 %v2193, 112
  %v2195 = vpop.permute.xlu0 %2194
  %v2197 = vsel %vm1103, %v2190, 0
  %v2200 = vsel %vm1103, %v2195, 0
  %2202 = vmatprep.subr.bf16.mxu0 0
  %2203 = vmatpush1.bf16.xpose.msra.mxu0 %v2200
  %2204 = vmatprep.subr.bf16.mxu0 0
  %2205 = vmatpush1.bf16.xpose.msra.mxu0 0
  %2206 = vmatprep.subr.bf16.mxu0 0
  %2207 = vmatpush1.bf16.xpose.msra.mxu0 0
  %2208 = vmatprep.subr.bf16.mxu0 0
  %2209 = vmatpush1.bf16.xpose.msra.mxu0 0
  %2210 = vmatprep.subr.bf16.mxu0 0
  %2211 = vmatpush1.bf16.xpose.msra.mxu0 0
  %2212 = vmatprep.subr.bf16.mxu0 0
  %2213 = vmatpush1.bf16.xpose.msra.mxu0 0
  %2214 = vmatprep.subr.bf16.mxu0 0
  %2215 = vmatpush1.bf16.xpose.msra.mxu0 0
  %2216 = vmatprep.subr.bf16.mxu0 0
  %2217 = vmatpush1.bf16.xpose.msra.mxu0 0
  %2218 = vmatprep.subr.bf16.mxu0 0
  %2219 = vmatpush1.bf16.xpose.msra.mxu0 0
  %2220 = vmatprep.subr.bf16.mxu0 0
  %2221 = vmatpush1.bf16.xpose.msra.mxu0 0
  %2222 = vmatprep.subr.bf16.mxu0 0
  %2223 = vmatpush1.bf16.xpose.msra.mxu0 0
  %2224 = vmatprep.subr.bf16.mxu0 0
  %2225 = vmatpush1.bf16.xpose.msra.mxu0 0
  %2226 = vmatprep.subr.bf16.mxu0 0
  %2227 = vmatpush1.bf16.xpose.msra.mxu0 0
  %2228 = vmatprep.subr.bf16.mxu0 0
  %2229 = vmatpush1.bf16.xpose.msra.mxu0 0
  %2230 = vmatprep.subr.bf16.mxu0 0
  %2231 = vmatpush1.bf16.xpose.msra.mxu0 0
  %2232 = vmatprep.subr.bf16.mxu0 0
  %2233 = vmatpush1.bf16.xpose.msra.mxu0 0
  %2234 = vmatprep.mubr.bf16.mxu0 0
  %2235 = vmatmul.mubr.bf16.gmra.mrb[0].mxu0 %v2197
  %v2236 = vpop.f32.mrb[0].mxu0
  %v2237 = vadd.f32 0.0, %v2236
  %v2238 = vpop.f32.mrb[0].mxu0
  %v2239 = vpop.f32.mrb[0].mxu0
  %v2240 = vpop.f32.mrb[0].mxu0
  %2241 = vdwg.mxu0
  %v2243 = vunpack.c.l.b16 %v1086
  %v2244 = vpack.c.b16 %v2243, %v2243
  %2245 = vrot.lane.b32.xlu0 %v2244, 112
  %v2246 = vpop.permute.xlu0 %2245
  %v2248 = vunpack.c.l.b16 %v1094
  %v2249 = vpack.c.b16 %v2248, %v2248
  %2250 = vrot.lane.b32.xlu0 %v2249, 112
  %v2251 = vpop.permute.xlu0 %2250
  %v2253 = vsel %vm1103, %v2246, 0
  %v2256 = vsel %vm1103, %v2251, 0
  %2258 = vmatprep.subr.bf16.mxu0 0
  %2259 = vmatpush1.bf16.xpose.msra.mxu0 %v2256
  %2260 = vmatprep.subr.bf16.mxu0 0
  %2261 = vmatpush1.bf16.xpose.msra.mxu0 0
  %2262 = vmatprep.subr.bf16.mxu0 0
  %2263 = vmatpush1.bf16.xpose.msra.mxu0 0
  %2264 = vmatprep.subr.bf16.mxu0 0
  %2265 = vmatpush1.bf16.xpose.msra.mxu0 0
  %2266 = vmatprep.subr.bf16.mxu0 0
  %2267 = vmatpush1.bf16.xpose.msra.mxu0 0
  %2268 = vmatprep.subr.bf16.mxu0 0
  %2269 = vmatpush1.bf16.xpose.msra.mxu0 0
  %2270 = vmatprep.subr.bf16.mxu0 0
  %2271 = vmatpush1.bf16.xpose.msra.mxu0 0
  %2272 = vmatprep.subr.bf16.mxu0 0
  %2273 = vmatpush1.bf16.xpose.msra.mxu0 0
  %2274 = vmatprep.subr.bf16.mxu0 0
  %2275 = vmatpush1.bf16.xpose.msra.mxu0 0
  %2276 = vmatprep.subr.bf16.mxu0 0
  %2277 = vmatpush1.bf16.xpose.msra.mxu0 0
  %2278 = vmatprep.subr.bf16.mxu0 0
  %2279 = vmatpush1.bf16.xpose.msra.mxu0 0
  %2280 = vmatprep.subr.bf16.mxu0 0
  %2281 = vmatpush1.bf16.xpose.msra.mxu0 0
  %2282 = vmatprep.subr.bf16.mxu0 0
  %2283 = vmatpush1.bf16.xpose.msra.mxu0 0
  %2284 = vmatprep.subr.bf16.mxu0 0
  %2285 = vmatpush1.bf16.xpose.msra.mxu0 0
  %2286 = vmatprep.subr.bf16.mxu0 0
  %2287 = vmatpush1.bf16.xpose.msra.mxu0 0
  %2288 = vmatprep.subr.bf16.mxu0 0
  %2289 = vmatpush1.bf16.xpose.msra.mxu0 0
  %2290 = vmatprep.mubr.bf16.mxu0 0
  %2291 = vmatmul.mubr.bf16.gmra.mrb[0].mxu0 %v2253
  %v2292 = vpop.f32.mrb[0].mxu0
  %v2293 = vadd.f32 0.0, %v2292
  %v2294 = vpop.f32.mrb[0].mxu0
  %v2295 = vpop.f32.mrb[0].mxu0
  %v2296 = vpop.f32.mrb[0].mxu0
  %2297 = vdwg.mxu0
  %v2298 = vpack.c.bf16 %v1901, %v1901
  %v2299 = vpack.c.bf16 %v1957, %v1957
  %v2300 = vpack.c.bf16 %v2013, %v2013
  %v2301 = vpack.c.bf16 %v2069, %v2069
  %v2302 = vpack.c.bf16 %v2125, %v2125
  %v2303 = vpack.c.bf16 %v2181, %v2181
  %v2304 = vpack.c.bf16 %v2237, %v2237
  %v2305 = vpack.c.bf16 %v2293, %v2293
  %v2307 = vunpack.c.l.b16 %v1095
  %v2308 = vpack.c.b16 %v2307, %v2307
  %2309 = vrot.lane.b32.xlu0 %v2308, 112
  %v2310 = vpop.permute.xlu0 %2309
  %v2312 = vsel %vm1480, %v2298, 0
  %v2315 = vsel %vm1484, %v2310, 0
  %2317 = vmatprep.subr.bf16.mxu0 0
  %2318 = vmatpush1.bf16.msra.mxu0 %v2315
  %2319 = vmatprep.subr.bf16.mxu0 0
  %2320 = vmatpush1.bf16.msra.mxu0 0
  %2321 = vmatprep.subr.bf16.mxu0 0
  %2322 = vmatpush1.bf16.msra.mxu0 0
  %2323 = vmatprep.subr.bf16.mxu0 0
  %2324 = vmatpush1.bf16.msra.mxu0 0
  %2325 = vmatprep.subr.bf16.mxu0 0
  %2326 = vmatpush1.bf16.msra.mxu0 0
  %2327 = vmatprep.subr.bf16.mxu0 0
  %2328 = vmatpush1.bf16.msra.mxu0 0
  %2329 = vmatprep.subr.bf16.mxu0 0
  %2330 = vmatpush1.bf16.msra.mxu0 0
  %2331 = vmatprep.subr.bf16.mxu0 0
  %2332 = vmatpush1.bf16.msra.mxu0 0
  %2333 = vmatprep.subr.bf16.mxu0 0
  %2334 = vmatpush1.bf16.msra.mxu0 0
  %2335 = vmatprep.subr.bf16.mxu0 0
  %2336 = vmatpush1.bf16.msra.mxu0 0
  %2337 = vmatprep.subr.bf16.mxu0 0
  %2338 = vmatpush1.bf16.msra.mxu0 0
  %2339 = vmatprep.subr.bf16.mxu0 0
  %2340 = vmatpush1.bf16.msra.mxu0 0
  %2341 = vmatprep.subr.bf16.mxu0 0
  %2342 = vmatpush1.bf16.msra.mxu0 0
  %2343 = vmatprep.subr.bf16.mxu0 0
  %2344 = vmatpush1.bf16.msra.mxu0 0
  %2345 = vmatprep.subr.bf16.mxu0 0
  %2346 = vmatpush1.bf16.msra.mxu0 0
  %2347 = vmatprep.subr.bf16.mxu0 0
  %2348 = vmatpush1.bf16.msra.mxu0 0
  %2349 = vmatprep.mubr.bf16.mxu0 0
  %2350 = vmatmul.mubr.bf16.gmra.mrb[0].mxu0 %v2312
  %v2351 = vpop.f32.mrb[0].mxu0
  %v2352 = vadd.f32 0.0, %v2351
  %v2353 = vpop.f32.mrb[0].mxu0
  %v2354 = vpop.f32.mrb[0].mxu0
  %v2355 = vpop.f32.mrb[0].mxu0
  %2356 = vdwg.mxu0
  %v2358 = vunpack.c.l.b16 %v1096
  %v2359 = vpack.c.b16 %v2358, %v2358
  %2360 = vrot.lane.b32.xlu0 %v2359, 112
  %v2361 = vpop.permute.xlu0 %2360
  %v2363 = vsel %vm1480, %v2299, 0
  %v2366 = vsel %vm1484, %v2361, 0
  %2368 = vmatprep.subr.bf16.mxu0 0
  %2369 = vmatpush1.bf16.msra.mxu0 %v2366
  %2370 = vmatprep.subr.bf16.mxu0 0
  %2371 = vmatpush1.bf16.msra.mxu0 0
  %2372 = vmatprep.subr.bf16.mxu0 0
  %2373 = vmatpush1.bf16.msra.mxu0 0
  %2374 = vmatprep.subr.bf16.mxu0 0
  %2375 = vmatpush1.bf16.msra.mxu0 0
  %2376 = vmatprep.subr.bf16.mxu0 0
  %2377 = vmatpush1.bf16.msra.mxu0 0
  %2378 = vmatprep.subr.bf16.mxu0 0
  %2379 = vmatpush1.bf16.msra.mxu0 0
  %2380 = vmatprep.subr.bf16.mxu0 0
  %2381 = vmatpush1.bf16.msra.mxu0 0
  %2382 = vmatprep.subr.bf16.mxu0 0
  %2383 = vmatpush1.bf16.msra.mxu0 0
  %2384 = vmatprep.subr.bf16.mxu0 0
  %2385 = vmatpush1.bf16.msra.mxu0 0
  %2386 = vmatprep.subr.bf16.mxu0 0
  %2387 = vmatpush1.bf16.msra.mxu0 0
  %2388 = vmatprep.subr.bf16.mxu0 0
  %2389 = vmatpush1.bf16.msra.mxu0 0
  %2390 = vmatprep.subr.bf16.mxu0 0
  %2391 = vmatpush1.bf16.msra.mxu0 0
  %2392 = vmatprep.subr.bf16.mxu0 0
  %2393 = vmatpush1.bf16.msra.mxu0 0
  %2394 = vmatprep.subr.bf16.mxu0 0
  %2395 = vmatpush1.bf16.msra.mxu0 0
  %2396 = vmatprep.subr.bf16.mxu0 0
  %2397 = vmatpush1.bf16.msra.mxu0 0
  %2398 = vmatprep.subr.bf16.mxu0 0
  %2399 = vmatpush1.bf16.msra.mxu0 0
  %2400 = vmatprep.mubr.bf16.mxu0 0
  %2401 = vmatmul.mubr.bf16.gmra.mrb[0].mxu0 %v2363
  %v2402 = vpop.f32.mrb[0].mxu0
  %v2403 = vadd.f32 0.0, %v2402
  %v2404 = vpop.f32.mrb[0].mxu0
  %v2405 = vpop.f32.mrb[0].mxu0
  %v2406 = vpop.f32.mrb[0].mxu0
  %2407 = vdwg.mxu0
  %v2409 = vunpack.c.l.b16 %v1097
  %v2410 = vpack.c.b16 %v2409, %v2409
  %2411 = vrot.lane.b32.xlu0 %v2410, 112
  %v2412 = vpop.permute.xlu0 %2411
  %v2414 = vsel %vm1480, %v2300, 0
  %v2417 = vsel %vm1484, %v2412, 0
  %2419 = vmatprep.subr.bf16.mxu0 0
  %2420 = vmatpush1.bf16.msra.mxu0 %v2417
  %2421 = vmatprep.subr.bf16.mxu0 0
  %2422 = vmatpush1.bf16.msra.mxu0 0
  %2423 = vmatprep.subr.bf16.mxu0 0
  %2424 = vmatpush1.bf16.msra.mxu0 0
  %2425 = vmatprep.subr.bf16.mxu0 0
  %2426 = vmatpush1.bf16.msra.mxu0 0
  %2427 = vmatprep.subr.bf16.mxu0 0
  %2428 = vmatpush1.bf16.msra.mxu0 0
  %2429 = vmatprep.subr.bf16.mxu0 0
  %2430 = vmatpush1.bf16.msra.mxu0 0
  %2431 = vmatprep.subr.bf16.mxu0 0
  %2432 = vmatpush1.bf16.msra.mxu0 0
  %2433 = vmatprep.subr.bf16.mxu0 0
  %2434 = vmatpush1.bf16.msra.mxu0 0
  %2435 = vmatprep.subr.bf16.mxu0 0
  %2436 = vmatpush1.bf16.msra.mxu0 0
  %2437 = vmatprep.subr.bf16.mxu0 0
  %2438 = vmatpush1.bf16.msra.mxu0 0
  %2439 = vmatprep.subr.bf16.mxu0 0
  %2440 = vmatpush1.bf16.msra.mxu0 0
  %2441 = vmatprep.subr.bf16.mxu0 0
  %2442 = vmatpush1.bf16.msra.mxu0 0
  %2443 = vmatprep.subr.bf16.mxu0 0
  %2444 = vmatpush1.bf16.msra.mxu0 0
  %2445 = vmatprep.subr.bf16.mxu0 0
  %2446 = vmatpush1.bf16.msra.mxu0 0
  %2447 = vmatprep.subr.bf16.mxu0 0
  %2448 = vmatpush1.bf16.msra.mxu0 0
  %2449 = vmatprep.subr.bf16.mxu0 0
  %2450 = vmatpush1.bf16.msra.mxu0 0
  %2451 = vmatprep.mubr.bf16.mxu0 0
  %2452 = vmatmul.mubr.bf16.gmra.mrb[0].mxu0 %v2414
  %v2453 = vpop.f32.mrb[0].mxu0
  %v2454 = vadd.f32 0.0, %v2453
  %v2455 = vpop.f32.mrb[0].mxu0
  %v2456 = vpop.f32.mrb[0].mxu0
  %v2457 = vpop.f32.mrb[0].mxu0
  %2458 = vdwg.mxu0
  %v2460 = vunpack.c.l.b16 %v1098
  %v2461 = vpack.c.b16 %v2460, %v2460
  %2462 = vrot.lane.b32.xlu0 %v2461, 112
  %v2463 = vpop.permute.xlu0 %2462
  %v2465 = vsel %vm1480, %v2301, 0
  %v2468 = vsel %vm1484, %v2463, 0
  %2470 = vmatprep.subr.bf16.mxu0 0
  %2471 = vmatpush1.bf16.msra.mxu0 %v2468
  %2472 = vmatprep.subr.bf16.mxu0 0
  %2473 = vmatpush1.bf16.msra.mxu0 0
  %2474 = vmatprep.subr.bf16.mxu0 0
  %2475 = vmatpush1.bf16.msra.mxu0 0
  %2476 = vmatprep.subr.bf16.mxu0 0
  %2477 = vmatpush1.bf16.msra.mxu0 0
  %2478 = vmatprep.subr.bf16.mxu0 0
  %2479 = vmatpush1.bf16.msra.mxu0 0
  %2480 = vmatprep.subr.bf16.mxu0 0
  %2481 = vmatpush1.bf16.msra.mxu0 0
  %2482 = vmatprep.subr.bf16.mxu0 0
  %2483 = vmatpush1.bf16.msra.mxu0 0
  %2484 = vmatprep.subr.bf16.mxu0 0
  %2485 = vmatpush1.bf16.msra.mxu0 0
  %2486 = vmatprep.subr.bf16.mxu0 0
  %2487 = vmatpush1.bf16.msra.mxu0 0
  %2488 = vmatprep.subr.bf16.mxu0 0
  %2489 = vmatpush1.bf16.msra.mxu0 0
  %2490 = vmatprep.subr.bf16.mxu0 0
  %2491 = vmatpush1.bf16.msra.mxu0 0
  %2492 = vmatprep.subr.bf16.mxu0 0
  %2493 = vmatpush1.bf16.msra.mxu0 0
  %2494 = vmatprep.subr.bf16.mxu0 0
  %2495 = vmatpush1.bf16.msra.mxu0 0
  %2496 = vmatprep.subr.bf16.mxu0 0
  %2497 = vmatpush1.bf16.msra.mxu0 0
  %2498 = vmatprep.subr.bf16.mxu0 0
  %2499 = vmatpush1.bf16.msra.mxu0 0
  %2500 = vmatprep.subr.bf16.mxu0 0
  %2501 = vmatpush1.bf16.msra.mxu0 0
  %2502 = vmatprep.mubr.bf16.mxu0 0
  %2503 = vmatmul.mubr.bf16.gmra.mrb[0].mxu0 %v2465
  %v2504 = vpop.f32.mrb[0].mxu0
  %v2505 = vadd.f32 0.0, %v2504
  %v2506 = vpop.f32.mrb[0].mxu0
  %v2507 = vpop.f32.mrb[0].mxu0
  %v2508 = vpop.f32.mrb[0].mxu0
  %2509 = vdwg.mxu0
  %v2511 = vunpack.c.l.b16 %v1099
  %v2512 = vpack.c.b16 %v2511, %v2511
  %2513 = vrot.lane.b32.xlu0 %v2512, 112
  %v2514 = vpop.permute.xlu0 %2513
  %v2516 = vsel %vm1480, %v2302, 0
  %v2519 = vsel %vm1484, %v2514, 0
  %2521 = vmatprep.subr.bf16.mxu0 0
  %2522 = vmatpush1.bf16.msra.mxu0 %v2519
  %2523 = vmatprep.subr.bf16.mxu0 0
  %2524 = vmatpush1.bf16.msra.mxu0 0
  %2525 = vmatprep.subr.bf16.mxu0 0
  %2526 = vmatpush1.bf16.msra.mxu0 0
  %2527 = vmatprep.subr.bf16.mxu0 0
  %2528 = vmatpush1.bf16.msra.mxu0 0
  %2529 = vmatprep.subr.bf16.mxu0 0
  %2530 = vmatpush1.bf16.msra.mxu0 0
  %2531 = vmatprep.subr.bf16.mxu0 0
  %2532 = vmatpush1.bf16.msra.mxu0 0
  %2533 = vmatprep.subr.bf16.mxu0 0
  %2534 = vmatpush1.bf16.msra.mxu0 0
  %2535 = vmatprep.subr.bf16.mxu0 0
  %2536 = vmatpush1.bf16.msra.mxu0 0
  %2537 = vmatprep.subr.bf16.mxu0 0
  %2538 = vmatpush1.bf16.msra.mxu0 0
  %2539 = vmatprep.subr.bf16.mxu0 0
  %2540 = vmatpush1.bf16.msra.mxu0 0
  %2541 = vmatprep.subr.bf16.mxu0 0
  %2542 = vmatpush1.bf16.msra.mxu0 0
  %2543 = vmatprep.subr.bf16.mxu0 0
  %2544 = vmatpush1.bf16.msra.mxu0 0
  %2545 = vmatprep.subr.bf16.mxu0 0
  %2546 = vmatpush1.bf16.msra.mxu0 0
  %2547 = vmatprep.subr.bf16.mxu0 0
  %2548 = vmatpush1.bf16.msra.mxu0 0
  %2549 = vmatprep.subr.bf16.mxu0 0
  %2550 = vmatpush1.bf16.msra.mxu0 0
  %2551 = vmatprep.subr.bf16.mxu0 0
  %2552 = vmatpush1.bf16.msra.mxu0 0
  %2553 = vmatprep.mubr.bf16.mxu0 0
  %2554 = vmatmul.mubr.bf16.gmra.mrb[0].mxu0 %v2516
  %v2555 = vpop.f32.mrb[0].mxu0
  %v2556 = vadd.f32 0.0, %v2555
  %v2557 = vpop.f32.mrb[0].mxu0
  %v2558 = vpop.f32.mrb[0].mxu0
  %v2559 = vpop.f32.mrb[0].mxu0
  %2560 = vdwg.mxu0
  %v2562 = vunpack.c.l.b16 %v1100
  %v2563 = vpack.c.b16 %v2562, %v2562
  %2564 = vrot.lane.b32.xlu0 %v2563, 112
  %v2565 = vpop.permute.xlu0 %2564
  %v2567 = vsel %vm1480, %v2303, 0
  %v2570 = vsel %vm1484, %v2565, 0
  %2572 = vmatprep.subr.bf16.mxu0 0
  %2573 = vmatpush1.bf16.msra.mxu0 %v2570
  %2574 = vmatprep.subr.bf16.mxu0 0
  %2575 = vmatpush1.bf16.msra.mxu0 0
  %2576 = vmatprep.subr.bf16.mxu0 0
  %2577 = vmatpush1.bf16.msra.mxu0 0
  %2578 = vmatprep.subr.bf16.mxu0 0
  %2579 = vmatpush1.bf16.msra.mxu0 0
  %2580 = vmatprep.subr.bf16.mxu0 0
  %2581 = vmatpush1.bf16.msra.mxu0 0
  %2582 = vmatprep.subr.bf16.mxu0 0
  %2583 = vmatpush1.bf16.msra.mxu0 0
  %2584 = vmatprep.subr.bf16.mxu0 0
  %2585 = vmatpush1.bf16.msra.mxu0 0
  %2586 = vmatprep.subr.bf16.mxu0 0
  %2587 = vmatpush1.bf16.msra.mxu0 0
  %2588 = vmatprep.subr.bf16.mxu0 0
  %2589 = vmatpush1.bf16.msra.mxu0 0
  %2590 = vmatprep.subr.bf16.mxu0 0
  %2591 = vmatpush1.bf16.msra.mxu0 0
  %2592 = vmatprep.subr.bf16.mxu0 0
  %2593 = vmatpush1.bf16.msra.mxu0 0
  %2594 = vmatprep.subr.bf16.mxu0 0
  %2595 = vmatpush1.bf16.msra.mxu0 0
  %2596 = vmatprep.subr.bf16.mxu0 0
  %2597 = vmatpush1.bf16.msra.mxu0 0
  %2598 = vmatprep.subr.bf16.mxu0 0
  %2599 = vmatpush1.bf16.msra.mxu0 0
  %2600 = vmatprep.subr.bf16.mxu0 0
  %2601 = vmatpush1.bf16.msra.mxu0 0
  %2602 = vmatprep.subr.bf16.mxu0 0
  %2603 = vmatpush1.bf16.msra.mxu0 0
  %2604 = vmatprep.mubr.bf16.mxu0 0
  %2605 = vmatmul.mubr.bf16.gmra.mrb[0].mxu0 %v2567
  %v2606 = vpop.f32.mrb[0].mxu0
  %v2607 = vadd.f32 0.0, %v2606
  %v2608 = vpop.f32.mrb[0].mxu0
  %v2609 = vpop.f32.mrb[0].mxu0
  %v2610 = vpop.f32.mrb[0].mxu0
  %2611 = vdwg.mxu0
  %v2613 = vunpack.c.l.b16 %v1101
  %v2614 = vpack.c.b16 %v2613, %v2613
  %2615 = vrot.lane.b32.xlu0 %v2614, 112
  %v2616 = vpop.permute.xlu0 %2615
  %v2618 = vsel %vm1480, %v2304, 0
  %v2621 = vsel %vm1484, %v2616, 0
  %2623 = vmatprep.subr.bf16.mxu0 0
  %2624 = vmatpush1.bf16.msra.mxu0 %v2621
  %2625 = vmatprep.subr.bf16.mxu0 0
  %2626 = vmatpush1.bf16.msra.mxu0 0
  %2627 = vmatprep.subr.bf16.mxu0 0
  %2628 = vmatpush1.bf16.msra.mxu0 0
  %2629 = vmatprep.subr.bf16.mxu0 0
  %2630 = vmatpush1.bf16.msra.mxu0 0
  %2631 = vmatprep.subr.bf16.mxu0 0
  %2632 = vmatpush1.bf16.msra.mxu0 0
  %2633 = vmatprep.subr.bf16.mxu0 0
  %2634 = vmatpush1.bf16.msra.mxu0 0
  %2635 = vmatprep.subr.bf16.mxu0 0
  %2636 = vmatpush1.bf16.msra.mxu0 0
  %2637 = vmatprep.subr.bf16.mxu0 0
  %2638 = vmatpush1.bf16.msra.mxu0 0
  %2639 = vmatprep.subr.bf16.mxu0 0
  %2640 = vmatpush1.bf16.msra.mxu0 0
  %2641 = vmatprep.subr.bf16.mxu0 0
  %2642 = vmatpush1.bf16.msra.mxu0 0
  %2643 = vmatprep.subr.bf16.mxu0 0
  %2644 = vmatpush1.bf16.msra.mxu0 0
  %2645 = vmatprep.subr.bf16.mxu0 0
  %2646 = vmatpush1.bf16.msra.mxu0 0
  %2647 = vmatprep.subr.bf16.mxu0 0
  %2648 = vmatpush1.bf16.msra.mxu0 0
  %2649 = vmatprep.subr.bf16.mxu0 0
  %2650 = vmatpush1.bf16.msra.mxu0 0
  %2651 = vmatprep.subr.bf16.mxu0 0
  %2652 = vmatpush1.bf16.msra.mxu0 0
  %2653 = vmatprep.subr.bf16.mxu0 0
  %2654 = vmatpush1.bf16.msra.mxu0 0
  %2655 = vmatprep.mubr.bf16.mxu0 0
  %2656 = vmatmul.mubr.bf16.gmra.mrb[0].mxu0 %v2618
  %v2657 = vpop.f32.mrb[0].mxu0
  %v2658 = vadd.f32 0.0, %v2657
  %v2659 = vpop.f32.mrb[0].mxu0
  %v2660 = vpop.f32.mrb[0].mxu0
  %v2661 = vpop.f32.mrb[0].mxu0
  %2662 = vdwg.mxu0
  %v2664 = vunpack.c.l.b16 %v1102
  %v2665 = vpack.c.b16 %v2664, %v2664
  %2666 = vrot.lane.b32.xlu0 %v2665, 112
  %v2667 = vpop.permute.xlu0 %2666
  %v2669 = vsel %vm1480, %v2305, 0
  %v2672 = vsel %vm1484, %v2667, 0
  %2674 = vmatprep.subr.bf16.mxu0 0
  %2675 = vmatpush1.bf16.msra.mxu0 %v2672
  %2676 = vmatprep.subr.bf16.mxu0 0
  %2677 = vmatpush1.bf16.msra.mxu0 0
  %2678 = vmatprep.subr.bf16.mxu0 0
  %2679 = vmatpush1.bf16.msra.mxu0 0
  %2680 = vmatprep.subr.bf16.mxu0 0
  %2681 = vmatpush1.bf16.msra.mxu0 0
  %2682 = vmatprep.subr.bf16.mxu0 0
  %2683 = vmatpush1.bf16.msra.mxu0 0
  %2684 = vmatprep.subr.bf16.mxu0 0
  %2685 = vmatpush1.bf16.msra.mxu0 0
  %2686 = vmatprep.subr.bf16.mxu0 0
  %2687 = vmatpush1.bf16.msra.mxu0 0
  %2688 = vmatprep.subr.bf16.mxu0 0
  %2689 = vmatpush1.bf16.msra.mxu0 0
  %2690 = vmatprep.subr.bf16.mxu0 0
  %2691 = vmatpush1.bf16.msra.mxu0 0
  %2692 = vmatprep.subr.bf16.mxu0 0
  %2693 = vmatpush1.bf16.msra.mxu0 0
  %2694 = vmatprep.subr.bf16.mxu0 0
  %2695 = vmatpush1.bf16.msra.mxu0 0
  %2696 = vmatprep.subr.bf16.mxu0 0
  %2697 = vmatpush1.bf16.msra.mxu0 0
  %2698 = vmatprep.subr.bf16.mxu0 0
  %2699 = vmatpush1.bf16.msra.mxu0 0
  %2700 = vmatprep.subr.bf16.mxu0 0
  %2701 = vmatpush1.bf16.msra.mxu0 0
  %2702 = vmatprep.subr.bf16.mxu0 0
  %2703 = vmatpush1.bf16.msra.mxu0 0
  %2704 = vmatprep.subr.bf16.mxu0 0
  %2705 = vmatpush1.bf16.msra.mxu0 0
  %2706 = vmatprep.mubr.bf16.mxu0 0
  %2707 = vmatmul.mubr.bf16.gmra.mrb[0].mxu0 %v2669
  %v2708 = vpop.f32.mrb[0].mxu0
  %v2709 = vadd.f32 0.0, %v2708
  %v2710 = vpop.f32.mrb[0].mxu0
  %v2711 = vpop.f32.mrb[0].mxu0
  %v2712 = vpop.f32.mrb[0].mxu0
  %2713 = vdwg.mxu0
  %2722 = vrot.lane.b32.xlu0 %v2352, 16
  %v2723 = vpop.permute.xlu0 %2722
  %2724 = vrot.lane.b32.xlu0 %v2403, 16
  %v2725 = vpop.permute.xlu0 %2724
  %2726 = vrot.lane.b32.xlu0 %v2454, 16
  %v2727 = vpop.permute.xlu0 %2726
  %2728 = vrot.lane.b32.xlu0 %v2505, 16
  %v2729 = vpop.permute.xlu0 %2728
  %2730 = vrot.lane.b32.xlu0 %v2556, 16
  %v2731 = vpop.permute.xlu0 %2730
  %2732 = vrot.lane.b32.xlu0 %v2607, 16
  %v2733 = vpop.permute.xlu0 %2732
  %2734 = vrot.lane.b32.xlu0 %v2658, 16
  %v2735 = vpop.permute.xlu0 %2734
  %2736 = vrot.lane.b32.xlu0 %v2709, 16
  %v2737 = vpop.permute.xlu0 %2736
  %v2746 = vsel %vm1103, %v1523, %v2723
  %v2747 = vsel %vm1103, %v1569, %v2725
  %v2748 = vsel %vm1103, %v1615, %v2727
  %v2749 = vsel %vm1103, %v1661, %v2729
  %v2750 = vsel %vm1103, %v1707, %v2731
  %v2751 = vsel %vm1103, %v1753, %v2733
  %v2752 = vsel %vm1103, %v1799, %v2735
  %v2753 = vsel %vm1103, %v1845, %v2737
  %v2754 = vmul.f32 %v2746, 0.125
  %v2755 = vmul.f32 %v2747, 0.125
  %v2756 = vmul.f32 %v2748, 0.125
  %v2757 = vmul.f32 %v2749, 0.125
  %v2758 = vmul.f32 %v2750, 0.125
  %v2759 = vmul.f32 %v2751, 0.125
  %v2760 = vmul.f32 %v2752, 0.125
  %v2761 = vmul.f32 %v2753, 0.125
  %v2762 = vmul.f32 %v2754, 0.5
  %v2763 = vmul.f32 %v2755, 0.5
  %v2764 = vadd.f32 %v2762, 0.0
  %v2765 = vadd.f32 %v2763, 0.0
  %vm2766 = vcmp.ge.f32.partialorder %v2764, 0.5
  %vm2767 = vcmp.ge.f32.partialorder %v2765, 0.5
  %v2768 = vsel %vm2766, 1, 0
  %v2769 = vsel %vm2767, 1, 0
  %v2770 = vcvt.s32.f32 %v2768
  %v2771 = vcvt.s32.f32 %v2769
  %v2772 = vsub.f32 1.0, %v2770
  %v2773 = vsub.f32 1.0, %v2771
  %v2774 = vmul.f32 %v2764, %v2772
  %v2775 = vmul.f32 %v2765, %v2773
  %v2776 = vpack.c.bf16 %v2770, %v2770
  %v2777 = vpack.c.bf16 %v2771, %v2771
  %2778 = vst.msk [vmem:[#allocation5] sm:$0xf] %vm339, %v2776
  %2779 = vst.msk [vmem:[#allocation5 + $0x4] sm:$0xf] %vm339, %v2777
  %v2780 = vsub.f32 %v2756, %v2774
  %v2781 = vsub.f32 %v2757, %v2775
  %v2782 = vmul.f32 %v2780, 0.5
  %v2783 = vmul.f32 %v2781, 0.5
  %v2784 = vadd.f32 %v2774, %v2782
  %v2785 = vadd.f32 %v2775, %v2783
  %vm2786 = vcmp.ge.f32.partialorder %v2784, 0.5
  %vm2787 = vcmp.ge.f32.partialorder %v2785, 0.5
  %v2788 = vsel %vm2786, 1, 0
  %v2789 = vsel %vm2787, 1, 0
  %v2790 = vcvt.s32.f32 %v2788
  %v2791 = vcvt.s32.f32 %v2789
  %v2792 = vsub.f32 1.0, %v2790
  %v2793 = vsub.f32 1.0, %v2791
  %v2794 = vmul.f32 %v2784, %v2792
  %v2795 = vmul.f32 %v2785, %v2793
  %v2796 = vpack.c.bf16 %v2790, %v2790
  %v2797 = vpack.c.bf16 %v2791, %v2791
  %s2798 = scalar_lea.vmem [#allocation5], 8
  %2799 = vst.msk [vmem:[%s2798] sm:$0xf] %vm339, %v2796
  %2800 = vst.msk [vmem:[%s2798 + $0x4] sm:$0xf] %vm339, %v2797
  %v2801 = vsub.f32 %v2758, %v2794
  %v2802 = vsub.f32 %v2759, %v2795
  %v2803 = vmul.f32 %v2801, 0.5
  %v2804 = vmul.f32 %v2802, 0.5
  %v2805 = vadd.f32 %v2794, %v2803
  %v2806 = vadd.f32 %v2795, %v2804
  %vm2807 = vcmp.ge.f32.partialorder %v2805, 0.5
  %vm2808 = vcmp.ge.f32.partialorder %v2806, 0.5
  %v2809 = vsel %vm2807, 1, 0
  %v2810 = vsel %vm2808, 1, 0
  %v2811 = vcvt.s32.f32 %v2809
  %v2812 = vcvt.s32.f32 %v2810
  %v2813 = vsub.f32 1.0, %v2811
  %v2814 = vsub.f32 1.0, %v2812
  %v2815 = vmul.f32 %v2805, %v2813
  %v2816 = vmul.f32 %v2806, %v2814
  %v2817 = vpack.c.bf16 %v2811, %v2811
  %v2818 = vpack.c.bf16 %v2812, %v2812
  %s2819 = scalar_lea.vmem [#allocation5], 16
  %2820 = vst.msk [vmem:[%s2819] sm:$0xf] %vm339, %v2817
  %2821 = vst.msk [vmem:[%s2819 + $0x4] sm:$0xf] %vm339, %v2818
  %v2822 = vsub.f32 %v2760, %v2815
  %v2823 = vsub.f32 %v2761, %v2816
  %v2824 = vmul.f32 %v2822, 0.5
  %v2825 = vmul.f32 %v2823, 0.5
  %v2826 = vadd.f32 %v2815, %v2824
  %v2827 = vadd.f32 %v2816, %v2825
  %vm2828 = vcmp.ge.f32.partialorder %v2826, 0.5
  %vm2829 = vcmp.ge.f32.partialorder %v2827, 0.5
  %v2830 = vsel %vm2828, 1, 0
  %v2831 = vsel %vm2829, 1, 0
  %v2832 = vcvt.s32.f32 %v2830
  %v2833 = vcvt.s32.f32 %v2831
  %v2834 = vpack.c.bf16 %v2832, %v2832
  %v2835 = vpack.c.bf16 %v2833, %v2833
  %s2836 = scalar_lea.vmem [#allocation5], 24
  %2837 = vst.msk [vmem:[%s2836] sm:$0xf] %vm339, %v2834
  %2838 = vst.msk [vmem:[%s2836 + $0x4] sm:$0xf] %vm339, %v2835
  %v2839 = vld [vmem:[#allocation5] sm:$0xf]
  %v2840 = vld [vmem:[#allocation5 + $0x4] sm:$0xf]
  %v2841 = vld [vmem:[#allocation5 + $0x8] sm:$0xf]
  %v2842 = vld [vmem:[#allocation5 + $0xc] sm:$0xf]
  %v2843 = vld [vmem:[#allocation5 + $0x10] sm:$0xf]
  %v2844 = vld [vmem:[#allocation5 + $0x14] sm:$0xf]
  %v2845 = vld [vmem:[#allocation5 + $0x18] sm:$0xf]
  %v2846 = vld [vmem:[#allocation5 + $0x1c] sm:$0xf]
  %v2847 = vunpack.c.l.bf16 %v2839
  %v2848 = vunpack.c.l.bf16 %v2840
  %v2849 = vunpack.c.l.bf16 %v2841
  %v2850 = vunpack.c.l.bf16 %v2842
  %v2851 = vunpack.c.l.bf16 %v2843
  %v2852 = vunpack.c.l.bf16 %v2844
  %v2853 = vunpack.c.l.bf16 %v2845
  %v2854 = vunpack.c.l.bf16 %v2846
  %v2855 = vld [vmem:[%s4] sm:$0xff]
  %v2856 = vld [vmem:[%s4 + $0x8] sm:$0xff]
  %v2857 = vld [vmem:[%s4 + $0x10] sm:$0xff]
  %v2858 = vld [vmem:[%s4 + $0x18] sm:$0xff]
  %v2859 = vld [vmem:[%s5] sm:$0x1]
  %v2861 = vlaneseq
  %v2862 = vshrl.u32 %v2861, 7
  %v2863 = vsub.s32 0, %v2862
  %v2864 = vrot.slane %v2859, %v2863
  %v2867 = vsel %vm42, %v2847, 0
  %v2870 = vsel %vm42, %v2848, 0
  %v2873 = vsel %vm42, %v2849, 0
  %v2876 = vsel %vm42, %v2850, 0
  %v2879 = vsel %vm42, %v2851, 0
  %v2882 = vsel %vm42, %v2852, 0
  %v2885 = vsel %vm42, %v2853, 0
  %v2888 = vsel %vm42, %v2854, 0
  %2890 = vmatprep.subr.mxu0 0.0
  %2891 = vmatpush1.msra.mxu0 %v2855
  %2892 = vmatprep.subr.mxu0 0.0
  %2893 = vmatpush1.msra.mxu0 %v2856
  %2894 = vmatprep.subr.mxu0 0.0
  %2895 = vmatpush1.msra.mxu0 %v2857
  %2896 = vmatprep.subr.mxu0 0.0
  %2897 = vmatpush1.msra.mxu0 %v2858
  %2898 = vmatprep.subr.mxu0 0.0
  %2899 = vmatpush1.msra.mxu0 0.0
  %2900 = vmatprep.subr.mxu0 0.0
  %2901 = vmatpush1.msra.mxu0 0.0
  %2902 = vmatprep.subr.mxu0 0.0
  %2903 = vmatpush1.msra.mxu0 0.0
  %2904 = vmatprep.subr.mxu0 0.0
  %2905 = vmatpush1.msra.mxu0 0.0
  %2906 = vmatprep.subr.mxu0 0.0
  %2907 = vmatpush1.msra.mxu0 0.0
  %2908 = vmatprep.subr.mxu0 0.0
  %2909 = vmatpush1.msra.mxu0 0.0
  %2910 = vmatprep.subr.mxu0 0.0
  %2911 = vmatpush1.msra.mxu0 0.0
  %2912 = vmatprep.subr.mxu0 0.0
  %2913 = vmatpush1.msra.mxu0 0.0
  %2914 = vmatprep.subr.mxu0 0.0
  %2915 = vmatpush1.msra.mxu0 0.0
  %2916 = vmatprep.subr.mxu0 0.0
  %2917 = vmatpush1.msra.mxu0 0.0
  %2918 = vmatprep.subr.mxu0 0.0
  %2919 = vmatpush1.msra.mxu0 0.0
  %2920 = vmatprep.subr.mxu0 0.0
  %2921 = vmatpush1.msra.mxu0 0.0
  %2922 = vmatprep.subr.mxu0 0.0
  %2923 = vmatpush1.msra.mxu0 0.0
  %2924 = vmatprep.subr.mxu0 0.0
  %2925 = vmatpush1.msra.mxu0 0.0
  %2926 = vmatprep.subr.mxu0 0.0
  %2927 = vmatpush1.msra.mxu0 0.0
  %2928 = vmatprep.subr.mxu0 0.0
  %2929 = vmatpush1.msra.mxu0 0.0
  %2930 = vmatprep.subr.mxu0 0.0
  %2931 = vmatpush1.msra.mxu0 0.0
  %2932 = vmatprep.subr.mxu0 0.0
  %2933 = vmatpush1.msra.mxu0 0.0
  %2934 = vmatprep.subr.mxu0 0.0
  %2935 = vmatpush1.msra.mxu0 0.0
  %2936 = vmatprep.subr.mxu0 0.0
  %2937 = vmatpush1.msra.mxu0 0.0
  %2938 = vmatprep.subr.mxu0 0.0
  %2939 = vmatpush1.msra.mxu0 0.0
  %2940 = vmatprep.subr.mxu0 0.0
  %2941 = vmatpush1.msra.mxu0 0.0
  %2942 = vmatprep.subr.mxu0 0.0
  %2943 = vmatpush1.msra.mxu0 0.0
  %2944 = vmatprep.subr.mxu0 0.0
  %2945 = vmatpush1.msra.mxu0 0.0
  %2946 = vmatprep.subr.mxu0 0.0
  %2947 = vmatpush1.msra.mxu0 0.0
  %2948 = vmatprep.subr.mxu0 0.0
  %2949 = vmatpush1.msra.mxu0 0.0
  %2950 = vmatprep.subr.mxu0 0.0
  %2951 = vmatpush1.msra.mxu0 0.0
  %2952 = vmatprep.subr.mxu0 0.0
  %2953 = vmatpush1.msra.mxu0 0.0
  %2954 = vmatprep.mubr.f32.mxu0 0.0
  %2955 = vmatmul.mubr.f32.gmra.mrb[0].mxu0 %v2867
  %v2956 = vpop.f32.mrb[0].mxu0
  %v2957 = vadd.f32 %v2864, %v2956
  %v2958 = vpop.f32.mrb[0].mxu0
  %2959 = vmatprep.mubr.f32.mxu0 0.0
  %2960 = vmatmul.mubr.f32.gmra.mrb[0].mxu0 %v2870
  %v2961 = vpop.f32.mrb[0].mxu0
  %v2962 = vadd.f32 %v2864, %v2961
  %v2963 = vpop.f32.mrb[0].mxu0
  %2964 = vmatprep.mubr.f32.mxu0 0.0
  %2965 = vmatmul.mubr.f32.gmra.mrb[0].mxu0 %v2873
  %v2966 = vpop.f32.mrb[0].mxu0
  %v2967 = vadd.f32 %v2864, %v2966
  %v2968 = vpop.f32.mrb[0].mxu0
  %2969 = vmatprep.mubr.f32.mxu0 0.0
  %2970 = vmatmul.mubr.f32.gmra.mrb[0].mxu0 %v2876
  %v2971 = vpop.f32.mrb[0].mxu0
  %v2972 = vadd.f32 %v2864, %v2971
  %v2973 = vpop.f32.mrb[0].mxu0
  %2974 = vmatprep.mubr.f32.mxu0 0.0
  %2975 = vmatmul.mubr.f32.gmra.mrb[0].mxu0 %v2879
  %v2976 = vpop.f32.mrb[0].mxu0
  %v2977 = vadd.f32 %v2864, %v2976
  %v2978 = vpop.f32.mrb[0].mxu0
  %2979 = vmatprep.mubr.f32.mxu0 0.0
  %2980 = vmatmul.mubr.f32.gmra.mrb[0].mxu0 %v2882
  %v2981 = vpop.f32.mrb[0].mxu0
  %v2982 = vadd.f32 %v2864, %v2981
  %v2983 = vpop.f32.mrb[0].mxu0
  %2984 = vmatprep.mubr.f32.mxu0 0.0
  %2985 = vmatmul.mubr.f32.gmra.mrb[0].mxu0 %v2885
  %v2986 = vpop.f32.mrb[0].mxu0
  %v2987 = vadd.f32 %v2864, %v2986
  %v2988 = vpop.f32.mrb[0].mxu0
  %2989 = vmatprep.mubr.f32.mxu0 0.0
  %2990 = vmatmul.mubr.f32.gmra.mrb[0].mxu0 %v2888
  %v2991 = vpop.f32.mrb[0].mxu0
  %v2992 = vadd.f32 %v2864, %v2991
  %v2993 = vpop.f32.mrb[0].mxu0
  %2994 = vdwg.mxu0
  %v2995 = vld [vmem:[%s6] sm:$0x1]
  %v2996 = vld [vmem:[%s7] sm:$0x1]
  %v2997 = vsel %vm42, %v2957, 0.0
  %2998 = vadd.xlane.f32.xlu0 %v2997
  %v2999 = vpop.xlane.xlu0 %2998
  %v3000 = vsel %vm42, %v2962, 0.0
  %3001 = vadd.xlane.f32.xlu0 %v3000
  %v3002 = vpop.xlane.xlu0 %3001
  %v3003 = vsel %vm42, %v2967, 0.0
  %3004 = vadd.xlane.f32.xlu0 %v3003
  %v3005 = vpop.xlane.xlu0 %3004
  %v3006 = vsel %vm42, %v2972, 0.0
  %3007 = vadd.xlane.f32.xlu0 %v3006
  %v3008 = vpop.xlane.xlu0 %3007
  %v3009 = vsel %vm42, %v2977, 0.0
  %3010 = vadd.xlane.f32.xlu0 %v3009
  %v3011 = vpop.xlane.xlu0 %3010
  %v3012 = vsel %vm42, %v2982, 0.0
  %3013 = vadd.xlane.f32.xlu0 %v3012
  %v3014 = vpop.xlane.xlu0 %3013
  %v3015 = vsel %vm42, %v2987, 0.0
  %3016 = vadd.xlane.f32.xlu0 %v3015
  %v3017 = vpop.xlane.xlu0 %3016
  %v3018 = vsel %vm42, %v2992, 0.0
  %3019 = vadd.xlane.f32.xlu0 %v3018
  %v3020 = vpop.xlane.xlu0 %3019
  %v3021 = vmul.f32 %v2999, %v198
  %v3022 = vmul.f32 %v3002, %v198
  %v3023 = vmul.f32 %v3005, %v198
  %v3024 = vmul.f32 %v3008, %v198
  %v3025 = vmul.f32 %v3011, %v198
  %v3026 = vmul.f32 %v3014, %v198
  %v3027 = vmul.f32 %v3017, %v198
  %v3028 = vmul.f32 %v3020, %v198
  %v3029 = vmul.f32 %v2957, %v2957
  %v3030 = vmul.f32 %v2962, %v2962
  %v3031 = vmul.f32 %v2967, %v2967
  %v3032 = vmul.f32 %v2972, %v2972
  %v3033 = vmul.f32 %v2977, %v2977
  %v3034 = vmul.f32 %v2982, %v2982
  %v3035 = vmul.f32 %v2987, %v2987
  %v3036 = vmul.f32 %v2992, %v2992
  %v3037 = vsel %vm42, %v3029, 0.0
  %3038 = vadd.xlane.f32.xlu0 %v3037
  %v3039 = vpop.xlane.xlu0 %3038
  %v3040 = vsel %vm42, %v3030, 0.0
  %3041 = vadd.xlane.f32.xlu0 %v3040
  %v3042 = vpop.xlane.xlu0 %3041
  %v3043 = vsel %vm42, %v3031, 0.0
  %3044 = vadd.xlane.f32.xlu0 %v3043
  %v3045 = vpop.xlane.xlu0 %3044
  %v3046 = vsel %vm42, %v3032, 0.0
  %3047 = vadd.xlane.f32.xlu0 %v3046
  %v3048 = vpop.xlane.xlu0 %3047
  %v3049 = vsel %vm42, %v3033, 0.0
  %3050 = vadd.xlane.f32.xlu0 %v3049
  %v3051 = vpop.xlane.xlu0 %3050
  %v3052 = vsel %vm42, %v3034, 0.0
  %3053 = vadd.xlane.f32.xlu0 %v3052
  %v3054 = vpop.xlane.xlu0 %3053
  %v3055 = vsel %vm42, %v3035, 0.0
  %3056 = vadd.xlane.f32.xlu0 %v3055
  %v3057 = vpop.xlane.xlu0 %3056
  %v3058 = vsel %vm42, %v3036, 0.0
  %3059 = vadd.xlane.f32.xlu0 %v3058
  %v3060 = vpop.xlane.xlu0 %3059
  %v3061 = vmul.f32 %v3039, %v198
  %v3062 = vmul.f32 %v3042, %v198
  %v3063 = vmul.f32 %v3045, %v198
  %v3064 = vmul.f32 %v3048, %v198
  %v3065 = vmul.f32 %v3051, %v198
  %v3066 = vmul.f32 %v3054, %v198
  %v3067 = vmul.f32 %v3057, %v198
  %v3068 = vmul.f32 %v3060, %v198
  %v3069 = vmul.f32 %v3021, %v3021
  %v3070 = vmul.f32 %v3022, %v3022
  %v3071 = vmul.f32 %v3023, %v3023
  %v3072 = vmul.f32 %v3024, %v3024
  %v3073 = vmul.f32 %v3025, %v3025
  %v3074 = vmul.f32 %v3026, %v3026
  %v3075 = vmul.f32 %v3027, %v3027
  %v3076 = vmul.f32 %v3028, %v3028
  %v3077 = vsub.f32 %v3061, %v3069
  %v3078 = vsub.f32 %v3062, %v3070
  %v3079 = vsub.f32 %v3063, %v3071
  %v3080 = vsub.f32 %v3064, %v3072
  %v3081 = vsub.f32 %v3065, %v3073
  %v3082 = vsub.f32 %v3066, %v3074
  %v3083 = vsub.f32 %v3067, %v3075
  %v3084 = vsub.f32 %v3068, %v3076
  %v3085 = vsub.f32 %v2957, %v3021
  %v3086 = vsub.f32 %v2962, %v3022
  %v3087 = vsub.f32 %v2967, %v3023
  %v3088 = vsub.f32 %v2972, %v3024
  %v3089 = vsub.f32 %v2977, %v3025
  %v3090 = vsub.f32 %v2982, %v3026
  %v3091 = vsub.f32 %v2987, %v3027
  %v3092 = vsub.f32 %v2992, %v3028
  %v3093 = vadd.f32 %v3077, 1e-05
  %v3094 = vadd.f32 %v3078, 1e-05
  %v3095 = vadd.f32 %v3079, 1e-05
  %v3096 = vadd.f32 %v3080, 1e-05
  %v3097 = vadd.f32 %v3081, 1e-05
  %v3098 = vadd.f32 %v3082, 1e-05
  %v3099 = vadd.f32 %v3083, 1e-05
  %v3100 = vadd.f32 %v3084, 1e-05
  %v3101 = vrsqrt.pop %v3093
  %v3102 = vrsqrt.pop %v3094
  %v3103 = vrsqrt.pop %v3095
  %v3104 = vrsqrt.pop %v3096
  %v3105 = vrsqrt.pop %v3097
  %v3106 = vrsqrt.pop %v3098
  %v3107 = vrsqrt.pop %v3099
  %v3108 = vrsqrt.pop %v3100
  %v3109 = vmul.f32 %v3085, %v3101
  %v3110 = vmul.f32 %v3086, %v3102
  %v3111 = vmul.f32 %v3087, %v3103
  %v3112 = vmul.f32 %v3088, %v3104
  %v3113 = vmul.f32 %v3089, %v3105
  %v3114 = vmul.f32 %v3090, %v3106
  %v3115 = vmul.f32 %v3091, %v3107
  %v3116 = vmul.f32 %v3092, %v3108
  %v3118 = vlaneseq
  %v3119 = vshrl.u32 %v3118, 7
  %v3120 = vsub.s32 0, %v3119
  %v3121 = vrot.slane %v2995, %v3120
  %v3123 = vmul.f32 %v3109, %v3121
  %v3124 = vmul.f32 %v3110, %v3121
  %v3125 = vmul.f32 %v3111, %v3121
  %v3126 = vmul.f32 %v3112, %v3121
  %v3127 = vmul.f32 %v3113, %v3121
  %v3128 = vmul.f32 %v3114, %v3121
  %v3129 = vmul.f32 %v3115, %v3121
  %v3130 = vmul.f32 %v3116, %v3121
  %v3132 = vlaneseq
  %v3133 = vshrl.u32 %v3132, 7
  %v3134 = vsub.s32 0, %v3133
  %v3135 = vrot.slane %v2996, %v3134
  %v3137 = vadd.f32 %v3123, %v3135
  %v3138 = vadd.f32 %v3124, %v3135
  %v3139 = vadd.f32 %v3125, %v3135
  %v3140 = vadd.f32 %v3126, %v3135
  %v3141 = vadd.f32 %v3127, %v3135
  %v3142 = vadd.f32 %v3128, %v3135
  %v3143 = vadd.f32 %v3129, %v3135
  %v3144 = vadd.f32 %v3130, %v3135
  %v3145 = vmul.f32 %v3137, 0.5
  %v3146 = vmul.f32 %v3138, 0.5
  %v3147 = vadd.f32 %v3145, 0.0
  %v3148 = vadd.f32 %v3146, 0.0
  %vm3149 = vcmp.ge.f32.partialorder %v3147, 1.0
  %vm3150 = vcmp.ge.f32.partialorder %v3148, 1.0
  %v3151 = vsel %vm3149, 1, 0
  %v3152 = vsel %vm3150, 1, 0
  %v3153 = vcvt.s32.f32 %v3151
  %v3154 = vcvt.s32.f32 %v3152
  %v3155 = vsub.f32 1.0, %v3153
  %v3156 = vsub.f32 1.0, %v3154
  %v3157 = vmul.f32 %v3147, %v3155
  %v3158 = vmul.f32 %v3148, %v3156
  %v3159 = vadd.f32 %v3153, %v30
  %v3160 = vadd.f32 %v3154, %v31
  %3161 = vst.msk [vmem:[%s8] sm:$0xff] %vm42, %v3159
  %3162 = vst.msk [vmem:[%s8 + $0x8] sm:$0xff] %vm42, %v3160
  %v3163 = vsub.f32 %v3139, %v3157
  %v3164 = vsub.f32 %v3140, %v3158
  %v3165 = vmul.f32 %v3163, 0.5
  %v3166 = vmul.f32 %v3164, 0.5
  %v3167 = vadd.f32 %v3157, %v3165
  %v3168 = vadd.f32 %v3158, %v3166
  %vm3169 = vcmp.ge.f32.partialorder %v3167, 1.0
  %vm3170 = vcmp.ge.f32.partialorder %v3168, 1.0
  %v3171 = vsel %vm3169, 1, 0
  %v3172 = vsel %vm3170, 1, 0
  %v3173 = vcvt.s32.f32 %v3171
  %v3174 = vcvt.s32.f32 %v3172
  %v3175 = vsub.f32 1.0, %v3173
  %v3176 = vsub.f32 1.0, %v3174
  %v3177 = vmul.f32 %v3167, %v3175
  %v3178 = vmul.f32 %v3168, %v3176
  %v3179 = vadd.f32 %v3173, %v32
  %v3180 = vadd.f32 %v3174, %v33
  %s3181 = scalar_lea.vmem %s8, 16
  %3182 = vst.msk [vmem:[%s3181] sm:$0xff] %vm42, %v3179
  %3183 = vst.msk [vmem:[%s3181 + $0x8] sm:$0xff] %vm42, %v3180
  %v3184 = vsub.f32 %v3141, %v3177
  %v3185 = vsub.f32 %v3142, %v3178
  %v3186 = vmul.f32 %v3184, 0.5
  %v3187 = vmul.f32 %v3185, 0.5
  %v3188 = vadd.f32 %v3177, %v3186
  %v3189 = vadd.f32 %v3178, %v3187
  %vm3190 = vcmp.ge.f32.partialorder %v3188, 1.0
  %vm3191 = vcmp.ge.f32.partialorder %v3189, 1.0
  %v3192 = vsel %vm3190, 1, 0
  %v3193 = vsel %vm3191, 1, 0
  %v3194 = vcvt.s32.f32 %v3192
  %v3195 = vcvt.s32.f32 %v3193
  %v3196 = vsub.f32 1.0, %v3194
  %v3197 = vsub.f32 1.0, %v3195
  %v3198 = vmul.f32 %v3188, %v3196
  %v3199 = vmul.f32 %v3189, %v3197
  %v3200 = vadd.f32 %v3194, %v34
  %v3201 = vadd.f32 %v3195, %v35
  %s3202 = scalar_lea.vmem %s8, 32
  %3203 = vst.msk [vmem:[%s3202] sm:$0xff] %vm42, %v3200
  %3204 = vst.msk [vmem:[%s3202 + $0x8] sm:$0xff] %vm42, %v3201
  %v3205 = vsub.f32 %v3143, %v3198
  %v3206 = vsub.f32 %v3144, %v3199
  %v3207 = vmul.f32 %v3205, 0.5
  %v3208 = vmul.f32 %v3206, 0.5
  %v3209 = vadd.f32 %v3198, %v3207
  %v3210 = vadd.f32 %v3199, %v3208
  %vm3211 = vcmp.ge.f32.partialorder %v3209, 1.0
  %vm3212 = vcmp.ge.f32.partialorder %v3210, 1.0
  %v3213 = vsel %vm3211, 1, 0
  %v3214 = vsel %vm3212, 1, 0
  %v3215 = vcvt.s32.f32 %v3213
  %v3216 = vcvt.s32.f32 %v3214
  %v3217 = vadd.f32 %v3215, %v36
  %v3218 = vadd.f32 %v3216, %v37
  %s3219 = scalar_lea.vmem %s8, 48
  %3220 = vst.msk [vmem:[%s3219] sm:$0xff] %vm42, %v3217
  %3221 = vst.msk [vmem:[%s3219 + $0x8] sm:$0xff] %vm42, %v3218
  // Predicated region
  $region34: #{block_forward.2} parent=0 // pred_check
    _
  $region35: #{block_forward.2} parent=0 // pred_check_branch
    %3223 = sbr.rel (0) target = $region37
  $region36: #{block_forward.2} parent=0 // pred_region
    _
  $region37: #{block_forward.2} parent=0 // pred_fallthru
    _
  // Predicated region
  $region38: #{block_forward.2} parent=0 // pred_check
    _
  $region39: #{block_forward.2} parent=0 // pred_check_branch
    %3225 = sbr.rel (0) target = $region41
  $region40: #{block_forward.2} parent=0 // pred_region
    _
  $region41: #{block_forward.2} parent=0 // pred_fallthru
    _

</llo_original>
